<compile_context>
chip_gen: v6e
topology: v6e:2x2x1
jax: 0.10.0
libtpu: 0.0.40
codegen_flags: <defaults>
</compile_context>

<pallas_src>
import jax
import jax.numpy as jnp
from jax import lax
from jax.experimental import pallas as pl
from jax.experimental.pallas import tpu as pltpu

LANE = 128
SUBLANE = 8


def _round_up(x, m):
    return ((x + m - 1) // m) * m


# ---------------------------------------------------------------------------
# One-time parameter preparation (pre-transpose + lane padding; BN kept as an
# f32 scale/shift epilogue so bf16 weights stay well conditioned).
# ---------------------------------------------------------------------------
def prepare_decoder_block_params(params, eps=1e-5):
    w1 = params["conv1"]["w"]          # (cmid, cin, 3, 3)   PyTorch OIHW
    w2 = params["conv2"]["w"]          # (cout, cmid, 3, 3)
    cmid, cin = int(w1.shape[0]), int(w1.shape[1])
    cout = int(w2.shape[0])
    K1 = _round_up(9 * cin, LANE)
    CMID = _round_up(cmid, LANE)
    COUT = _round_up(cout, LANE)

    def bn_affine(bn):
        s = bn["gamma"] / jnp.sqrt(bn["var"] + eps)
        t = bn["beta"] - bn["mean"] * s
        return s.astype(jnp.float32), t.astype(jnp.float32)

    s1, t1 = bn_affine(params["bn1"])
    s2, t2 = bn_affine(params["bn2"])

    # conv1 weight -> (9*cin, cmid), K order (kh, kw, cin) matches the wrapper im2col.
    wk1 = jnp.transpose(w1, (2, 3, 1, 0)).reshape(9 * cin, cmid)
    wk1 = jnp.pad(wk1, ((0, K1 - 9 * cin), (0, CMID - cmid))).astype(jnp.bfloat16)

    # conv2 weight -> (3, 3, cmid, cout), pad channel dims, flatten to (9*CMID, COUT).
    wk2 = jnp.transpose(w2, (2, 3, 1, 0))
    wk2 = jnp.pad(wk2, ((0, 0), (0, 0), (0, CMID - cmid), (0, COUT - cout)))
    wk2 = wk2.reshape(9 * CMID, COUT).astype(jnp.bfloat16)

    def pad_row(v, n):
        return jnp.pad(v, (0, n - v.shape[0])).reshape(1, n).astype(jnp.float32)

    return {
        "w1": wk1, "s1": pad_row(s1, CMID), "b1": pad_row(t1, CMID),
        "w2": wk2, "s2": pad_row(s2, COUT), "b2": pad_row(t2, COUT),
        "cout": cout,
    }


# ---------------------------------------------------------------------------
# Forward wrapper (NCHW in / NCHW out, matching the PyTorch module).
# ---------------------------------------------------------------------------
def decoder_block_forward(x_nchw, prep):
    N, cin, H, W = x_nchw.shape
    K1, CMID = prep["w1"].shape
    COUT = prep["w2"].shape[1]
    cout = prep["cout"]
    assert 9 * cin <= K1, (cin, K1)
    HW = H * W
    Hp = H + 2
    WL = SUBLANE                  # interior starts at sublane-aligned W offset 8
    Wq = WL + W + 1               # [WL-1]=left halo, [WL..WL+W-1]=interior, [WL+W]=right halo

    def kernel(lhs1_ref, w1_ref, s1_ref, b1_ref, w2_ref, s2_ref, b2_ref,
               o_ref, mid_ref, im2_ref):
        # ---- conv1: ONE dense MXU matmul on the pre-built bf16 im2col --------
        y1 = jnp.dot(lhs1_ref[0, :, :], w1_ref[...],
                     preferred_element_type=jnp.float32)
        # BN(eval running stats) as f32 scale+shift epilogue, then ReLU.
        y1 = jnp.maximum(y1 * s1_ref[...] + b1_ref[...], 0.0)
        # nn.Dropout(p=0.1): identity in eval mode.

        # ---- stage intermediate in VMEM; zero ONLY the halo strips -----------
        zrow = jnp.zeros((1, Wq, CMID), jnp.float32)
        zcol = jnp.zeros((Hp, 1, CMID), jnp.float32)
        mid_ref[pl.ds(0, 1), pl.ds(0, Wq), :] = zrow            # top halo row
        mid_ref[pl.ds(Hp - 1, 1), pl.ds(0, Wq), :] = zrow       # bottom halo row
        mid_ref[pl.ds(0, Hp), pl.ds(WL - 1, 1), :] = zcol       # left halo col
        mid_ref[pl.ds(0, Hp), pl.ds(WL + W, 1), :] = zcol       # right halo col
        # interior store: W offset = 8 -> sublane-aligned, unmasked stores
        mid_ref[pl.ds(1, H), pl.ds(WL, W), :] = y1.reshape(H, W, CMID)

        # ---- conv2: full im2col of mid in VMEM, then ONE K-tiled MXU matmul --
        for k in range(9):
            dh, dw = divmod(k, 3)
            tap = mid_ref[pl.ds(dh, H), pl.ds(WL - 1 + dw, W), :].reshape(HW, CMID)
            # column offset k*CMID is a multiple of 128 -> full-lane-tile writes
            im2_ref[pl.ds(0, HW), pl.ds(k * CMID, CMID)] = tap.astype(jnp.bfloat16)
        y2 = jnp.dot(im2_ref[...], w2_ref[...], preferred_element_type=jnp.float32)
        y2 = jnp.maximum(y2 * s2_ref[...] + b2_ref[...], 0.0)
        # lane-dense bf16 store (padded cout sliced off in the wrapper)
        o_ref[...] = y2.reshape(1, HW, COUT).astype(o_ref.dtype)

    # ---- wrapper-side conv1 im2col (XLA-fused; shipped to the kernel as bf16) ----
    x = jnp.transpose(x_nchw, (0, 2, 3, 1))                     # NHWC
    xp = jnp.pad(x, ((0, 0), (1, 1), (1, 1), (0, 0)))
    taps = [xp[:, dh:dh + H, dw:dw + W, :] for dh in range(3) for dw in range(3)]
    lhs1 = jnp.concatenate(taps, axis=-1).reshape(N, HW, 9 * cin)
    lhs1 = jnp.pad(lhs1, ((0, 0), (0, 0), (0, K1 - 9 * cin))).astype(jnp.bfloat16)

    out = pl.pallas_call(
        kernel,
        out_shape=jax.ShapeDtypeStruct((N, HW, COUT), jnp.bfloat16),
        grid=(N,),
        in_specs=[
            pl.BlockSpec((1, HW, K1), lambda b: (b, 0, 0)),      # conv1 im2col slab
            pl.BlockSpec((K1, CMID), lambda b: (0, 0)),          # w1 (grid-constant)
            pl.BlockSpec((1, CMID), lambda b: (0, 0)),           # s1
            pl.BlockSpec((1, CMID), lambda b: (0, 0)),           # b1
            pl.BlockSpec((9 * CMID, COUT), lambda b: (0, 0)),    # w2
            pl.BlockSpec((1, COUT), lambda b: (0, 0)),           # s2
            pl.BlockSpec((1, COUT), lambda b: (0, 0)),           # b2
        ],
        out_specs=pl.BlockSpec((1, HW, COUT), lambda b: (b, 0, 0)),
        scratch_shapes=[
            pltpu.VMEM((Hp, Wq, CMID), jnp.float32),             # zero-halo intermediate
            pltpu.VMEM((HW, 9 * CMID), jnp.bfloat16),            # conv2 im2col
        ],
        compiler_params=pltpu.CompilerParams(
            dimension_semantics=("parallel",),                   # megacore split over batch
            vmem_limit_bytes=32 * 1024 * 1024,
        ),
    )(lhs1, prep["w1"], prep["s1"], prep["b1"], prep["w2"], prep["s2"], prep["b2"])

    # Drop lane padding, back to NCHW, f32.
    out = out[:, :, :cout].astype(jnp.float32).reshape(N, H, W, cout)
    return jnp.transpose(out, (0, 3, 1, 2))


# ---------------------------------------------------------------------------
# Pure-JAX reference (eval-mode BN, dropout identity) for a numerical check.
# ---------------------------------------------------------------------------
def _reference_forward(x_nchw, params, eps=1e-5):
    def conv_bn_relu(x, w, bn):
        y = lax.conv_general_dilated(
            x, w, window_strides=(1, 1), padding=((1, 1), (1, 1)),
            dimension_numbers=("NCHW", "OIHW", "NCHW"),
            precision=lax.Precision.HIGHEST)
        s = bn["gamma"] / jnp.sqrt(bn["var"] + eps)
        t = bn["beta"] - bn["mean"] * s
        return jnp.maximum(y * s[None, :, None, None] + t[None, :, None, None], 0.0)

    x = conv_bn_relu(x_nchw, params["conv1"]["w"], params["bn1"])
    x = conv_bn_relu(x, params["conv2"]["w"], params["bn2"])
    return x


# ---------------------------------------------------------------------------
# Deterministic synthetic parameters (shapes follow the PyTorch __init__).
# ---------------------------------------------------------------------------
class ParamGen:
    def __init__(self, key):
        self.key = key

    def _next(self):
        self.key, k = jax.random.split(self.key)
        return k

    def normal(self, shape, scale=0.05):
        return scale * jax.random.normal(self._next(), shape, dtype=jnp.float32)


def make_bn(pg, c):
    return {"gamma": 1.0 + pg.normal((c,)), "beta": pg.normal((c,)),
            "mean": pg.normal((c,)), "var": 1.0 + jnp.abs(pg.normal((c,)))}


# ---------------------------------------------------------------------------
if __name__ == "__main__":
    key = jax.random.PRNGKey(0)
    k_param, k_input = jax.random.split(key)

    in_chs, out_chs = 4, 32
    N, H, W = 2, 16, 16

    pg = ParamGen(k_param)
    params = {
        "conv1": {"w": pg.normal((out_chs, in_chs, 3, 3))},   # Conv2d(in,out,3,bias=False)
        "bn1": make_bn(pg, out_chs),
        "conv2": {"w": pg.normal((out_chs, out_chs, 3, 3))},
        "bn2": make_bn(pg, out_chs),
    }

    prep = prepare_decoder_block_params(params)               # one-time weight prep

    x = jax.random.normal(k_input, (N, in_chs, H, W), dtype=jnp.float32)

    fwd = jax.jit(lambda inp: decoder_block_forward(inp, prep))
    out = jax.block_until_ready(fwd(x))

    assert out.shape == (N, out_chs, H, W), out.shape

    ref = _reference_forward(x, params)
    max_err = float(jnp.max(jnp.abs(out - ref)))
    # bf16 MXU inputs / bf16 output store with f32 accumulation & epilogue.
    assert max_err < 5e-2, f"max abs err {max_err}"

    print("KERNEL_OK")
</pallas_src>

<mosaic_0001>
module attributes {stable_mosaic.version = 11 : i64} {
  func.func @kernel(%arg0: i32, %arg1: memref<1x256x128xbf16, #tpu.memory_space<vmem>>, %arg2: memref<128x128xbf16, #tpu.memory_space<vmem>>, %arg3: memref<1x128xf32, #tpu.memory_space<vmem>>, %arg4: memref<1x128xf32, #tpu.memory_space<vmem>>, %arg5: memref<1152x128xbf16, #tpu.memory_space<vmem>>, %arg6: memref<1x128xf32, #tpu.memory_space<vmem>>, %arg7: memref<1x128xf32, #tpu.memory_space<vmem>>, %arg8: memref<1x256x128xbf16, #tpu.memory_space<vmem>>, %arg9: memref<18x25x128xf32, #tpu.memory_space<vmem>>, %arg10: memref<256x1152xbf16, #tpu.memory_space<vmem>>) attributes {dimension_semantics = [#tpu.dimension_semantics<parallel>], iteration_bounds = array<i64: 2>, scalar_prefetch = 0 : i64, scratch_operands = 2 : i64, tpu.core_type = #tpu.core_type<tc>, window_params = [{transform_indices = @transform_0, window_bounds = array<i64: 1, 256, 128>}, {pipeline_mode = #tpu.pipeline_mode<synchronous>, transform_indices = @transform_1, window_bounds = array<i64: 128, 128>}, {pipeline_mode = #tpu.pipeline_mode<synchronous>, transform_indices = @transform_2, window_bounds = array<i64: 1, 128>}, {pipeline_mode = #tpu.pipeline_mode<synchronous>, transform_indices = @transform_3, window_bounds = array<i64: 1, 128>}, {pipeline_mode = #tpu.pipeline_mode<synchronous>, transform_indices = @transform_4, window_bounds = array<i64: 1152, 128>}, {pipeline_mode = #tpu.pipeline_mode<synchronous>, transform_indices = @transform_5, window_bounds = array<i64: 1, 128>}, {pipeline_mode = #tpu.pipeline_mode<synchronous>, transform_indices = @transform_6, window_bounds = array<i64: 1, 128>}, {transform_indices = @transform_7, window_bounds = array<i64: 1, 256, 128>}]} {
    %c0 = arith.constant 0 : index
    %c0_0 = arith.constant 0 : index
    %c0_1 = arith.constant 0 : index
    %0 = vector.load %arg1[%c0, %c0_0, %c0_1] : memref<1x256x128xbf16, #tpu.memory_space<vmem>>, vector<1x256x128xbf16>
    %1 = vector.shape_cast %0 : vector<1x256x128xbf16> to vector<256x128xbf16>
    %c0_2 = arith.constant 0 : index
    %c0_3 = arith.constant 0 : index
    %2 = vector.load %arg2[%c0_2, %c0_3] : memref<128x128xbf16, #tpu.memory_space<vmem>>, vector<128x128xbf16>
    %cst = arith.constant dense<0.000000e+00> : vector<256x128xf32>
    %3 = tpu.matmul %1, %2, %cst {dimension_numbers = #tpu.dot_dimension_numbers<[1], [0], [0], [1], [0, 0, 1, 1], [], []>} : vector<256x128xbf16>, vector<128x128xbf16>, vector<256x128xf32> -> vector<256x128xf32>
    %c0_4 = arith.constant 0 : index
    %c0_5 = arith.constant 0 : index
    %4 = vector.load %arg3[%c0_4, %c0_5] : memref<1x128xf32, #tpu.memory_space<vmem>>, vector<1x128xf32>
    %5 = vector.broadcast %4 : vector<1x128xf32> to vector<256x128xf32>
    %6 = arith.mulf %3, %5 : vector<256x128xf32>
    %c0_6 = arith.constant 0 : index
    %c0_7 = arith.constant 0 : index
    %7 = vector.load %arg4[%c0_6, %c0_7] : memref<1x128xf32, #tpu.memory_space<vmem>>, vector<1x128xf32>
    %8 = vector.broadcast %7 : vector<1x128xf32> to vector<256x128xf32>
    %9 = arith.addf %6, %8 : vector<256x128xf32>
    %cst_8 = arith.constant 0.000000e+00 : f32
    %10 = vector.broadcast %cst_8 : f32 to vector<256x128xf32>
    %11 = arith.maximumf %9, %10 : vector<256x128xf32>
    %cst_9 = arith.constant 0.000000e+00 : f32
    %12 = vector.broadcast %cst_9 : f32 to vector<1x25x128xf32>
    %cst_10 = arith.constant 0.000000e+00 : f32
    %13 = vector.broadcast %cst_10 : f32 to vector<18x1x128xf32>
    %c0_11 = arith.constant 0 : index
    %c0_12 = arith.constant 0 : index
    %c0_13 = arith.constant 0 : index
    %14 = vector.load %arg9[%c0_11, %c0_12, %c0_13] : memref<18x25x128xf32, #tpu.memory_space<vmem>>, vector<1x25x128xf32>
    tpu.vector_store %arg9[%c0_11, %c0_12, %c0_13], %12 {strides = array<i32>} : memref<18x25x128xf32, #tpu.memory_space<vmem>>, vector<1x25x128xf32>,
    %c17 = arith.constant 17 : index
    %c0_14 = arith.constant 0 : index
    %c0_15 = arith.constant 0 : index
    %15 = vector.load %arg9[%c17, %c0_14, %c0_15] : memref<18x25x128xf32, #tpu.memory_space<vmem>>, vector<1x25x128xf32>
    tpu.vector_store %arg9[%c17, %c0_14, %c0_15], %12 {strides = array<i32>} : memref<18x25x128xf32, #tpu.memory_space<vmem>>, vector<1x25x128xf32>,
    %c0_16 = arith.constant 0 : index
    %c7 = arith.constant 7 : index
    %c0_17 = arith.constant 0 : index
    %16 = vector.load %arg9[%c0_16, %c7, %c0_17] : memref<18x25x128xf32, #tpu.memory_space<vmem>>, vector<18x1x128xf32>
    tpu.vector_store %arg9[%c0_16, %c7, %c0_17], %13 {strides = array<i32>} : memref<18x25x128xf32, #tpu.memory_space<vmem>>, vector<18x1x128xf32>,
    %c0_18 = arith.constant 0 : index
    %c24 = arith.constant 24 : index
    %c0_19 = arith.constant 0 : index
    %17 = vector.load %arg9[%c0_18, %c24, %c0_19] : memref<18x25x128xf32, #tpu.memory_space<vmem>>, vector<18x1x128xf32>
    tpu.vector_store %arg9[%c0_18, %c24, %c0_19], %13 {strides = array<i32>} : memref<18x25x128xf32, #tpu.memory_space<vmem>>, vector<18x1x128xf32>,
    %18 = vector.shape_cast %11 : vector<256x128xf32> to vector<16x16x128xf32>
    %c1 = arith.constant 1 : index
    %c8 = arith.constant 8 : index
    %c0_20 = arith.constant 0 : index
    %19 = vector.load %arg9[%c1, %c8, %c0_20] : memref<18x25x128xf32, #tpu.memory_space<vmem>>, vector<16x16x128xf32>
    tpu.vector_store %arg9[%c1, %c8, %c0_20], %18 {strides = array<i32>} : memref<18x25x128xf32, #tpu.memory_space<vmem>>, vector<16x16x128xf32>,
    %c0_21 = arith.constant 0 : index
    %c7_22 = arith.constant 7 : index
    %c0_23 = arith.constant 0 : index
    %20 = vector.load %arg9[%c0_21, %c7_22, %c0_23] : memref<18x25x128xf32, #tpu.memory_space<vmem>>, vector<16x16x128xf32>
    %21 = vector.shape_cast %20 : vector<16x16x128xf32> to vector<256x128xf32>
    %22 = arith.truncf %21 : vector<256x128xf32> to vector<256x128xbf16>
    %c0_24 = arith.constant 0 : index
    %c0_25 = arith.constant 0 : index
    %23 = vector.load %arg10[%c0_24, %c0_25] : memref<256x1152xbf16, #tpu.memory_space<vmem>>, vector<256x128xbf16>
    tpu.vector_store %arg10[%c0_24, %c0_25], %22 {strides = array<i32>} : memref<256x1152xbf16, #tpu.memory_space<vmem>>, vector<256x128xbf16>,
    %c0_26 = arith.constant 0 : index
    %c8_27 = arith.constant 8 : index
    %c0_28 = arith.constant 0 : index
    %24 = vector.load %arg9[%c0_26, %c8_27, %c0_28] : memref<18x25x128xf32, #tpu.memory_space<vmem>>, vector<16x16x128xf32>
    %25 = vector.shape_cast %24 : vector<16x16x128xf32> to vector<256x128xf32>
    %26 = arith.truncf %25 : vector<256x128xf32> to vector<256x128xbf16>
    %c0_29 = arith.constant 0 : index
    %c128 = arith.constant 128 : index
    %27 = vector.load %arg10[%c0_29, %c128] : memref<256x1152xbf16, #tpu.memory_space<vmem>>, vector<256x128xbf16>
    tpu.vector_store %arg10[%c0_29, %c128], %26 {strides = array<i32>} : memref<256x1152xbf16, #tpu.memory_space<vmem>>, vector<256x128xbf16>,
    %c0_30 = arith.constant 0 : index
    %c9 = arith.constant 9 : index
    %c0_31 = arith.constant 0 : index
    %28 = vector.load %arg9[%c0_30, %c9, %c0_31] : memref<18x25x128xf32, #tpu.memory_space<vmem>>, vector<16x16x128xf32>
    %29 = vector.shape_cast %28 : vector<16x16x128xf32> to vector<256x128xf32>
    %30 = arith.truncf %29 : vector<256x128xf32> to vector<256x128xbf16>
    %c0_32 = arith.constant 0 : index
    %c256 = arith.constant 256 : index
    %31 = vector.load %arg10[%c0_32, %c256] : memref<256x1152xbf16, #tpu.memory_space<vmem>>, vector<256x128xbf16>
    tpu.vector_store %arg10[%c0_32, %c256], %30 {strides = array<i32>} : memref<256x1152xbf16, #tpu.memory_space<vmem>>, vector<256x128xbf16>,
    %c1_33 = arith.constant 1 : index
    %c7_34 = arith.constant 7 : index
    %c0_35 = arith.constant 0 : index
    %32 = vector.load %arg9[%c1_33, %c7_34, %c0_35] : memref<18x25x128xf32, #tpu.memory_space<vmem>>, vector<16x16x128xf32>
    %33 = vector.shape_cast %32 : vector<16x16x128xf32> to vector<256x128xf32>
    %34 = arith.truncf %33 : vector<256x128xf32> to vector<256x128xbf16>
    %c0_36 = arith.constant 0 : index
    %c384 = arith.constant 384 : index
    %35 = vector.load %arg10[%c0_36, %c384] : memref<256x1152xbf16, #tpu.memory_space<vmem>>, vector<256x128xbf16>
    tpu.vector_store %arg10[%c0_36, %c384], %34 {strides = array<i32>} : memref<256x1152xbf16, #tpu.memory_space<vmem>>, vector<256x128xbf16>,
    %c1_37 = arith.constant 1 : index
    %c8_38 = arith.constant 8 : index
    %c0_39 = arith.constant 0 : index
    %36 = vector.load %arg9[%c1_37, %c8_38, %c0_39] : memref<18x25x128xf32, #tpu.memory_space<vmem>>, vector<16x16x128xf32>
    %37 = vector.shape_cast %36 : vector<16x16x128xf32> to vector<256x128xf32>
    %38 = arith.truncf %37 : vector<256x128xf32> to vector<256x128xbf16>
    %c0_40 = arith.constant 0 : index
    %c512 = arith.constant 512 : index
    %39 = vector.load %arg10[%c0_40, %c512] : memref<256x1152xbf16, #tpu.memory_space<vmem>>, vector<256x128xbf16>
    tpu.vector_store %arg10[%c0_40, %c512], %38 {strides = array<i32>} : memref<256x1152xbf16, #tpu.memory_space<vmem>>, vector<256x128xbf16>,
    %c1_41 = arith.constant 1 : index
    %c9_42 = arith.constant 9 : index
    %c0_43 = arith.constant 0 : index
    %40 = vector.load %arg9[%c1_41, %c9_42, %c0_43] : memref<18x25x128xf32, #tpu.memory_space<vmem>>, vector<16x16x128xf32>
    %41 = vector.shape_cast %40 : vector<16x16x128xf32> to vector<256x128xf32>
    %42 = arith.truncf %41 : vector<256x128xf32> to vector<256x128xbf16>
    %c0_44 = arith.constant 0 : index
    %c640 = arith.constant 640 : index
    %43 = vector.load %arg10[%c0_44, %c640] : memref<256x1152xbf16, #tpu.memory_space<vmem>>, vector<256x128xbf16>
    tpu.vector_store %arg10[%c0_44, %c640], %42 {strides = array<i32>} : memref<256x1152xbf16, #tpu.memory_space<vmem>>, vector<256x128xbf16>,
    %c2 = arith.constant 2 : index
    %c7_45 = arith.constant 7 : index
    %c0_46 = arith.constant 0 : index
    %44 = vector.load %arg9[%c2, %c7_45, %c0_46] : memref<18x25x128xf32, #tpu.memory_space<vmem>>, vector<16x16x128xf32>
    %45 = vector.shape_cast %44 : vector<16x16x128xf32> to vector<256x128xf32>
    %46 = arith.truncf %45 : vector<256x128xf32> to vector<256x128xbf16>
    %c0_47 = arith.constant 0 : index
    %c768 = arith.constant 768 : index
    %47 = vector.load %arg10[%c0_47, %c768] : memref<256x1152xbf16, #tpu.memory_space<vmem>>, vector<256x128xbf16>
    tpu.vector_store %arg10[%c0_47, %c768], %46 {strides = array<i32>} : memref<256x1152xbf16, #tpu.memory_space<vmem>>, vector<256x128xbf16>,
    %c2_48 = arith.constant 2 : index
    %c8_49 = arith.constant 8 : index
    %c0_50 = arith.constant 0 : index
    %48 = vector.load %arg9[%c2_48, %c8_49, %c0_50] : memref<18x25x128xf32, #tpu.memory_space<vmem>>, vector<16x16x128xf32>
    %49 = vector.shape_cast %48 : vector<16x16x128xf32> to vector<256x128xf32>
    %50 = arith.truncf %49 : vector<256x128xf32> to vector<256x128xbf16>
    %c0_51 = arith.constant 0 : index
    %c896 = arith.constant 896 : index
    %51 = vector.load %arg10[%c0_51, %c896] : memref<256x1152xbf16, #tpu.memory_space<vmem>>, vector<256x128xbf16>
    tpu.vector_store %arg10[%c0_51, %c896], %50 {strides = array<i32>} : memref<256x1152xbf16, #tpu.memory_space<vmem>>, vector<256x128xbf16>,
    %c2_52 = arith.constant 2 : index
    %c9_53 = arith.constant 9 : index
    %c0_54 = arith.constant 0 : index
    %52 = vector.load %arg9[%c2_52, %c9_53, %c0_54] : memref<18x25x128xf32, #tpu.memory_space<vmem>>, vector<16x16x128xf32>
    %53 = vector.shape_cast %52 : vector<16x16x128xf32> to vector<256x128xf32>
    %54 = arith.truncf %53 : vector<256x128xf32> to vector<256x128xbf16>
    %c0_55 = arith.constant 0 : index
    %c1024 = arith.constant 1024 : index
    %55 = vector.load %arg10[%c0_55, %c1024] : memref<256x1152xbf16, #tpu.memory_space<vmem>>, vector<256x128xbf16>
    tpu.vector_store %arg10[%c0_55, %c1024], %54 {strides = array<i32>} : memref<256x1152xbf16, #tpu.memory_space<vmem>>, vector<256x128xbf16>,
    %c0_56 = arith.constant 0 : index
    %c0_57 = arith.constant 0 : index
    %56 = vector.load %arg10[%c0_56, %c0_57] : memref<256x1152xbf16, #tpu.memory_space<vmem>>, vector<256x1152xbf16>
    %c0_58 = arith.constant 0 : index
    %c0_59 = arith.constant 0 : index
    %57 = vector.load %arg5[%c0_58, %c0_59] : memref<1152x128xbf16, #tpu.memory_space<vmem>>, vector<1152x128xbf16>
    %cst_60 = arith.constant dense<0.000000e+00> : vector<256x128xf32>
    %58 = tpu.matmul %56, %57, %cst_60 {dimension_numbers = #tpu.dot_dimension_numbers<[1], [0], [0], [1], [0, 0, 1, 1], [], []>} : vector<256x1152xbf16>, vector<1152x128xbf16>, vector<256x128xf32> -> vector<256x128xf32>
    %c0_61 = arith.constant 0 : index
    %c0_62 = arith.constant 0 : index
    %59 = vector.load %arg6[%c0_61, %c0_62] : memref<1x128xf32, #tpu.memory_space<vmem>>, vector<1x128xf32>
    %60 = vector.broadcast %59 : vector<1x128xf32> to vector<256x128xf32>
    %61 = arith.mulf %58, %60 : vector<256x128xf32>
    %c0_63 = arith.constant 0 : index
    %c0_64 = arith.constant 0 : index
    %62 = vector.load %arg7[%c0_63, %c0_64] : memref<1x128xf32, #tpu.memory_space<vmem>>, vector<1x128xf32>
    %63 = vector.broadcast %62 : vector<1x128xf32> to vector<256x128xf32>
    %64 = arith.addf %61, %63 : vector<256x128xf32>
    %cst_65 = arith.constant 0.000000e+00 : f32
    %65 = vector.broadcast %cst_65 : f32 to vector<256x128xf32>
    %66 = arith.maximumf %64, %65 : vector<256x128xf32>
    %67 = vector.shape_cast %66 : vector<256x128xf32> to vector<1x256x128xf32>
    %68 = arith.truncf %67 : vector<1x256x128xf32> to vector<1x256x128xbf16>
    %c0_66 = arith.constant 0 : index
    %c0_67 = arith.constant 0 : index
    %c0_68 = arith.constant 0 : index
    %69 = vector.load %arg8[%c0_66, %c0_67, %c0_68] : memref<1x256x128xbf16, #tpu.memory_space<vmem>>, vector<1x256x128xbf16>
    tpu.vector_store %arg8[%c0_66, %c0_67, %c0_68], %68 {strides = array<i32>} : memref<1x256x128xbf16, #tpu.memory_space<vmem>>, vector<1x256x128xbf16>,
    return
  }
  func.func @transform_0(%arg0: i32) -> (i32, i32, i32) {
    %c0_i32 = arith.constant 0 : i32
    %c0_i32_0 = arith.constant 0 : i32
    %c0_i32_1 = arith.constant 0 : i32
    return %arg0, %c0_i32, %c0_i32_0 : i32, i32, i32
  }
  func.func @transform_1(%arg0: i32) -> (i32, i32) {
    %c0_i32 = arith.constant 0 : i32
    %c0_i32_0 = arith.constant 0 : i32
    %c0_i32_1 = arith.constant 0 : i32
    return %c0_i32, %c0_i32_0 : i32, i32
  }
  func.func @transform_2(%arg0: i32) -> (i32, i32) {
    %c0_i32 = arith.constant 0 : i32
    %c0_i32_0 = arith.constant 0 : i32
    %c0_i32_1 = arith.constant 0 : i32
    return %c0_i32, %c0_i32_0 : i32, i32
  }
  func.func @transform_3(%arg0: i32) -> (i32, i32) {
    %c0_i32 = arith.constant 0 : i32
    %c0_i32_0 = arith.constant 0 : i32
    %c0_i32_1 = arith.constant 0 : i32
    return %c0_i32, %c0_i32_0 : i32, i32
  }
  func.func @transform_4(%arg0: i32) -> (i32, i32) {
    %c0_i32 = arith.constant 0 : i32
    %c0_i32_0 = arith.constant 0 : i32
    %c0_i32_1 = arith.constant 0 : i32
    return %c0_i32, %c0_i32_0 : i32, i32
  }
  func.func @transform_5(%arg0: i32) -> (i32, i32) {
    %c0_i32 = arith.constant 0 : i32
    %c0_i32_0 = arith.constant 0 : i32
    %c0_i32_1 = arith.constant 0 : i32
    return %c0_i32, %c0_i32_0 : i32, i32
  }
  func.func @transform_6(%arg0: i32) -> (i32, i32) {
    %c0_i32 = arith.constant 0 : i32
    %c0_i32_0 = arith.constant 0 : i32
    %c0_i32_1 = arith.constant 0 : i32
    return %c0_i32, %c0_i32_0 : i32, i32
  }
  func.func @transform_7(%arg0: i32) -> (i32, i32, i32) {
    %c0_i32 = arith.constant 0 : i32
    %c0_i32_0 = arith.constant 0 : i32
    %c0_i32_1 = arith.constant 0 : i32
    return %arg0, %c0_i32, %c0_i32_0 : i32, i32, i32
  }
}

</mosaic_0001>

<llo_original>
// kernel: _lambda_.1
$region0: #{_lambda_.1}
  #allocation0 [shape = 'u32[]', space=smem, size = 0x4, offset = 0x4, fixed_abs, tag = 'smem constant byte address 0x4 - core index']
  #allocation1 [shape = 'u32[144,128]{1,0:T(1,128)}', space=vmem, size = 0x12000, scoped, tag = 'internal scratch']
  #allocation2 [shape = 'f32[18,25,128]{2,1,0:T(8,128)}', space=vmem, size = 0x48000, scoped, tag = 'scratch operand']
  #allocation3 [shape = 'bf16[256,1152]{1,0:T(8,128)(2,1)}', space=vmem, size = 0x90000, scoped, tag = 'scratch operand']
  %s0 = inlined_call_operand.vmem [shape: bf16[2,256,128], index: 0, kind: input, shape index: {}]
  %s1 = inlined_call_operand.vmem [shape: bf16[128,128], index: 1, kind: input, shape index: {}]
  %s2 = inlined_call_operand.vmem [shape: f32[1,128], index: 2, kind: input, shape index: {}]
  %s3 = inlined_call_operand.vmem [shape: f32[1,128], index: 3, kind: input, shape index: {}]
  %s4 = inlined_call_operand.vmem [shape: bf16[1152,128], index: 4, kind: input, shape index: {}]
  %s5 = inlined_call_operand.vmem [shape: f32[1,128], index: 5, kind: input, shape index: {}]
  %s6 = inlined_call_operand.vmem [shape: f32[1,128], index: 6, kind: input, shape index: {}]
  %s7 = inlined_call_operand.vmem [shape: bf16[2,256,128], index: 7, kind: output, shape index: {}]
  %s8 = sld [smem:[#allocation0]]
  $region61: #{_lambda_.1} parent=0
    _
  %s10 = ssub.s32 1, %s8
  %s11 = scalar_select 0, %s10, %s8
  loop: start=0, step=1, limit=4
  $region2: #{_lambda_.1} parent=0 // loop_pre_header
    _
  $region3: #{_lambda_.1} parent=0 // loop_header
    %s13 = sphi 0, %s17
    %p14 = scmp.ge.s32.totalorder %s13, 4
    %s23 = sphi 0, %s25
    %s26 = sphi 0, %s23
    %s27 = sphi 0, %s26
    %s43 = sphi 0, %s27
    %s47 = sphi 0, %s47
    %s49 = sphi 0, %s47
    %s50 = sphi 0, %s49
    %s64 = sphi 0, %s50
    %s68 = sphi 0, %s68
    %s70 = sphi 0, %s68
    %s71 = sphi 0, %s70
    %s85 = sphi 0, %s71
    %s89 = sphi 0, %s89
    %s91 = sphi 0, %s89
    %s92 = sphi 0, %s91
    %s106 = sphi 0, %s92
    %s110 = sphi 0, %s110
    %s112 = sphi 0, %s110
    %s113 = sphi 0, %s112
    %s127 = sphi 0, %s113
    %s131 = sphi 0, %s131
    %s133 = sphi 0, %s131
    %s134 = sphi 0, %s133
    %s148 = sphi 0, %s134
    %s152 = sphi 0, %s152
    %s154 = sphi 0, %s152
    %s155 = sphi 0, %s154
    %s169 = sphi 0, %s155
    %s175 = sphi 0, %s177
    %s178 = sphi 0, %s175
    %s179 = sphi 0, %s178
    %s195 = sphi 0, %s179
  $region4: #{_lambda_.1} parent=0 // loop_header_branch
    %16 = sbr.rel (%p14) target = $region8
  $region5: #{_lambda_.1} parent=0 // loop_body
    %s18 = ssub.s32 %s13, 1
    %s19 = ssub.s32 %s13, 2
    %s20 = sadd.s32 %s13, 1
    %s21 = ssub.s32 %s13, %s20
    %p22 = scmp.eq.s32.totalorder %s21, 0
    %s24 = sadd.s32 %s23, 1
    %s25 = scalar_select %p22, %s23, %s24
    %p28 = pneg %p22
    %p29 = scmp.eq.s32.totalorder %s13, 1
    %p30 = por %p28, %p29
    %p31 = scmp.ne.s32.totalorder %s23, %s26
    %p32 = scmp.eq.s32.totalorder %s13, 0
    %p33 = por %p31, %p32
    %p34 = scmp.ne.s32.totalorder %s23, %s26
    %p35 = scmp.eq.s32.totalorder %s18, 1
    %p36 = por %p34, %p35
    %p37 = scmp.ne.s32.totalorder %s26, %s27
    %p38 = scmp.eq.s32.totalorder %s18, 0
    %p39 = por %p37, %p38
    %p40 = scmp.ne.s32.totalorder %s26, %s27
    %p41 = scmp.eq.s32.totalorder %s19, 1
    %p42 = por %p40, %p41
    %p44 = scmp.ne.s32.totalorder %s27, %s43
    %p45 = scmp.eq.s32.totalorder %s19, 0
    %p46 = por %p44, %p45
    %s48 = sadd.s32 %s47, 1
    %p51 = scmp.eq.s32.totalorder %s13, 1
    %p52 = scmp.ne.s32.totalorder %s47, %s49
    %p53 = scmp.eq.s32.totalorder %s13, 0
    %p54 = por %p52, %p53
    %p55 = scmp.ne.s32.totalorder %s47, %s49
    %p56 = scmp.eq.s32.totalorder %s18, 1
    %p57 = por %p55, %p56
    %p58 = scmp.ne.s32.totalorder %s49, %s50
    %p59 = scmp.eq.s32.totalorder %s18, 0
    %p60 = por %p58, %p59
    %p61 = scmp.ne.s32.totalorder %s49, %s50
    %p62 = scmp.eq.s32.totalorder %s19, 1
    %p63 = por %p61, %p62
    %p65 = scmp.ne.s32.totalorder %s50, %s64
    %p66 = scmp.eq.s32.totalorder %s19, 0
    %p67 = por %p65, %p66
    %s69 = sadd.s32 %s68, 1
    %p72 = scmp.eq.s32.totalorder %s13, 1
    %p73 = scmp.ne.s32.totalorder %s68, %s70
    %p74 = scmp.eq.s32.totalorder %s13, 0
    %p75 = por %p73, %p74
    %p76 = scmp.ne.s32.totalorder %s68, %s70
    %p77 = scmp.eq.s32.totalorder %s18, 1
    %p78 = por %p76, %p77
    %p79 = scmp.ne.s32.totalorder %s70, %s71
    %p80 = scmp.eq.s32.totalorder %s18, 0
    %p81 = por %p79, %p80
    %p82 = scmp.ne.s32.totalorder %s70, %s71
    %p83 = scmp.eq.s32.totalorder %s19, 1
    %p84 = por %p82, %p83
    %p86 = scmp.ne.s32.totalorder %s71, %s85
    %p87 = scmp.eq.s32.totalorder %s19, 0
    %p88 = por %p86, %p87
    %s90 = sadd.s32 %s89, 1
    %p93 = scmp.eq.s32.totalorder %s13, 1
    %p94 = scmp.ne.s32.totalorder %s89, %s91
    %p95 = scmp.eq.s32.totalorder %s13, 0
    %p96 = por %p94, %p95
    %p97 = scmp.ne.s32.totalorder %s89, %s91
    %p98 = scmp.eq.s32.totalorder %s18, 1
    %p99 = por %p97, %p98
    %p100 = scmp.ne.s32.totalorder %s91, %s92
    %p101 = scmp.eq.s32.totalorder %s18, 0
    %p102 = por %p100, %p101
    %p103 = scmp.ne.s32.totalorder %s91, %s92
    %p104 = scmp.eq.s32.totalorder %s19, 1
    %p105 = por %p103, %p104
    %p107 = scmp.ne.s32.totalorder %s92, %s106
    %p108 = scmp.eq.s32.totalorder %s19, 0
    %p109 = por %p107, %p108
    %s111 = sadd.s32 %s110, 1
    %p114 = scmp.eq.s32.totalorder %s13, 1
    %p115 = scmp.ne.s32.totalorder %s110, %s112
    %p116 = scmp.eq.s32.totalorder %s13, 0
    %p117 = por %p115, %p116
    %p118 = scmp.ne.s32.totalorder %s110, %s112
    %p119 = scmp.eq.s32.totalorder %s18, 1
    %p120 = por %p118, %p119
    %p121 = scmp.ne.s32.totalorder %s112, %s113
    %p122 = scmp.eq.s32.totalorder %s18, 0
    %p123 = por %p121, %p122
    %p124 = scmp.ne.s32.totalorder %s112, %s113
    %p125 = scmp.eq.s32.totalorder %s19, 1
    %p126 = por %p124, %p125
    %p128 = scmp.ne.s32.totalorder %s113, %s127
    %p129 = scmp.eq.s32.totalorder %s19, 0
    %p130 = por %p128, %p129
    %s132 = sadd.s32 %s131, 1
    %p135 = scmp.eq.s32.totalorder %s13, 1
    %p136 = scmp.ne.s32.totalorder %s131, %s133
    %p137 = scmp.eq.s32.totalorder %s13, 0
    %p138 = por %p136, %p137
    %p139 = scmp.ne.s32.totalorder %s131, %s133
    %p140 = scmp.eq.s32.totalorder %s18, 1
    %p141 = por %p139, %p140
    %p142 = scmp.ne.s32.totalorder %s133, %s134
    %p143 = scmp.eq.s32.totalorder %s18, 0
    %p144 = por %p142, %p143
    %p145 = scmp.ne.s32.totalorder %s133, %s134
    %p146 = scmp.eq.s32.totalorder %s19, 1
    %p147 = por %p145, %p146
    %p149 = scmp.ne.s32.totalorder %s134, %s148
    %p150 = scmp.eq.s32.totalorder %s19, 0
    %p151 = por %p149, %p150
    %s153 = sadd.s32 %s152, 1
    %p156 = scmp.eq.s32.totalorder %s13, 1
    %p157 = scmp.ne.s32.totalorder %s152, %s154
    %p158 = scmp.eq.s32.totalorder %s13, 0
    %p159 = por %p157, %p158
    %p160 = scmp.ne.s32.totalorder %s152, %s154
    %p161 = scmp.eq.s32.totalorder %s18, 1
    %p162 = por %p160, %p161
    %p163 = scmp.ne.s32.totalorder %s154, %s155
    %p164 = scmp.eq.s32.totalorder %s18, 0
    %p165 = por %p163, %p164
    %p166 = scmp.ne.s32.totalorder %s154, %s155
    %p167 = scmp.eq.s32.totalorder %s19, 1
    %p168 = por %p166, %p167
    %p170 = scmp.ne.s32.totalorder %s155, %s169
    %p171 = scmp.eq.s32.totalorder %s19, 0
    %p172 = por %p170, %p171
    %s173 = ssub.s32 %s13, %s20
    %p174 = scmp.eq.s32.totalorder %s173, 0
    %s176 = sadd.s32 %s175, 1
    %s177 = scalar_select %p174, %s175, %s176
    %p180 = pneg %p174
    %p181 = scmp.eq.s32.totalorder %s13, 1
    %p182 = por %p180, %p181
    %p183 = scmp.ne.s32.totalorder %s175, %s178
    %p184 = scmp.eq.s32.totalorder %s13, 0
    %p185 = por %p183, %p184
    %p186 = scmp.ne.s32.totalorder %s175, %s178
    %p187 = scmp.eq.s32.totalorder %s18, 1
    %p188 = por %p186, %p187
    %p189 = scmp.ne.s32.totalorder %s178, %s179
    %p190 = scmp.eq.s32.totalorder %s18, 0
    %p191 = por %p189, %p190
    %p192 = scmp.ne.s32.totalorder %s178, %s179
    %p193 = scmp.eq.s32.totalorder %s19, 1
    %p194 = por %p192, %p193
    %p196 = scmp.ne.s32.totalorder %s179, %s195
    %p197 = scmp.eq.s32.totalorder %s19, 0
    %p198 = por %p196, %p197
    %p199 = scmp.le.s32.totalorder 1, %s13
    %p200 = scmp.lt.s32.totalorder %s13, 3
    %p201 = pnand %p199, %p200
    %p202 = pneg %p201
    // Predicated region
    $region9: #{_lambda_.1} parent=5 // pred_check
      _
    $region10: #{_lambda_.1} parent=5 // pred_check_branch
      %204 = sbr.rel (%p201) target = $region12
    $region11: #{_lambda_.1} parent=5 // pred_region
      %s205 = ssub.s32 %s13, 1
      // Predicated region
      $region13: #{_lambda_.1} parent=11 // pred_check
        %p206 = pneg %p60
      $region14: #{_lambda_.1} parent=11 // pred_check_branch
        %208 = sbr.rel (%p206) target = $region16
      $region15: #{_lambda_.1} parent=11 // pred_region
        _
      $region16: #{_lambda_.1} parent=11 // pred_fallthru
        _
      // Predicated region
      $region17: #{_lambda_.1} parent=11 // pred_check
        %p209 = pneg %p81
      $region18: #{_lambda_.1} parent=11 // pred_check_branch
        %211 = sbr.rel (%p209) target = $region20
      $region19: #{_lambda_.1} parent=11 // pred_region
        _
      $region20: #{_lambda_.1} parent=11 // pred_fallthru
        _
      // Predicated region
      $region21: #{_lambda_.1} parent=11 // pred_check
        %p212 = pneg %p102
      $region22: #{_lambda_.1} parent=11 // pred_check_branch
        %214 = sbr.rel (%p212) target = $region24
      $region23: #{_lambda_.1} parent=11 // pred_region
        _
      $region24: #{_lambda_.1} parent=11 // pred_fallthru
        _
      // Predicated region
      $region25: #{_lambda_.1} parent=11 // pred_check
        %p215 = pneg %p123
      $region26: #{_lambda_.1} parent=11 // pred_check_branch
        %217 = sbr.rel (%p215) target = $region28
      $region27: #{_lambda_.1} parent=11 // pred_region
        _
      $region28: #{_lambda_.1} parent=11 // pred_fallthru
        _
      // Predicated region
      $region29: #{_lambda_.1} parent=11 // pred_check
        %p218 = pneg %p144
      $region30: #{_lambda_.1} parent=11 // pred_check_branch
        %220 = sbr.rel (%p218) target = $region32
      $region31: #{_lambda_.1} parent=11 // pred_region
        _
      $region32: #{_lambda_.1} parent=11 // pred_fallthru
        _
      // Predicated region
      $region33: #{_lambda_.1} parent=11 // pred_check
        %p221 = pneg %p165
      $region34: #{_lambda_.1} parent=11 // pred_check_branch
        %223 = sbr.rel (%p221) target = $region36
      $region35: #{_lambda_.1} parent=11 // pred_region
        _
      $region36: #{_lambda_.1} parent=11 // pred_fallthru
        _
    $region12: #{_lambda_.1} parent=5 // pred_fallthru
      _
    %p224 = scmp.lt.s32.totalorder %s13, 2
    // Predicated region
    $region37: #{_lambda_.1} parent=5 // pred_check
      %p225 = pneg %p224
    $region38: #{_lambda_.1} parent=5 // pred_check_branch
      %227 = sbr.rel (%p225) target = $region40
    $region39: #{_lambda_.1} parent=5 // pred_region
      // Predicated region
      $region41: #{_lambda_.1} parent=39 // pred_check
        %p228 = pneg %p33
      $region42: #{_lambda_.1} parent=39 // pred_check_branch
        %230 = sbr.rel (%p228) target = $region44
      $region43: #{_lambda_.1} parent=39 // pred_region
        %p231 = scmp.lt.s32.totalorder %s13, 1
        %s232 = scalar_select %p231, %s13, 1
        %s233 = smul.addr %s232, 32
        %s234 = smul.addr %s233, 4
        %s235 = scalar_lea.vmem %s0, %s234
      $region44: #{_lambda_.1} parent=39 // pred_fallthru
        _
    $region40: #{_lambda_.1} parent=5 // pred_fallthru
      _
    %p236 = scmp.le.s32.totalorder 1, %s13
    %p237 = scmp.lt.s32.totalorder %s13, 3
    %p238 = pnand %p236, %p237
    %p239 = pneg %p238
    // Predicated region
    $region45: #{_lambda_.1} parent=5 // pred_check
      _
    $region46: #{_lambda_.1} parent=5 // pred_check_branch
      %241 = sbr.rel (%p238) target = $region48
    $region47: #{_lambda_.1} parent=5 // pred_region
      %s242 = ssub.s32 %s13, 1
      %p243 = scmp.lt.s32.totalorder %s18, 1
      %s244 = scalar_select %p243, %s18, 1
      %s245 = smul.addr %s244, 32
      %s246 = smul.addr %s245, 4
      %s247 = scalar_lea.vmem %s0, %s246
      %p248 = pneg %p39
      %p249 = pneg %p36
      %p250 = pneg %p60
      %p251 = pneg %p57
      %p252 = pneg %p81
      %p253 = pneg %p78
      %p254 = pneg %p102
      %p255 = pneg %p99
      %p256 = pneg %p123
      %p257 = pneg %p120
      %p258 = pneg %p144
      %p259 = pneg %p141
      %p260 = pneg %p165
      %p261 = pneg %p162
      %p262 = pneg %p191
      %p263 = pneg %p188
      %p264 = scmp.lt.s32.totalorder %s18, 1
      %s265 = scalar_select %p264, %s18, 1
      %s266 = smul.addr %s265, 32
      %s267 = smul.addr %s266, 4
      %s268 = scalar_lea.vmem %s7, %s267
      %p269 = scmp.lt.s32.totalorder %s18, 1
      %s270 = scalar_select %p269, %s18, 1
      %s271 = smul.addr %s270, 32
      %s272 = smul.addr %s271, 4
      %s273 = scalar_lea.vmem %s0, %s272
      %p274 = scmp.lt.s32.totalorder %s18, 1
      %s275 = scalar_select %p274, %s18, 1
      %s276 = smul.addr %s275, 32
      %s277 = smul.addr %s276, 4
      %s278 = scalar_lea.vmem %s7, %s277
      %v280 = vld [vmem:[%s273] sm:$0xf]
      %v281 = vld [vmem:[%s273 + $0x4] sm:$0xf]
      %v282 = vld [vmem:[%s273 + $0x8] sm:$0xf]
      %v283 = vld [vmem:[%s273 + $0xc] sm:$0xf]
      %v284 = vld [vmem:[%s273 + $0x10] sm:$0xf]
      %v285 = vld [vmem:[%s273 + $0x14] sm:$0xf]
      %v286 = vld [vmem:[%s273 + $0x18] sm:$0xf]
      %v287 = vld [vmem:[%s273 + $0x1c] sm:$0xf]
      %v288 = vld [vmem:[%s273 + $0x20] sm:$0xf]
      %v289 = vld [vmem:[%s273 + $0x24] sm:$0xf]
      %v290 = vld [vmem:[%s273 + $0x28] sm:$0xf]
      %v291 = vld [vmem:[%s273 + $0x2c] sm:$0xf]
      %v292 = vld [vmem:[%s273 + $0x30] sm:$0xf]
      %v293 = vld [vmem:[%s273 + $0x34] sm:$0xf]
      %v294 = vld [vmem:[%s273 + $0x38] sm:$0xf]
      %v295 = vld [vmem:[%s273 + $0x3c] sm:$0xf]
      %v296 = vld [vmem:[%s273 + $0x40] sm:$0xf]
      %v297 = vld [vmem:[%s273 + $0x44] sm:$0xf]
      %v298 = vld [vmem:[%s273 + $0x48] sm:$0xf]
      %v299 = vld [vmem:[%s273 + $0x4c] sm:$0xf]
      %v300 = vld [vmem:[%s273 + $0x50] sm:$0xf]
      %v301 = vld [vmem:[%s273 + $0x54] sm:$0xf]
      %v302 = vld [vmem:[%s273 + $0x58] sm:$0xf]
      %v303 = vld [vmem:[%s273 + $0x5c] sm:$0xf]
      %v304 = vld [vmem:[%s273 + $0x60] sm:$0xf]
      %v305 = vld [vmem:[%s273 + $0x64] sm:$0xf]
      %v306 = vld [vmem:[%s273 + $0x68] sm:$0xf]
      %v307 = vld [vmem:[%s273 + $0x6c] sm:$0xf]
      %v308 = vld [vmem:[%s273 + $0x70] sm:$0xf]
      %v309 = vld [vmem:[%s273 + $0x74] sm:$0xf]
      %v310 = vld [vmem:[%s273 + $0x78] sm:$0xf]
      %v311 = vld [vmem:[%s273 + $0x7c] sm:$0xf]
      %v312 = vld [vmem:[%s1] sm:$0xf]
      %v313 = vld [vmem:[%s1 + $0x4] sm:$0xf]
      %v314 = vld [vmem:[%s1 + $0x8] sm:$0xf]
      %v315 = vld [vmem:[%s1 + $0xc] sm:$0xf]
      %v316 = vld [vmem:[%s1 + $0x10] sm:$0xf]
      %v317 = vld [vmem:[%s1 + $0x14] sm:$0xf]
      %v318 = vld [vmem:[%s1 + $0x18] sm:$0xf]
      %v319 = vld [vmem:[%s1 + $0x1c] sm:$0xf]
      %v320 = vld [vmem:[%s1 + $0x20] sm:$0xf]
      %v321 = vld [vmem:[%s1 + $0x24] sm:$0xf]
      %v322 = vld [vmem:[%s1 + $0x28] sm:$0xf]
      %v323 = vld [vmem:[%s1 + $0x2c] sm:$0xf]
      %v324 = vld [vmem:[%s1 + $0x30] sm:$0xf]
      %v325 = vld [vmem:[%s1 + $0x34] sm:$0xf]
      %v326 = vld [vmem:[%s1 + $0x38] sm:$0xf]
      %v327 = vld [vmem:[%s1 + $0x3c] sm:$0xf]
      %v360 = vunpack.c.l.b16 %v280
      %v361 = vunpack.c.l.b16 %v281
      %v362 = vunpack.c.l.b16 %v282
      %v363 = vunpack.c.l.b16 %v283
      %v364 = vunpack.c.l.b16 %v284
      %v365 = vunpack.c.l.b16 %v285
      %v366 = vunpack.c.l.b16 %v286
      %v367 = vunpack.c.l.b16 %v287
      %v368 = vunpack.c.l.b16 %v288
      %v369 = vunpack.c.l.b16 %v289
      %v370 = vunpack.c.l.b16 %v290
      %v371 = vunpack.c.l.b16 %v291
      %v372 = vunpack.c.l.b16 %v292
      %v373 = vunpack.c.l.b16 %v293
      %v374 = vunpack.c.l.b16 %v294
      %v375 = vunpack.c.l.b16 %v295
      %v376 = vunpack.c.l.b16 %v296
      %v377 = vunpack.c.l.b16 %v297
      %v378 = vunpack.c.l.b16 %v298
      %v379 = vunpack.c.l.b16 %v299
      %v380 = vunpack.c.l.b16 %v300
      %v381 = vunpack.c.l.b16 %v301
      %v382 = vunpack.c.l.b16 %v302
      %v383 = vunpack.c.l.b16 %v303
      %v384 = vunpack.c.l.b16 %v304
      %v385 = vunpack.c.l.b16 %v305
      %v386 = vunpack.c.l.b16 %v306
      %v387 = vunpack.c.l.b16 %v307
      %v388 = vunpack.c.l.b16 %v308
      %v389 = vunpack.c.l.b16 %v309
      %v390 = vunpack.c.l.b16 %v310
      %v391 = vunpack.c.l.b16 %v311
      %v392 = vpack.c.b16 %v361, %v360
      %v393 = vpack.c.b16 %v363, %v362
      %v394 = vpack.c.b16 %v365, %v364
      %v395 = vpack.c.b16 %v367, %v366
      %v396 = vpack.c.b16 %v369, %v368
      %v397 = vpack.c.b16 %v371, %v370
      %v398 = vpack.c.b16 %v373, %v372
      %v399 = vpack.c.b16 %v375, %v374
      %v400 = vpack.c.b16 %v377, %v376
      %v401 = vpack.c.b16 %v379, %v378
      %v402 = vpack.c.b16 %v381, %v380
      %v403 = vpack.c.b16 %v383, %v382
      %v404 = vpack.c.b16 %v385, %v384
      %v405 = vpack.c.b16 %v387, %v386
      %v406 = vpack.c.b16 %v389, %v388
      %v407 = vpack.c.b16 %v391, %v390
      %v440 = vunpack.c.l.b16 %v312
      %v441 = vunpack.c.l.b16 %v313
      %v442 = vunpack.c.l.b16 %v314
      %v443 = vunpack.c.l.b16 %v315
      %v444 = vunpack.c.l.b16 %v316
      %v445 = vunpack.c.l.b16 %v317
      %v446 = vunpack.c.l.b16 %v318
      %v447 = vunpack.c.l.b16 %v319
      %v448 = vunpack.c.l.b16 %v320
      %v449 = vunpack.c.l.b16 %v321
      %v450 = vunpack.c.l.b16 %v322
      %v451 = vunpack.c.l.b16 %v323
      %v452 = vunpack.c.l.b16 %v324
      %v453 = vunpack.c.l.b16 %v325
      %v454 = vunpack.c.l.b16 %v326
      %v455 = vunpack.c.l.b16 %v327
      %v456 = vpack.c.b16 %v441, %v440
      %v457 = vpack.c.b16 %v443, %v442
      %v458 = vpack.c.b16 %v445, %v444
      %v459 = vpack.c.b16 %v447, %v446
      %v460 = vpack.c.b16 %v449, %v448
      %v461 = vpack.c.b16 %v451, %v450
      %v462 = vpack.c.b16 %v453, %v452
      %v463 = vpack.c.b16 %v455, %v454
      %472 = vmatprep.subr.bf16.mxu0 0
      %473 = vmatpush1.bf16.msra.mxu0 %v463
      %474 = vmatprep.subr.bf16.mxu0 0
      %475 = vmatpush1.bf16.msra.mxu0 %v462
      %476 = vmatprep.subr.bf16.mxu0 0
      %477 = vmatpush1.bf16.msra.mxu0 %v461
      %478 = vmatprep.subr.bf16.mxu0 0
      %479 = vmatpush1.bf16.msra.mxu0 %v460
      %480 = vmatprep.subr.bf16.mxu0 0
      %481 = vmatpush1.bf16.msra.mxu0 %v459
      %482 = vmatprep.subr.bf16.mxu0 0
      %483 = vmatpush1.bf16.msra.mxu0 %v458
      %484 = vmatprep.subr.bf16.mxu0 0
      %485 = vmatpush1.bf16.msra.mxu0 %v457
      %486 = vmatprep.subr.bf16.mxu0 0
      %487 = vmatpush1.bf16.msra.mxu0 %v456
      %488 = vmatprep.subr.bf16.mxu0 0
      %489 = vmatpush2.bf16.msra.mxu0 0
      %490 = vmatprep.subr.bf16.mxu0 0
      %491 = vmatpush2.bf16.msra.mxu0 0
      %492 = vmatprep.subr.bf16.mxu0 0
      %493 = vmatpush2.bf16.msra.mxu0 0
      %494 = vmatprep.subr.bf16.mxu0 0
      %495 = vmatpush2.bf16.msra.mxu0 0
      %496 = vmatprep.subr.bf16.mxu0 0
      %497 = vmatpush2.bf16.msra.mxu0 0
      %498 = vmatprep.subr.bf16.mxu0 0
      %499 = vmatpush2.bf16.msra.mxu0 0
      %500 = vmatprep.subr.bf16.mxu0 0
      %501 = vmatpush2.bf16.msra.mxu0 0
      %502 = vmatprep.subr.bf16.mxu0 0
      %503 = vmatpush2.bf16.msra.mxu0 0
      %504 = vmatprep.mubr.bf16.mxu0 0
      %505 = vmatmul.mubr.bf16.gmra.mxu0 %v392
      %v506 = vpop.f32.mrf.mxu0
      %v507 = vadd.f32 0.0, %v506
      %v508 = vpop.f32.mrf.mxu0
      %v509 = vpop.f32.mrf.mxu0
      %v510 = vadd.f32 0.0, %v509
      %v511 = vpop.f32.mrf.mxu0
      %512 = vmatprep.mubr.bf16.mxu0 0
      %513 = vmatmul.mubr.bf16.gmra.mxu0 %v393
      %v514 = vpop.f32.mrf.mxu0
      %v515 = vadd.f32 0.0, %v514
      %v516 = vpop.f32.mrf.mxu0
      %v517 = vpop.f32.mrf.mxu0
      %v518 = vadd.f32 0.0, %v517
      %v519 = vpop.f32.mrf.mxu0
      %520 = vmatprep.mubr.bf16.mxu0 0
      %521 = vmatmul.mubr.bf16.gmra.mxu0 %v394
      %v522 = vpop.f32.mrf.mxu0
      %v523 = vadd.f32 0.0, %v522
      %v524 = vpop.f32.mrf.mxu0
      %v525 = vpop.f32.mrf.mxu0
      %v526 = vadd.f32 0.0, %v525
      %v527 = vpop.f32.mrf.mxu0
      %528 = vmatprep.mubr.bf16.mxu0 0
      %529 = vmatmul.mubr.bf16.gmra.mxu0 %v395
      %v530 = vpop.f32.mrf.mxu0
      %v531 = vadd.f32 0.0, %v530
      %v532 = vpop.f32.mrf.mxu0
      %v533 = vpop.f32.mrf.mxu0
      %v534 = vadd.f32 0.0, %v533
      %v535 = vpop.f32.mrf.mxu0
      %536 = vmatprep.mubr.bf16.mxu0 0
      %537 = vmatmul.mubr.bf16.gmra.mxu0 %v396
      %v538 = vpop.f32.mrf.mxu0
      %v539 = vadd.f32 0.0, %v538
      %v540 = vpop.f32.mrf.mxu0
      %v541 = vpop.f32.mrf.mxu0
      %v542 = vadd.f32 0.0, %v541
      %v543 = vpop.f32.mrf.mxu0
      %544 = vmatprep.mubr.bf16.mxu0 0
      %545 = vmatmul.mubr.bf16.gmra.mxu0 %v397
      %v546 = vpop.f32.mrf.mxu0
      %v547 = vadd.f32 0.0, %v546
      %v548 = vpop.f32.mrf.mxu0
      %v549 = vpop.f32.mrf.mxu0
      %v550 = vadd.f32 0.0, %v549
      %v551 = vpop.f32.mrf.mxu0
      %552 = vmatprep.mubr.bf16.mxu0 0
      %553 = vmatmul.mubr.bf16.gmra.mxu0 %v398
      %v554 = vpop.f32.mrf.mxu0
      %v555 = vadd.f32 0.0, %v554
      %v556 = vpop.f32.mrf.mxu0
      %v557 = vpop.f32.mrf.mxu0
      %v558 = vadd.f32 0.0, %v557
      %v559 = vpop.f32.mrf.mxu0
      %560 = vmatprep.mubr.bf16.mxu0 0
      %561 = vmatmul.mubr.bf16.gmra.mxu0 %v399
      %v562 = vpop.f32.mrf.mxu0
      %v563 = vadd.f32 0.0, %v562
      %v564 = vpop.f32.mrf.mxu0
      %v565 = vpop.f32.mrf.mxu0
      %v566 = vadd.f32 0.0, %v565
      %v567 = vpop.f32.mrf.mxu0
      %568 = vmatprep.mubr.bf16.mxu0 0
      %569 = vmatmul.mubr.bf16.gmra.mxu0 %v400
      %v570 = vpop.f32.mrf.mxu0
      %v571 = vadd.f32 0.0, %v570
      %v572 = vpop.f32.mrf.mxu0
      %v573 = vpop.f32.mrf.mxu0
      %v574 = vadd.f32 0.0, %v573
      %v575 = vpop.f32.mrf.mxu0
      %576 = vmatprep.mubr.bf16.mxu0 0
      %577 = vmatmul.mubr.bf16.gmra.mxu0 %v401
      %v578 = vpop.f32.mrf.mxu0
      %v579 = vadd.f32 0.0, %v578
      %v580 = vpop.f32.mrf.mxu0
      %v581 = vpop.f32.mrf.mxu0
      %v582 = vadd.f32 0.0, %v581
      %v583 = vpop.f32.mrf.mxu0
      %584 = vmatprep.mubr.bf16.mxu0 0
      %585 = vmatmul.mubr.bf16.gmra.mxu0 %v402
      %v586 = vpop.f32.mrf.mxu0
      %v587 = vadd.f32 0.0, %v586
      %v588 = vpop.f32.mrf.mxu0
      %v589 = vpop.f32.mrf.mxu0
      %v590 = vadd.f32 0.0, %v589
      %v591 = vpop.f32.mrf.mxu0
      %592 = vmatprep.mubr.bf16.mxu0 0
      %593 = vmatmul.mubr.bf16.gmra.mxu0 %v403
      %v594 = vpop.f32.mrf.mxu0
      %v595 = vadd.f32 0.0, %v594
      %v596 = vpop.f32.mrf.mxu0
      %v597 = vpop.f32.mrf.mxu0
      %v598 = vadd.f32 0.0, %v597
      %v599 = vpop.f32.mrf.mxu0
      %600 = vmatprep.mubr.bf16.mxu0 0
      %601 = vmatmul.mubr.bf16.gmra.mxu0 %v404
      %v602 = vpop.f32.mrf.mxu0
      %v603 = vadd.f32 0.0, %v602
      %v604 = vpop.f32.mrf.mxu0
      %v605 = vpop.f32.mrf.mxu0
      %v606 = vadd.f32 0.0, %v605
      %v607 = vpop.f32.mrf.mxu0
      %608 = vmatprep.mubr.bf16.mxu0 0
      %609 = vmatmul.mubr.bf16.gmra.mxu0 %v405
      %v610 = vpop.f32.mrf.mxu0
      %v611 = vadd.f32 0.0, %v610
      %v612 = vpop.f32.mrf.mxu0
      %v613 = vpop.f32.mrf.mxu0
      %v614 = vadd.f32 0.0, %v613
      %v615 = vpop.f32.mrf.mxu0
      %616 = vmatprep.mubr.bf16.mxu0 0
      %617 = vmatmul.mubr.bf16.gmra.mxu0 %v406
      %v618 = vpop.f32.mrf.mxu0
      %v619 = vadd.f32 0.0, %v618
      %v620 = vpop.f32.mrf.mxu0
      %v621 = vpop.f32.mrf.mxu0
      %v622 = vadd.f32 0.0, %v621
      %v623 = vpop.f32.mrf.mxu0
      %624 = vmatprep.mubr.bf16.mxu0 0
      %625 = vmatmul.mubr.bf16.gmra.mxu0 %v407
      %v626 = vpop.f32.mrf.mxu0
      %v627 = vadd.f32 0.0, %v626
      %v628 = vpop.f32.mrf.mxu0
      %v629 = vpop.f32.mrf.mxu0
      %v630 = vadd.f32 0.0, %v629
      %v631 = vpop.f32.mrf.mxu0
      %632 = vdwg.mxu0
      %v633 = vld [vmem:[%s2] sm:$0x1]
      %v635 = vlaneseq
      %v636 = vshrl.u32 %v635, 7
      %v637 = vsub.s32 0, %v636
      %v638 = vrot.slane %v633, %v637
      %v640 = vmul.f32 %v507, %v638
      %v641 = vmul.f32 %v510, %v638
      %v642 = vmul.f32 %v515, %v638
      %v643 = vmul.f32 %v518, %v638
      %v644 = vmul.f32 %v523, %v638
      %v645 = vmul.f32 %v526, %v638
      %v646 = vmul.f32 %v531, %v638
      %v647 = vmul.f32 %v534, %v638
      %v648 = vmul.f32 %v539, %v638
      %v649 = vmul.f32 %v542, %v638
      %v650 = vmul.f32 %v547, %v638
      %v651 = vmul.f32 %v550, %v638
      %v652 = vmul.f32 %v555, %v638
      %v653 = vmul.f32 %v558, %v638
      %v654 = vmul.f32 %v563, %v638
      %v655 = vmul.f32 %v566, %v638
      %v656 = vmul.f32 %v571, %v638
      %v657 = vmul.f32 %v574, %v638
      %v658 = vmul.f32 %v579, %v638
      %v659 = vmul.f32 %v582, %v638
      %v660 = vmul.f32 %v587, %v638
      %v661 = vmul.f32 %v590, %v638
      %v662 = vmul.f32 %v595, %v638
      %v663 = vmul.f32 %v598, %v638
      %v664 = vmul.f32 %v603, %v638
      %v665 = vmul.f32 %v606, %v638
      %v666 = vmul.f32 %v611, %v638
      %v667 = vmul.f32 %v614, %v638
      %v668 = vmul.f32 %v619, %v638
      %v669 = vmul.f32 %v622, %v638
      %v670 = vmul.f32 %v627, %v638
      %v671 = vmul.f32 %v630, %v638
      %v672 = vld [vmem:[%s3] sm:$0x1]
      %v674 = vlaneseq
      %v675 = vshrl.u32 %v674, 7
      %v676 = vsub.s32 0, %v675
      %v677 = vrot.slane %v672, %v676
      %v679 = vadd.f32 %v640, %v677
      %v680 = vadd.f32 %v641, %v677
      %v681 = vadd.f32 %v642, %v677
      %v682 = vadd.f32 %v643, %v677
      %v683 = vadd.f32 %v644, %v677
      %v684 = vadd.f32 %v645, %v677
      %v685 = vadd.f32 %v646, %v677
      %v686 = vadd.f32 %v647, %v677
      %v687 = vadd.f32 %v648, %v677
      %v688 = vadd.f32 %v649, %v677
      %v689 = vadd.f32 %v650, %v677
      %v690 = vadd.f32 %v651, %v677
      %v691 = vadd.f32 %v652, %v677
      %v692 = vadd.f32 %v653, %v677
      %v693 = vadd.f32 %v654, %v677
      %v694 = vadd.f32 %v655, %v677
      %v695 = vadd.f32 %v656, %v677
      %v696 = vadd.f32 %v657, %v677
      %v697 = vadd.f32 %v658, %v677
      %v698 = vadd.f32 %v659, %v677
      %v699 = vadd.f32 %v660, %v677
      %v700 = vadd.f32 %v661, %v677
      %v701 = vadd.f32 %v662, %v677
      %v702 = vadd.f32 %v663, %v677
      %v703 = vadd.f32 %v664, %v677
      %v704 = vadd.f32 %v665, %v677
      %v705 = vadd.f32 %v666, %v677
      %v706 = vadd.f32 %v667, %v677
      %v707 = vadd.f32 %v668, %v677
      %v708 = vadd.f32 %v669, %v677
      %v709 = vadd.f32 %v670, %v677
      %v710 = vadd.f32 %v671, %v677
      %v711 = vmax.f32 %v679, 0.0
      %v712 = vmax.f32 %v680, 0.0
      %v713 = vmax.f32 %v681, 0.0
      %v714 = vmax.f32 %v682, 0.0
      %v715 = vmax.f32 %v683, 0.0
      %v716 = vmax.f32 %v684, 0.0
      %v717 = vmax.f32 %v685, 0.0
      %v718 = vmax.f32 %v686, 0.0
      %v719 = vmax.f32 %v687, 0.0
      %v720 = vmax.f32 %v688, 0.0
      %v721 = vmax.f32 %v689, 0.0
      %v722 = vmax.f32 %v690, 0.0
      %v723 = vmax.f32 %v691, 0.0
      %v724 = vmax.f32 %v692, 0.0
      %v725 = vmax.f32 %v693, 0.0
      %v726 = vmax.f32 %v694, 0.0
      %v727 = vmax.f32 %v695, 0.0
      %v728 = vmax.f32 %v696, 0.0
      %v729 = vmax.f32 %v697, 0.0
      %v730 = vmax.f32 %v698, 0.0
      %v731 = vmax.f32 %v699, 0.0
      %v732 = vmax.f32 %v700, 0.0
      %v733 = vmax.f32 %v701, 0.0
      %v734 = vmax.f32 %v702, 0.0
      %v735 = vmax.f32 %v703, 0.0
      %v736 = vmax.f32 %v704, 0.0
      %v737 = vmax.f32 %v705, 0.0
      %v738 = vmax.f32 %v706, 0.0
      %v739 = vmax.f32 %v707, 0.0
      %v740 = vmax.f32 %v708, 0.0
      %v741 = vmax.f32 %v709, 0.0
      %v742 = vmax.f32 %v710, 0.0
      %743 = vst [vmem:[#allocation2] sm:$0xff] 0.0
      %744 = vst [vmem:[#allocation2 + $0x8] sm:$0xff] 0.0
      %745 = vst [vmem:[#allocation2 + $0x10] sm:$0xff] 0.0
      %746 = vst [vmem:[#allocation2 + $0x18] sm:$0x1] 0.0
      %s747 = scalar_lea.vmem [#allocation2], 544
      %748 = vst [vmem:[%s747] sm:$0xff] 0.0
      %749 = vst [vmem:[%s747 + $0x8] sm:$0xff] 0.0
      %750 = vst [vmem:[%s747 + $0x10] sm:$0xff] 0.0
      %751 = vst [vmem:[%s747 + $0x18] sm:$0x1] 0.0
      %752 = vst [vmem:[#allocation2 + $0x7] sm:$0x1] 0.0
      %753 = vst [vmem:[#allocation2 + $0x27] sm:$0x1] 0.0
      %754 = vst [vmem:[#allocation2 + $0x47] sm:$0x1] 0.0
      %755 = vst [vmem:[#allocation2 + $0x67] sm:$0x1] 0.0
      %756 = vst [vmem:[#allocation2 + $0x87] sm:$0x1] 0.0
      %757 = vst [vmem:[#allocation2 + $0xa7] sm:$0x1] 0.0
      %758 = vst [vmem:[#allocation2 + $0xc7] sm:$0x1] 0.0
      %759 = vst [vmem:[#allocation2 + $0xe7] sm:$0x1] 0.0
      %760 = vst [vmem:[#allocation2 + $0x107] sm:$0x1] 0.0
      %761 = vst [vmem:[#allocation2 + $0x127] sm:$0x1] 0.0
      %762 = vst [vmem:[#allocation2 + $0x147] sm:$0x1] 0.0
      %763 = vst [vmem:[#allocation2 + $0x167] sm:$0x1] 0.0
      %764 = vst [vmem:[#allocation2 + $0x187] sm:$0x1] 0.0
      %765 = vst [vmem:[#allocation2 + $0x1a7] sm:$0x1] 0.0
      %766 = vst [vmem:[#allocation2 + $0x1c7] sm:$0x1] 0.0
      %767 = vst [vmem:[#allocation2 + $0x1e7] sm:$0x1] 0.0
      %768 = vst [vmem:[#allocation2 + $0x207] sm:$0x1] 0.0
      %769 = vst [vmem:[#allocation2 + $0x227] sm:$0x1] 0.0
      %770 = vst [vmem:[#allocation2 + $0x18] sm:$0x1] 0.0
      %771 = vst [vmem:[#allocation2 + $0x38] sm:$0x1] 0.0
      %772 = vst [vmem:[#allocation2 + $0x58] sm:$0x1] 0.0
      %773 = vst [vmem:[#allocation2 + $0x78] sm:$0x1] 0.0
      %774 = vst [vmem:[#allocation2 + $0x98] sm:$0x1] 0.0
      %775 = vst [vmem:[#allocation2 + $0xb8] sm:$0x1] 0.0
      %776 = vst [vmem:[#allocation2 + $0xd8] sm:$0x1] 0.0
      %777 = vst [vmem:[#allocation2 + $0xf8] sm:$0x1] 0.0
      %778 = vst [vmem:[#allocation2 + $0x118] sm:$0x1] 0.0
      %779 = vst [vmem:[#allocation2 + $0x138] sm:$0x1] 0.0
      %780 = vst [vmem:[#allocation2 + $0x158] sm:$0x1] 0.0
      %781 = vst [vmem:[#allocation2 + $0x178] sm:$0x1] 0.0
      %782 = vst [vmem:[#allocation2 + $0x198] sm:$0x1] 0.0
      %783 = vst [vmem:[#allocation2 + $0x1b8] sm:$0x1] 0.0
      %784 = vst [vmem:[#allocation2 + $0x1d8] sm:$0x1] 0.0
      %785 = vst [vmem:[#allocation2 + $0x1f8] sm:$0x1] 0.0
      %786 = vst [vmem:[#allocation2 + $0x218] sm:$0x1] 0.0
      %787 = vst [vmem:[#allocation2 + $0x238] sm:$0x1] 0.0
      %s788 = scalar_lea.vmem [#allocation2], 32
      %789 = vst [vmem:[%s788 + $0x8] sm:$0xff] %v711
      %790 = vst [vmem:[%s788 + $0x10] sm:$0xff] %v712
      %791 = vst [vmem:[%s788 + $0x28] sm:$0xff] %v713
      %792 = vst [vmem:[%s788 + $0x30] sm:$0xff] %v714
      %793 = vst [vmem:[%s788 + $0x48] sm:$0xff] %v715
      %794 = vst [vmem:[%s788 + $0x50] sm:$0xff] %v716
      %795 = vst [vmem:[%s788 + $0x68] sm:$0xff] %v717
      %796 = vst [vmem:[%s788 + $0x70] sm:$0xff] %v718
      %797 = vst [vmem:[%s788 + $0x88] sm:$0xff] %v719
      %798 = vst [vmem:[%s788 + $0x90] sm:$0xff] %v720
      %799 = vst [vmem:[%s788 + $0xa8] sm:$0xff] %v721
      %800 = vst [vmem:[%s788 + $0xb0] sm:$0xff] %v722
      %801 = vst [vmem:[%s788 + $0xc8] sm:$0xff] %v723
      %802 = vst [vmem:[%s788 + $0xd0] sm:$0xff] %v724
      %803 = vst [vmem:[%s788 + $0xe8] sm:$0xff] %v725
      %804 = vst [vmem:[%s788 + $0xf0] sm:$0xff] %v726
      %805 = vst [vmem:[%s788 + $0x108] sm:$0xff] %v727
      %806 = vst [vmem:[%s788 + $0x110] sm:$0xff] %v728
      %807 = vst [vmem:[%s788 + $0x128] sm:$0xff] %v729
      %808 = vst [vmem:[%s788 + $0x130] sm:$0xff] %v730
      %809 = vst [vmem:[%s788 + $0x148] sm:$0xff] %v731
      %810 = vst [vmem:[%s788 + $0x150] sm:$0xff] %v732
      %811 = vst [vmem:[%s788 + $0x168] sm:$0xff] %v733
      %812 = vst [vmem:[%s788 + $0x170] sm:$0xff] %v734
      %813 = vst [vmem:[%s788 + $0x188] sm:$0xff] %v735
      %814 = vst [vmem:[%s788 + $0x190] sm:$0xff] %v736
      %815 = vst [vmem:[%s788 + $0x1a8] sm:$0xff] %v737
      %816 = vst [vmem:[%s788 + $0x1b0] sm:$0xff] %v738
      %817 = vst [vmem:[%s788 + $0x1c8] sm:$0xff] %v739
      %818 = vst [vmem:[%s788 + $0x1d0] sm:$0xff] %v740
      %819 = vst [vmem:[%s788 + $0x1e8] sm:$0xff] %v741
      %820 = vst [vmem:[%s788 + $0x1f0] sm:$0xff] %v742
      %v821 = vld [vmem:[#allocation2 + $0x7] sm:$0xff]
      %v822 = vld [vmem:[#allocation2 + $0xf] sm:$0xff]
      %v823 = vld [vmem:[#allocation2 + $0x27] sm:$0xff]
      %v824 = vld [vmem:[#allocation2 + $0x2f] sm:$0xff]
      %v825 = vld [vmem:[#allocation2 + $0x47] sm:$0xff]
      %v826 = vld [vmem:[#allocation2 + $0x4f] sm:$0xff]
      %v827 = vld [vmem:[#allocation2 + $0x67] sm:$0xff]
      %v828 = vld [vmem:[#allocation2 + $0x6f] sm:$0xff]
      %v829 = vld [vmem:[#allocation2 + $0x87] sm:$0xff]
      %v830 = vld [vmem:[#allocation2 + $0x8f] sm:$0xff]
      %v831 = vld [vmem:[#allocation2 + $0xa7] sm:$0xff]
      %v832 = vld [vmem:[#allocation2 + $0xaf] sm:$0xff]
      %v833 = vld [vmem:[#allocation2 + $0xc7] sm:$0xff]
      %v834 = vld [vmem:[#allocation2 + $0xcf] sm:$0xff]
      %v835 = vld [vmem:[#allocation2 + $0xe7] sm:$0xff]
      %v836 = vld [vmem:[#allocation2 + $0xef] sm:$0xff]
      %v837 = vld [vmem:[#allocation2 + $0x107] sm:$0xff]
      %v838 = vld [vmem:[#allocation2 + $0x10f] sm:$0xff]
      %v839 = vld [vmem:[#allocation2 + $0x127] sm:$0xff]
      %v840 = vld [vmem:[#allocation2 + $0x12f] sm:$0xff]
      %v841 = vld [vmem:[#allocation2 + $0x147] sm:$0xff]
      %v842 = vld [vmem:[#allocation2 + $0x14f] sm:$0xff]
      %v843 = vld [vmem:[#allocation2 + $0x167] sm:$0xff]
      %v844 = vld [vmem:[#allocation2 + $0x16f] sm:$0xff]
      %v845 = vld [vmem:[#allocation2 + $0x187] sm:$0xff]
      %v846 = vld [vmem:[#allocation2 + $0x18f] sm:$0xff]
      %v847 = vld [vmem:[#allocation2 + $0x1a7] sm:$0xff]
      %v848 = vld [vmem:[#allocation2 + $0x1af] sm:$0xff]
      %v849 = vld [vmem:[#allocation2 + $0x1c7] sm:$0xff]
      %v850 = vld [vmem:[#allocation2 + $0x1cf] sm:$0xff]
      %v851 = vld [vmem:[#allocation2 + $0x1e7] sm:$0xff]
      %v852 = vld [vmem:[#allocation2 + $0x1ef] sm:$0xff]
      %v853 = vpack.c.bf16 %v822, %v821
      %v854 = vpack.c.bf16 %v824, %v823
      %v855 = vpack.c.bf16 %v826, %v825
      %v856 = vpack.c.bf16 %v828, %v827
      %v857 = vpack.c.bf16 %v830, %v829
      %v858 = vpack.c.bf16 %v832, %v831
      %v859 = vpack.c.bf16 %v834, %v833
      %v860 = vpack.c.bf16 %v836, %v835
      %v861 = vpack.c.bf16 %v838, %v837
      %v862 = vpack.c.bf16 %v840, %v839
      %v863 = vpack.c.bf16 %v842, %v841
      %v864 = vpack.c.bf16 %v844, %v843
      %v865 = vpack.c.bf16 %v846, %v845
      %v866 = vpack.c.bf16 %v848, %v847
      %v867 = vpack.c.bf16 %v850, %v849
      %v868 = vpack.c.bf16 %v852, %v851
      %v885 = vunpack.c.l.b16 %v853
      %v886 = vunpack.c.h.b16 %v853
      %v887 = vunpack.c.l.b16 %v854
      %v888 = vunpack.c.h.b16 %v854
      %v889 = vunpack.c.l.b16 %v855
      %v890 = vunpack.c.h.b16 %v855
      %v891 = vunpack.c.l.b16 %v856
      %v892 = vunpack.c.h.b16 %v856
      %v893 = vunpack.c.l.b16 %v857
      %v894 = vunpack.c.h.b16 %v857
      %v895 = vunpack.c.l.b16 %v858
      %v896 = vunpack.c.h.b16 %v858
      %v897 = vunpack.c.l.b16 %v859
      %v898 = vunpack.c.h.b16 %v859
      %v899 = vunpack.c.l.b16 %v860
      %v900 = vunpack.c.h.b16 %v860
      %v901 = vunpack.c.l.b16 %v861
      %v902 = vunpack.c.h.b16 %v861
      %v903 = vunpack.c.l.b16 %v862
      %v904 = vunpack.c.h.b16 %v862
      %v905 = vunpack.c.l.b16 %v863
      %v906 = vunpack.c.h.b16 %v863
      %v907 = vunpack.c.l.b16 %v864
      %v908 = vunpack.c.h.b16 %v864
      %v909 = vunpack.c.l.b16 %v865
      %v910 = vunpack.c.h.b16 %v865
      %v911 = vunpack.c.l.b16 %v866
      %v912 = vunpack.c.h.b16 %v866
      %v913 = vunpack.c.l.b16 %v867
      %v914 = vunpack.c.h.b16 %v867
      %v915 = vunpack.c.l.b16 %v868
      %v916 = vunpack.c.h.b16 %v868
      %v917 = vpack.c.b16 %v885, %v885
      %v918 = vpack.c.b16 %v886, %v886
      %v919 = vpack.c.b16 %v887, %v887
      %v920 = vpack.c.b16 %v888, %v888
      %v921 = vpack.c.b16 %v889, %v889
      %v922 = vpack.c.b16 %v890, %v890
      %v923 = vpack.c.b16 %v891, %v891
      %v924 = vpack.c.b16 %v892, %v892
      %v925 = vpack.c.b16 %v893, %v893
      %v926 = vpack.c.b16 %v894, %v894
      %v927 = vpack.c.b16 %v895, %v895
      %v928 = vpack.c.b16 %v896, %v896
      %v929 = vpack.c.b16 %v897, %v897
      %v930 = vpack.c.b16 %v898, %v898
      %v931 = vpack.c.b16 %v899, %v899
      %v932 = vpack.c.b16 %v900, %v900
      %v933 = vpack.c.b16 %v901, %v901
      %v934 = vpack.c.b16 %v902, %v902
      %v935 = vpack.c.b16 %v903, %v903
      %v936 = vpack.c.b16 %v904, %v904
      %v937 = vpack.c.b16 %v905, %v905
      %v938 = vpack.c.b16 %v906, %v906
      %v939 = vpack.c.b16 %v907, %v907
      %v940 = vpack.c.b16 %v908, %v908
      %v941 = vpack.c.b16 %v909, %v909
      %v942 = vpack.c.b16 %v910, %v910
      %v943 = vpack.c.b16 %v911, %v911
      %v944 = vpack.c.b16 %v912, %v912
      %v945 = vpack.c.b16 %v913, %v913
      %v946 = vpack.c.b16 %v914, %v914
      %v947 = vpack.c.b16 %v915, %v915
      %v948 = vpack.c.b16 %v916, %v916
      %981 = vst [vmem:[#allocation3] sm:$0xf] %v917
      %982 = vst [vmem:[#allocation3 + $0x24] sm:$0xf] %v918
      %983 = vst [vmem:[#allocation3 + $0x48] sm:$0xf] %v919
      %984 = vst [vmem:[#allocation3 + $0x6c] sm:$0xf] %v920
      %985 = vst [vmem:[#allocation3 + $0x90] sm:$0xf] %v921
      %986 = vst [vmem:[#allocation3 + $0xb4] sm:$0xf] %v922
      %987 = vst [vmem:[#allocation3 + $0xd8] sm:$0xf] %v923
      %988 = vst [vmem:[#allocation3 + $0xfc] sm:$0xf] %v924
      %989 = vst [vmem:[#allocation3 + $0x120] sm:$0xf] %v925
      %990 = vst [vmem:[#allocation3 + $0x144] sm:$0xf] %v926
      %991 = vst [vmem:[#allocation3 + $0x168] sm:$0xf] %v927
      %992 = vst [vmem:[#allocation3 + $0x18c] sm:$0xf] %v928
      %993 = vst [vmem:[#allocation3 + $0x1b0] sm:$0xf] %v929
      %994 = vst [vmem:[#allocation3 + $0x1d4] sm:$0xf] %v930
      %995 = vst [vmem:[#allocation3 + $0x1f8] sm:$0xf] %v931
      %996 = vst [vmem:[#allocation3 + $0x21c] sm:$0xf] %v932
      %997 = vst [vmem:[#allocation3 + $0x240] sm:$0xf] %v933
      %998 = vst [vmem:[#allocation3 + $0x264] sm:$0xf] %v934
      %999 = vst [vmem:[#allocation3 + $0x288] sm:$0xf] %v935
      %1000 = vst [vmem:[#allocation3 + $0x2ac] sm:$0xf] %v936
      %1001 = vst [vmem:[#allocation3 + $0x2d0] sm:$0xf] %v937
      %1002 = vst [vmem:[#allocation3 + $0x2f4] sm:$0xf] %v938
      %1003 = vst [vmem:[#allocation3 + $0x318] sm:$0xf] %v939
      %1004 = vst [vmem:[#allocation3 + $0x33c] sm:$0xf] %v940
      %1005 = vst [vmem:[#allocation3 + $0x360] sm:$0xf] %v941
      %1006 = vst [vmem:[#allocation3 + $0x384] sm:$0xf] %v942
      %1007 = vst [vmem:[#allocation3 + $0x3a8] sm:$0xf] %v943
      %1008 = vst [vmem:[#allocation3 + $0x3cc] sm:$0xf] %v944
      %1009 = vst [vmem:[#allocation3 + $0x3f0] sm:$0xf] %v945
      %1010 = vst [vmem:[#allocation3 + $0x414] sm:$0xf] %v946
      %1011 = vst [vmem:[#allocation3 + $0x438] sm:$0xf] %v947
      %1012 = vst [vmem:[#allocation3 + $0x45c] sm:$0xf] %v948
      %v1013 = vld [vmem:[#allocation2 + $0x8] sm:$0xff]
      %v1014 = vld [vmem:[#allocation2 + $0x10] sm:$0xff]
      %v1015 = vld [vmem:[#allocation2 + $0x28] sm:$0xff]
      %v1016 = vld [vmem:[#allocation2 + $0x30] sm:$0xff]
      %v1017 = vld [vmem:[#allocation2 + $0x48] sm:$0xff]
      %v1018 = vld [vmem:[#allocation2 + $0x50] sm:$0xff]
      %v1019 = vld [vmem:[#allocation2 + $0x68] sm:$0xff]
      %v1020 = vld [vmem:[#allocation2 + $0x70] sm:$0xff]
      %v1021 = vld [vmem:[#allocation2 + $0x88] sm:$0xff]
      %v1022 = vld [vmem:[#allocation2 + $0x90] sm:$0xff]
      %v1023 = vld [vmem:[#allocation2 + $0xa8] sm:$0xff]
      %v1024 = vld [vmem:[#allocation2 + $0xb0] sm:$0xff]
      %v1025 = vld [vmem:[#allocation2 + $0xc8] sm:$0xff]
      %v1026 = vld [vmem:[#allocation2 + $0xd0] sm:$0xff]
      %v1027 = vld [vmem:[#allocation2 + $0xe8] sm:$0xff]
      %v1028 = vld [vmem:[#allocation2 + $0xf0] sm:$0xff]
      %v1029 = vld [vmem:[#allocation2 + $0x108] sm:$0xff]
      %v1030 = vld [vmem:[#allocation2 + $0x110] sm:$0xff]
      %v1031 = vld [vmem:[#allocation2 + $0x128] sm:$0xff]
      %v1032 = vld [vmem:[#allocation2 + $0x130] sm:$0xff]
      %v1033 = vld [vmem:[#allocation2 + $0x148] sm:$0xff]
      %v1034 = vld [vmem:[#allocation2 + $0x150] sm:$0xff]
      %v1035 = vld [vmem:[#allocation2 + $0x168] sm:$0xff]
      %v1036 = vld [vmem:[#allocation2 + $0x170] sm:$0xff]
      %v1037 = vld [vmem:[#allocation2 + $0x188] sm:$0xff]
      %v1038 = vld [vmem:[#allocation2 + $0x190] sm:$0xff]
      %v1039 = vld [vmem:[#allocation2 + $0x1a8] sm:$0xff]
      %v1040 = vld [vmem:[#allocation2 + $0x1b0] sm:$0xff]
      %v1041 = vld [vmem:[#allocation2 + $0x1c8] sm:$0xff]
      %v1042 = vld [vmem:[#allocation2 + $0x1d0] sm:$0xff]
      %v1043 = vld [vmem:[#allocation2 + $0x1e8] sm:$0xff]
      %v1044 = vld [vmem:[#allocation2 + $0x1f0] sm:$0xff]
      %v1045 = vpack.c.bf16 %v1014, %v1013
      %v1046 = vpack.c.bf16 %v1016, %v1015
      %v1047 = vpack.c.bf16 %v1018, %v1017
      %v1048 = vpack.c.bf16 %v1020, %v1019
      %v1049 = vpack.c.bf16 %v1022, %v1021
      %v1050 = vpack.c.bf16 %v1024, %v1023
      %v1051 = vpack.c.bf16 %v1026, %v1025
      %v1052 = vpack.c.bf16 %v1028, %v1027
      %v1053 = vpack.c.bf16 %v1030, %v1029
      %v1054 = vpack.c.bf16 %v1032, %v1031
      %v1055 = vpack.c.bf16 %v1034, %v1033
      %v1056 = vpack.c.bf16 %v1036, %v1035
      %v1057 = vpack.c.bf16 %v1038, %v1037
      %v1058 = vpack.c.bf16 %v1040, %v1039
      %v1059 = vpack.c.bf16 %v1042, %v1041
      %v1060 = vpack.c.bf16 %v1044, %v1043
      %v1077 = vunpack.c.l.b16 %v1045
      %v1078 = vunpack.c.h.b16 %v1045
      %v1079 = vunpack.c.l.b16 %v1046
      %v1080 = vunpack.c.h.b16 %v1046
      %v1081 = vunpack.c.l.b16 %v1047
      %v1082 = vunpack.c.h.b16 %v1047
      %v1083 = vunpack.c.l.b16 %v1048
      %v1084 = vunpack.c.h.b16 %v1048
      %v1085 = vunpack.c.l.b16 %v1049
      %v1086 = vunpack.c.h.b16 %v1049
      %v1087 = vunpack.c.l.b16 %v1050
      %v1088 = vunpack.c.h.b16 %v1050
      %v1089 = vunpack.c.l.b16 %v1051
      %v1090 = vunpack.c.h.b16 %v1051
      %v1091 = vunpack.c.l.b16 %v1052
      %v1092 = vunpack.c.h.b16 %v1052
      %v1093 = vunpack.c.l.b16 %v1053
      %v1094 = vunpack.c.h.b16 %v1053
      %v1095 = vunpack.c.l.b16 %v1054
      %v1096 = vunpack.c.h.b16 %v1054
      %v1097 = vunpack.c.l.b16 %v1055
      %v1098 = vunpack.c.h.b16 %v1055
      %v1099 = vunpack.c.l.b16 %v1056
      %v1100 = vunpack.c.h.b16 %v1056
      %v1101 = vunpack.c.l.b16 %v1057
      %v1102 = vunpack.c.h.b16 %v1057
      %v1103 = vunpack.c.l.b16 %v1058
      %v1104 = vunpack.c.h.b16 %v1058
      %v1105 = vunpack.c.l.b16 %v1059
      %v1106 = vunpack.c.h.b16 %v1059
      %v1107 = vunpack.c.l.b16 %v1060
      %v1108 = vunpack.c.h.b16 %v1060
      %v1109 = vpack.c.b16 %v1077, %v1077
      %v1110 = vpack.c.b16 %v1078, %v1078
      %v1111 = vpack.c.b16 %v1079, %v1079
      %v1112 = vpack.c.b16 %v1080, %v1080
      %v1113 = vpack.c.b16 %v1081, %v1081
      %v1114 = vpack.c.b16 %v1082, %v1082
      %v1115 = vpack.c.b16 %v1083, %v1083
      %v1116 = vpack.c.b16 %v1084, %v1084
      %v1117 = vpack.c.b16 %v1085, %v1085
      %v1118 = vpack.c.b16 %v1086, %v1086
      %v1119 = vpack.c.b16 %v1087, %v1087
      %v1120 = vpack.c.b16 %v1088, %v1088
      %v1121 = vpack.c.b16 %v1089, %v1089
      %v1122 = vpack.c.b16 %v1090, %v1090
      %v1123 = vpack.c.b16 %v1091, %v1091
      %v1124 = vpack.c.b16 %v1092, %v1092
      %v1125 = vpack.c.b16 %v1093, %v1093
      %v1126 = vpack.c.b16 %v1094, %v1094
      %v1127 = vpack.c.b16 %v1095, %v1095
      %v1128 = vpack.c.b16 %v1096, %v1096
      %v1129 = vpack.c.b16 %v1097, %v1097
      %v1130 = vpack.c.b16 %v1098, %v1098
      %v1131 = vpack.c.b16 %v1099, %v1099
      %v1132 = vpack.c.b16 %v1100, %v1100
      %v1133 = vpack.c.b16 %v1101, %v1101
      %v1134 = vpack.c.b16 %v1102, %v1102
      %v1135 = vpack.c.b16 %v1103, %v1103
      %v1136 = vpack.c.b16 %v1104, %v1104
      %v1137 = vpack.c.b16 %v1105, %v1105
      %v1138 = vpack.c.b16 %v1106, %v1106
      %v1139 = vpack.c.b16 %v1107, %v1107
      %v1140 = vpack.c.b16 %v1108, %v1108
      %1173 = vst [vmem:[#allocation3 + $0x4] sm:$0xf] %v1109
      %1174 = vst [vmem:[#allocation3 + $0x28] sm:$0xf] %v1110
      %1175 = vst [vmem:[#allocation3 + $0x4c] sm:$0xf] %v1111
      %1176 = vst [vmem:[#allocation3 + $0x70] sm:$0xf] %v1112
      %1177 = vst [vmem:[#allocation3 + $0x94] sm:$0xf] %v1113
      %1178 = vst [vmem:[#allocation3 + $0xb8] sm:$0xf] %v1114
      %1179 = vst [vmem:[#allocation3 + $0xdc] sm:$0xf] %v1115
      %1180 = vst [vmem:[#allocation3 + $0x100] sm:$0xf] %v1116
      %1181 = vst [vmem:[#allocation3 + $0x124] sm:$0xf] %v1117
      %1182 = vst [vmem:[#allocation3 + $0x148] sm:$0xf] %v1118
      %1183 = vst [vmem:[#allocation3 + $0x16c] sm:$0xf] %v1119
      %1184 = vst [vmem:[#allocation3 + $0x190] sm:$0xf] %v1120
      %1185 = vst [vmem:[#allocation3 + $0x1b4] sm:$0xf] %v1121
      %1186 = vst [vmem:[#allocation3 + $0x1d8] sm:$0xf] %v1122
      %1187 = vst [vmem:[#allocation3 + $0x1fc] sm:$0xf] %v1123
      %1188 = vst [vmem:[#allocation3 + $0x220] sm:$0xf] %v1124
      %1189 = vst [vmem:[#allocation3 + $0x244] sm:$0xf] %v1125
      %1190 = vst [vmem:[#allocation3 + $0x268] sm:$0xf] %v1126
      %1191 = vst [vmem:[#allocation3 + $0x28c] sm:$0xf] %v1127
      %1192 = vst [vmem:[#allocation3 + $0x2b0] sm:$0xf] %v1128
      %1193 = vst [vmem:[#allocation3 + $0x2d4] sm:$0xf] %v1129
      %1194 = vst [vmem:[#allocation3 + $0x2f8] sm:$0xf] %v1130
      %1195 = vst [vmem:[#allocation3 + $0x31c] sm:$0xf] %v1131
      %1196 = vst [vmem:[#allocation3 + $0x340] sm:$0xf] %v1132
      %1197 = vst [vmem:[#allocation3 + $0x364] sm:$0xf] %v1133
      %1198 = vst [vmem:[#allocation3 + $0x388] sm:$0xf] %v1134
      %1199 = vst [vmem:[#allocation3 + $0x3ac] sm:$0xf] %v1135
      %1200 = vst [vmem:[#allocation3 + $0x3d0] sm:$0xf] %v1136
      %1201 = vst [vmem:[#allocation3 + $0x3f4] sm:$0xf] %v1137
      %1202 = vst [vmem:[#allocation3 + $0x418] sm:$0xf] %v1138
      %1203 = vst [vmem:[#allocation3 + $0x43c] sm:$0xf] %v1139
      %1204 = vst [vmem:[#allocation3 + $0x460] sm:$0xf] %v1140
      %v1205 = vld [vmem:[#allocation2 + $0x9] sm:$0xff]
      %v1206 = vld [vmem:[#allocation2 + $0x11] sm:$0xff]
      %v1207 = vld [vmem:[#allocation2 + $0x29] sm:$0xff]
      %v1208 = vld [vmem:[#allocation2 + $0x31] sm:$0xff]
      %v1209 = vld [vmem:[#allocation2 + $0x49] sm:$0xff]
      %v1210 = vld [vmem:[#allocation2 + $0x51] sm:$0xff]
      %v1211 = vld [vmem:[#allocation2 + $0x69] sm:$0xff]
      %v1212 = vld [vmem:[#allocation2 + $0x71] sm:$0xff]
      %v1213 = vld [vmem:[#allocation2 + $0x89] sm:$0xff]
      %v1214 = vld [vmem:[#allocation2 + $0x91] sm:$0xff]
      %v1215 = vld [vmem:[#allocation2 + $0xa9] sm:$0xff]
      %v1216 = vld [vmem:[#allocation2 + $0xb1] sm:$0xff]
      %v1217 = vld [vmem:[#allocation2 + $0xc9] sm:$0xff]
      %v1218 = vld [vmem:[#allocation2 + $0xd1] sm:$0xff]
      %v1219 = vld [vmem:[#allocation2 + $0xe9] sm:$0xff]
      %v1220 = vld [vmem:[#allocation2 + $0xf1] sm:$0xff]
      %v1221 = vld [vmem:[#allocation2 + $0x109] sm:$0xff]
      %v1222 = vld [vmem:[#allocation2 + $0x111] sm:$0xff]
      %v1223 = vld [vmem:[#allocation2 + $0x129] sm:$0xff]
      %v1224 = vld [vmem:[#allocation2 + $0x131] sm:$0xff]
      %v1225 = vld [vmem:[#allocation2 + $0x149] sm:$0xff]
      %v1226 = vld [vmem:[#allocation2 + $0x151] sm:$0xff]
      %v1227 = vld [vmem:[#allocation2 + $0x169] sm:$0xff]
      %v1228 = vld [vmem:[#allocation2 + $0x171] sm:$0xff]
      %v1229 = vld [vmem:[#allocation2 + $0x189] sm:$0xff]
      %v1230 = vld [vmem:[#allocation2 + $0x191] sm:$0xff]
      %v1231 = vld [vmem:[#allocation2 + $0x1a9] sm:$0xff]
      %v1232 = vld [vmem:[#allocation2 + $0x1b1] sm:$0xff]
      %v1233 = vld [vmem:[#allocation2 + $0x1c9] sm:$0xff]
      %v1234 = vld [vmem:[#allocation2 + $0x1d1] sm:$0xff]
      %v1235 = vld [vmem:[#allocation2 + $0x1e9] sm:$0xff]
      %v1236 = vld [vmem:[#allocation2 + $0x1f1] sm:$0xff]
      %v1237 = vpack.c.bf16 %v1206, %v1205
      %v1238 = vpack.c.bf16 %v1208, %v1207
      %v1239 = vpack.c.bf16 %v1210, %v1209
      %v1240 = vpack.c.bf16 %v1212, %v1211
      %v1241 = vpack.c.bf16 %v1214, %v1213
      %v1242 = vpack.c.bf16 %v1216, %v1215
      %v1243 = vpack.c.bf16 %v1218, %v1217
      %v1244 = vpack.c.bf16 %v1220, %v1219
      %v1245 = vpack.c.bf16 %v1222, %v1221
      %v1246 = vpack.c.bf16 %v1224, %v1223
      %v1247 = vpack.c.bf16 %v1226, %v1225
      %v1248 = vpack.c.bf16 %v1228, %v1227
      %v1249 = vpack.c.bf16 %v1230, %v1229
      %v1250 = vpack.c.bf16 %v1232, %v1231
      %v1251 = vpack.c.bf16 %v1234, %v1233
      %v1252 = vpack.c.bf16 %v1236, %v1235
      %v1269 = vunpack.c.l.b16 %v1237
      %v1270 = vunpack.c.h.b16 %v1237
      %v1271 = vunpack.c.l.b16 %v1238
      %v1272 = vunpack.c.h.b16 %v1238
      %v1273 = vunpack.c.l.b16 %v1239
      %v1274 = vunpack.c.h.b16 %v1239
      %v1275 = vunpack.c.l.b16 %v1240
      %v1276 = vunpack.c.h.b16 %v1240
      %v1277 = vunpack.c.l.b16 %v1241
      %v1278 = vunpack.c.h.b16 %v1241
      %v1279 = vunpack.c.l.b16 %v1242
      %v1280 = vunpack.c.h.b16 %v1242
      %v1281 = vunpack.c.l.b16 %v1243
      %v1282 = vunpack.c.h.b16 %v1243
      %v1283 = vunpack.c.l.b16 %v1244
      %v1284 = vunpack.c.h.b16 %v1244
      %v1285 = vunpack.c.l.b16 %v1245
      %v1286 = vunpack.c.h.b16 %v1245
      %v1287 = vunpack.c.l.b16 %v1246
      %v1288 = vunpack.c.h.b16 %v1246
      %v1289 = vunpack.c.l.b16 %v1247
      %v1290 = vunpack.c.h.b16 %v1247
      %v1291 = vunpack.c.l.b16 %v1248
      %v1292 = vunpack.c.h.b16 %v1248
      %v1293 = vunpack.c.l.b16 %v1249
      %v1294 = vunpack.c.h.b16 %v1249
      %v1295 = vunpack.c.l.b16 %v1250
      %v1296 = vunpack.c.h.b16 %v1250
      %v1297 = vunpack.c.l.b16 %v1251
      %v1298 = vunpack.c.h.b16 %v1251
      %v1299 = vunpack.c.l.b16 %v1252
      %v1300 = vunpack.c.h.b16 %v1252
      %v1301 = vpack.c.b16 %v1269, %v1269
      %v1302 = vpack.c.b16 %v1270, %v1270
      %v1303 = vpack.c.b16 %v1271, %v1271
      %v1304 = vpack.c.b16 %v1272, %v1272
      %v1305 = vpack.c.b16 %v1273, %v1273
      %v1306 = vpack.c.b16 %v1274, %v1274
      %v1307 = vpack.c.b16 %v1275, %v1275
      %v1308 = vpack.c.b16 %v1276, %v1276
      %v1309 = vpack.c.b16 %v1277, %v1277
      %v1310 = vpack.c.b16 %v1278, %v1278
      %v1311 = vpack.c.b16 %v1279, %v1279
      %v1312 = vpack.c.b16 %v1280, %v1280
      %v1313 = vpack.c.b16 %v1281, %v1281
      %v1314 = vpack.c.b16 %v1282, %v1282
      %v1315 = vpack.c.b16 %v1283, %v1283
      %v1316 = vpack.c.b16 %v1284, %v1284
      %v1317 = vpack.c.b16 %v1285, %v1285
      %v1318 = vpack.c.b16 %v1286, %v1286
      %v1319 = vpack.c.b16 %v1287, %v1287
      %v1320 = vpack.c.b16 %v1288, %v1288
      %v1321 = vpack.c.b16 %v1289, %v1289
      %v1322 = vpack.c.b16 %v1290, %v1290
      %v1323 = vpack.c.b16 %v1291, %v1291
      %v1324 = vpack.c.b16 %v1292, %v1292
      %v1325 = vpack.c.b16 %v1293, %v1293
      %v1326 = vpack.c.b16 %v1294, %v1294
      %v1327 = vpack.c.b16 %v1295, %v1295
      %v1328 = vpack.c.b16 %v1296, %v1296
      %v1329 = vpack.c.b16 %v1297, %v1297
      %v1330 = vpack.c.b16 %v1298, %v1298
      %v1331 = vpack.c.b16 %v1299, %v1299
      %v1332 = vpack.c.b16 %v1300, %v1300
      %1365 = vst [vmem:[#allocation3 + $0x8] sm:$0xf] %v1301
      %1366 = vst [vmem:[#allocation3 + $0x2c] sm:$0xf] %v1302
      %1367 = vst [vmem:[#allocation3 + $0x50] sm:$0xf] %v1303
      %1368 = vst [vmem:[#allocation3 + $0x74] sm:$0xf] %v1304
      %1369 = vst [vmem:[#allocation3 + $0x98] sm:$0xf] %v1305
      %1370 = vst [vmem:[#allocation3 + $0xbc] sm:$0xf] %v1306
      %1371 = vst [vmem:[#allocation3 + $0xe0] sm:$0xf] %v1307
      %1372 = vst [vmem:[#allocation3 + $0x104] sm:$0xf] %v1308
      %1373 = vst [vmem:[#allocation3 + $0x128] sm:$0xf] %v1309
      %1374 = vst [vmem:[#allocation3 + $0x14c] sm:$0xf] %v1310
      %1375 = vst [vmem:[#allocation3 + $0x170] sm:$0xf] %v1311
      %1376 = vst [vmem:[#allocation3 + $0x194] sm:$0xf] %v1312
      %1377 = vst [vmem:[#allocation3 + $0x1b8] sm:$0xf] %v1313
      %1378 = vst [vmem:[#allocation3 + $0x1dc] sm:$0xf] %v1314
      %1379 = vst [vmem:[#allocation3 + $0x200] sm:$0xf] %v1315
      %1380 = vst [vmem:[#allocation3 + $0x224] sm:$0xf] %v1316
      %1381 = vst [vmem:[#allocation3 + $0x248] sm:$0xf] %v1317
      %1382 = vst [vmem:[#allocation3 + $0x26c] sm:$0xf] %v1318
      %1383 = vst [vmem:[#allocation3 + $0x290] sm:$0xf] %v1319
      %1384 = vst [vmem:[#allocation3 + $0x2b4] sm:$0xf] %v1320
      %1385 = vst [vmem:[#allocation3 + $0x2d8] sm:$0xf] %v1321
      %1386 = vst [vmem:[#allocation3 + $0x2fc] sm:$0xf] %v1322
      %1387 = vst [vmem:[#allocation3 + $0x320] sm:$0xf] %v1323
      %1388 = vst [vmem:[#allocation3 + $0x344] sm:$0xf] %v1324
      %1389 = vst [vmem:[#allocation3 + $0x368] sm:$0xf] %v1325
      %1390 = vst [vmem:[#allocation3 + $0x38c] sm:$0xf] %v1326
      %1391 = vst [vmem:[#allocation3 + $0x3b0] sm:$0xf] %v1327
      %1392 = vst [vmem:[#allocation3 + $0x3d4] sm:$0xf] %v1328
      %1393 = vst [vmem:[#allocation3 + $0x3f8] sm:$0xf] %v1329
      %1394 = vst [vmem:[#allocation3 + $0x41c] sm:$0xf] %v1330
      %1395 = vst [vmem:[#allocation3 + $0x440] sm:$0xf] %v1331
      %1396 = vst [vmem:[#allocation3 + $0x464] sm:$0xf] %v1332
      %v1397 = vld [vmem:[%s788 + $0x7] sm:$0xff]
      %v1398 = vld [vmem:[%s788 + $0xf] sm:$0xff]
      %v1399 = vld [vmem:[%s788 + $0x27] sm:$0xff]
      %v1400 = vld [vmem:[%s788 + $0x2f] sm:$0xff]
      %v1401 = vld [vmem:[%s788 + $0x47] sm:$0xff]
      %v1402 = vld [vmem:[%s788 + $0x4f] sm:$0xff]
      %v1403 = vld [vmem:[%s788 + $0x67] sm:$0xff]
      %v1404 = vld [vmem:[%s788 + $0x6f] sm:$0xff]
      %v1405 = vld [vmem:[%s788 + $0x87] sm:$0xff]
      %v1406 = vld [vmem:[%s788 + $0x8f] sm:$0xff]
      %v1407 = vld [vmem:[%s788 + $0xa7] sm:$0xff]
      %v1408 = vld [vmem:[%s788 + $0xaf] sm:$0xff]
      %v1409 = vld [vmem:[%s788 + $0xc7] sm:$0xff]
      %v1410 = vld [vmem:[%s788 + $0xcf] sm:$0xff]
      %v1411 = vld [vmem:[%s788 + $0xe7] sm:$0xff]
      %v1412 = vld [vmem:[%s788 + $0xef] sm:$0xff]
      %v1413 = vld [vmem:[%s788 + $0x107] sm:$0xff]
      %v1414 = vld [vmem:[%s788 + $0x10f] sm:$0xff]
      %v1415 = vld [vmem:[%s788 + $0x127] sm:$0xff]
      %v1416 = vld [vmem:[%s788 + $0x12f] sm:$0xff]
      %v1417 = vld [vmem:[%s788 + $0x147] sm:$0xff]
      %v1418 = vld [vmem:[%s788 + $0x14f] sm:$0xff]
      %v1419 = vld [vmem:[%s788 + $0x167] sm:$0xff]
      %v1420 = vld [vmem:[%s788 + $0x16f] sm:$0xff]
      %v1421 = vld [vmem:[%s788 + $0x187] sm:$0xff]
      %v1422 = vld [vmem:[%s788 + $0x18f] sm:$0xff]
      %v1423 = vld [vmem:[%s788 + $0x1a7] sm:$0xff]
      %v1424 = vld [vmem:[%s788 + $0x1af] sm:$0xff]
      %v1425 = vld [vmem:[%s788 + $0x1c7] sm:$0xff]
      %v1426 = vld [vmem:[%s788 + $0x1cf] sm:$0xff]
      %v1427 = vld [vmem:[%s788 + $0x1e7] sm:$0xff]
      %v1428 = vld [vmem:[%s788 + $0x1ef] sm:$0xff]
      %v1429 = vpack.c.bf16 %v1398, %v1397
      %v1430 = vpack.c.bf16 %v1400, %v1399
      %v1431 = vpack.c.bf16 %v1402, %v1401
      %v1432 = vpack.c.bf16 %v1404, %v1403
      %v1433 = vpack.c.bf16 %v1406, %v1405
      %v1434 = vpack.c.bf16 %v1408, %v1407
      %v1435 = vpack.c.bf16 %v1410, %v1409
      %v1436 = vpack.c.bf16 %v1412, %v1411
      %v1437 = vpack.c.bf16 %v1414, %v1413
      %v1438 = vpack.c.bf16 %v1416, %v1415
      %v1439 = vpack.c.bf16 %v1418, %v1417
      %v1440 = vpack.c.bf16 %v1420, %v1419
      %v1441 = vpack.c.bf16 %v1422, %v1421
      %v1442 = vpack.c.bf16 %v1424, %v1423
      %v1443 = vpack.c.bf16 %v1426, %v1425
      %v1444 = vpack.c.bf16 %v1428, %v1427
      %v1461 = vunpack.c.l.b16 %v1429
      %v1462 = vunpack.c.h.b16 %v1429
      %v1463 = vunpack.c.l.b16 %v1430
      %v1464 = vunpack.c.h.b16 %v1430
      %v1465 = vunpack.c.l.b16 %v1431
      %v1466 = vunpack.c.h.b16 %v1431
      %v1467 = vunpack.c.l.b16 %v1432
      %v1468 = vunpack.c.h.b16 %v1432
      %v1469 = vunpack.c.l.b16 %v1433
      %v1470 = vunpack.c.h.b16 %v1433
      %v1471 = vunpack.c.l.b16 %v1434
      %v1472 = vunpack.c.h.b16 %v1434
      %v1473 = vunpack.c.l.b16 %v1435
      %v1474 = vunpack.c.h.b16 %v1435
      %v1475 = vunpack.c.l.b16 %v1436
      %v1476 = vunpack.c.h.b16 %v1436
      %v1477 = vunpack.c.l.b16 %v1437
      %v1478 = vunpack.c.h.b16 %v1437
      %v1479 = vunpack.c.l.b16 %v1438
      %v1480 = vunpack.c.h.b16 %v1438
      %v1481 = vunpack.c.l.b16 %v1439
      %v1482 = vunpack.c.h.b16 %v1439
      %v1483 = vunpack.c.l.b16 %v1440
      %v1484 = vunpack.c.h.b16 %v1440
      %v1485 = vunpack.c.l.b16 %v1441
      %v1486 = vunpack.c.h.b16 %v1441
      %v1487 = vunpack.c.l.b16 %v1442
      %v1488 = vunpack.c.h.b16 %v1442
      %v1489 = vunpack.c.l.b16 %v1443
      %v1490 = vunpack.c.h.b16 %v1443
      %v1491 = vunpack.c.l.b16 %v1444
      %v1492 = vunpack.c.h.b16 %v1444
      %v1493 = vpack.c.b16 %v1461, %v1461
      %v1494 = vpack.c.b16 %v1462, %v1462
      %v1495 = vpack.c.b16 %v1463, %v1463
      %v1496 = vpack.c.b16 %v1464, %v1464
      %v1497 = vpack.c.b16 %v1465, %v1465
      %v1498 = vpack.c.b16 %v1466, %v1466
      %v1499 = vpack.c.b16 %v1467, %v1467
      %v1500 = vpack.c.b16 %v1468, %v1468
      %v1501 = vpack.c.b16 %v1469, %v1469
      %v1502 = vpack.c.b16 %v1470, %v1470
      %v1503 = vpack.c.b16 %v1471, %v1471
      %v1504 = vpack.c.b16 %v1472, %v1472
      %v1505 = vpack.c.b16 %v1473, %v1473
      %v1506 = vpack.c.b16 %v1474, %v1474
      %v1507 = vpack.c.b16 %v1475, %v1475
      %v1508 = vpack.c.b16 %v1476, %v1476
      %v1509 = vpack.c.b16 %v1477, %v1477
      %v1510 = vpack.c.b16 %v1478, %v1478
      %v1511 = vpack.c.b16 %v1479, %v1479
      %v1512 = vpack.c.b16 %v1480, %v1480
      %v1513 = vpack.c.b16 %v1481, %v1481
      %v1514 = vpack.c.b16 %v1482, %v1482
      %v1515 = vpack.c.b16 %v1483, %v1483
      %v1516 = vpack.c.b16 %v1484, %v1484
      %v1517 = vpack.c.b16 %v1485, %v1485
      %v1518 = vpack.c.b16 %v1486, %v1486
      %v1519 = vpack.c.b16 %v1487, %v1487
      %v1520 = vpack.c.b16 %v1488, %v1488
      %v1521 = vpack.c.b16 %v1489, %v1489
      %v1522 = vpack.c.b16 %v1490, %v1490
      %v1523 = vpack.c.b16 %v1491, %v1491
      %v1524 = vpack.c.b16 %v1492, %v1492
      %1557 = vst [vmem:[#allocation3 + $0xc] sm:$0xf] %v1493
      %1558 = vst [vmem:[#allocation3 + $0x30] sm:$0xf] %v1494
      %1559 = vst [vmem:[#allocation3 + $0x54] sm:$0xf] %v1495
      %1560 = vst [vmem:[#allocation3 + $0x78] sm:$0xf] %v1496
      %1561 = vst [vmem:[#allocation3 + $0x9c] sm:$0xf] %v1497
      %1562 = vst [vmem:[#allocation3 + $0xc0] sm:$0xf] %v1498
      %1563 = vst [vmem:[#allocation3 + $0xe4] sm:$0xf] %v1499
      %1564 = vst [vmem:[#allocation3 + $0x108] sm:$0xf] %v1500
      %1565 = vst [vmem:[#allocation3 + $0x12c] sm:$0xf] %v1501
      %1566 = vst [vmem:[#allocation3 + $0x150] sm:$0xf] %v1502
      %1567 = vst [vmem:[#allocation3 + $0x174] sm:$0xf] %v1503
      %1568 = vst [vmem:[#allocation3 + $0x198] sm:$0xf] %v1504
      %1569 = vst [vmem:[#allocation3 + $0x1bc] sm:$0xf] %v1505
      %1570 = vst [vmem:[#allocation3 + $0x1e0] sm:$0xf] %v1506
      %1571 = vst [vmem:[#allocation3 + $0x204] sm:$0xf] %v1507
      %1572 = vst [vmem:[#allocation3 + $0x228] sm:$0xf] %v1508
      %1573 = vst [vmem:[#allocation3 + $0x24c] sm:$0xf] %v1509
      %1574 = vst [vmem:[#allocation3 + $0x270] sm:$0xf] %v1510
      %1575 = vst [vmem:[#allocation3 + $0x294] sm:$0xf] %v1511
      %1576 = vst [vmem:[#allocation3 + $0x2b8] sm:$0xf] %v1512
      %1577 = vst [vmem:[#allocation3 + $0x2dc] sm:$0xf] %v1513
      %1578 = vst [vmem:[#allocation3 + $0x300] sm:$0xf] %v1514
      %1579 = vst [vmem:[#allocation3 + $0x324] sm:$0xf] %v1515
      %1580 = vst [vmem:[#allocation3 + $0x348] sm:$0xf] %v1516
      %1581 = vst [vmem:[#allocation3 + $0x36c] sm:$0xf] %v1517
      %1582 = vst [vmem:[#allocation3 + $0x390] sm:$0xf] %v1518
      %1583 = vst [vmem:[#allocation3 + $0x3b4] sm:$0xf] %v1519
      %1584 = vst [vmem:[#allocation3 + $0x3d8] sm:$0xf] %v1520
      %1585 = vst [vmem:[#allocation3 + $0x3fc] sm:$0xf] %v1521
      %1586 = vst [vmem:[#allocation3 + $0x420] sm:$0xf] %v1522
      %1587 = vst [vmem:[#allocation3 + $0x444] sm:$0xf] %v1523
      %1588 = vst [vmem:[#allocation3 + $0x468] sm:$0xf] %v1524
      %v1589 = vld [vmem:[%s788 + $0x8] sm:$0xff]
      %v1590 = vld [vmem:[%s788 + $0x10] sm:$0xff]
      %v1591 = vld [vmem:[%s788 + $0x28] sm:$0xff]
      %v1592 = vld [vmem:[%s788 + $0x30] sm:$0xff]
      %v1593 = vld [vmem:[%s788 + $0x48] sm:$0xff]
      %v1594 = vld [vmem:[%s788 + $0x50] sm:$0xff]
      %v1595 = vld [vmem:[%s788 + $0x68] sm:$0xff]
      %v1596 = vld [vmem:[%s788 + $0x70] sm:$0xff]
      %v1597 = vld [vmem:[%s788 + $0x88] sm:$0xff]
      %v1598 = vld [vmem:[%s788 + $0x90] sm:$0xff]
      %v1599 = vld [vmem:[%s788 + $0xa8] sm:$0xff]
      %v1600 = vld [vmem:[%s788 + $0xb0] sm:$0xff]
      %v1601 = vld [vmem:[%s788 + $0xc8] sm:$0xff]
      %v1602 = vld [vmem:[%s788 + $0xd0] sm:$0xff]
      %v1603 = vld [vmem:[%s788 + $0xe8] sm:$0xff]
      %v1604 = vld [vmem:[%s788 + $0xf0] sm:$0xff]
      %v1605 = vld [vmem:[%s788 + $0x108] sm:$0xff]
      %v1606 = vld [vmem:[%s788 + $0x110] sm:$0xff]
      %v1607 = vld [vmem:[%s788 + $0x128] sm:$0xff]
      %v1608 = vld [vmem:[%s788 + $0x130] sm:$0xff]
      %v1609 = vld [vmem:[%s788 + $0x148] sm:$0xff]
      %v1610 = vld [vmem:[%s788 + $0x150] sm:$0xff]
      %v1611 = vld [vmem:[%s788 + $0x168] sm:$0xff]
      %v1612 = vld [vmem:[%s788 + $0x170] sm:$0xff]
      %v1613 = vld [vmem:[%s788 + $0x188] sm:$0xff]
      %v1614 = vld [vmem:[%s788 + $0x190] sm:$0xff]
      %v1615 = vld [vmem:[%s788 + $0x1a8] sm:$0xff]
      %v1616 = vld [vmem:[%s788 + $0x1b0] sm:$0xff]
      %v1617 = vld [vmem:[%s788 + $0x1c8] sm:$0xff]
      %v1618 = vld [vmem:[%s788 + $0x1d0] sm:$0xff]
      %v1619 = vld [vmem:[%s788 + $0x1e8] sm:$0xff]
      %v1620 = vld [vmem:[%s788 + $0x1f0] sm:$0xff]
      %v1621 = vpack.c.bf16 %v1590, %v1589
      %v1622 = vpack.c.bf16 %v1592, %v1591
      %v1623 = vpack.c.bf16 %v1594, %v1593
      %v1624 = vpack.c.bf16 %v1596, %v1595
      %v1625 = vpack.c.bf16 %v1598, %v1597
      %v1626 = vpack.c.bf16 %v1600, %v1599
      %v1627 = vpack.c.bf16 %v1602, %v1601
      %v1628 = vpack.c.bf16 %v1604, %v1603
      %v1629 = vpack.c.bf16 %v1606, %v1605
      %v1630 = vpack.c.bf16 %v1608, %v1607
      %v1631 = vpack.c.bf16 %v1610, %v1609
      %v1632 = vpack.c.bf16 %v1612, %v1611
      %v1633 = vpack.c.bf16 %v1614, %v1613
      %v1634 = vpack.c.bf16 %v1616, %v1615
      %v1635 = vpack.c.bf16 %v1618, %v1617
      %v1636 = vpack.c.bf16 %v1620, %v1619
      %v1653 = vunpack.c.l.b16 %v1621
      %v1654 = vunpack.c.h.b16 %v1621
      %v1655 = vunpack.c.l.b16 %v1622
      %v1656 = vunpack.c.h.b16 %v1622
      %v1657 = vunpack.c.l.b16 %v1623
      %v1658 = vunpack.c.h.b16 %v1623
      %v1659 = vunpack.c.l.b16 %v1624
      %v1660 = vunpack.c.h.b16 %v1624
      %v1661 = vunpack.c.l.b16 %v1625
      %v1662 = vunpack.c.h.b16 %v1625
      %v1663 = vunpack.c.l.b16 %v1626
      %v1664 = vunpack.c.h.b16 %v1626
      %v1665 = vunpack.c.l.b16 %v1627
      %v1666 = vunpack.c.h.b16 %v1627
      %v1667 = vunpack.c.l.b16 %v1628
      %v1668 = vunpack.c.h.b16 %v1628
      %v1669 = vunpack.c.l.b16 %v1629
      %v1670 = vunpack.c.h.b16 %v1629
      %v1671 = vunpack.c.l.b16 %v1630
      %v1672 = vunpack.c.h.b16 %v1630
      %v1673 = vunpack.c.l.b16 %v1631
      %v1674 = vunpack.c.h.b16 %v1631
      %v1675 = vunpack.c.l.b16 %v1632
      %v1676 = vunpack.c.h.b16 %v1632
      %v1677 = vunpack.c.l.b16 %v1633
      %v1678 = vunpack.c.h.b16 %v1633
      %v1679 = vunpack.c.l.b16 %v1634
      %v1680 = vunpack.c.h.b16 %v1634
      %v1681 = vunpack.c.l.b16 %v1635
      %v1682 = vunpack.c.h.b16 %v1635
      %v1683 = vunpack.c.l.b16 %v1636
      %v1684 = vunpack.c.h.b16 %v1636
      %v1685 = vpack.c.b16 %v1653, %v1653
      %v1686 = vpack.c.b16 %v1654, %v1654
      %v1687 = vpack.c.b16 %v1655, %v1655
      %v1688 = vpack.c.b16 %v1656, %v1656
      %v1689 = vpack.c.b16 %v1657, %v1657
      %v1690 = vpack.c.b16 %v1658, %v1658
      %v1691 = vpack.c.b16 %v1659, %v1659
      %v1692 = vpack.c.b16 %v1660, %v1660
      %v1693 = vpack.c.b16 %v1661, %v1661
      %v1694 = vpack.c.b16 %v1662, %v1662
      %v1695 = vpack.c.b16 %v1663, %v1663
      %v1696 = vpack.c.b16 %v1664, %v1664
      %v1697 = vpack.c.b16 %v1665, %v1665
      %v1698 = vpack.c.b16 %v1666, %v1666
      %v1699 = vpack.c.b16 %v1667, %v1667
      %v1700 = vpack.c.b16 %v1668, %v1668
      %v1701 = vpack.c.b16 %v1669, %v1669
      %v1702 = vpack.c.b16 %v1670, %v1670
      %v1703 = vpack.c.b16 %v1671, %v1671
      %v1704 = vpack.c.b16 %v1672, %v1672
      %v1705 = vpack.c.b16 %v1673, %v1673
      %v1706 = vpack.c.b16 %v1674, %v1674
      %v1707 = vpack.c.b16 %v1675, %v1675
      %v1708 = vpack.c.b16 %v1676, %v1676
      %v1709 = vpack.c.b16 %v1677, %v1677
      %v1710 = vpack.c.b16 %v1678, %v1678
      %v1711 = vpack.c.b16 %v1679, %v1679
      %v1712 = vpack.c.b16 %v1680, %v1680
      %v1713 = vpack.c.b16 %v1681, %v1681
      %v1714 = vpack.c.b16 %v1682, %v1682
      %v1715 = vpack.c.b16 %v1683, %v1683
      %v1716 = vpack.c.b16 %v1684, %v1684
      %1749 = vst [vmem:[#allocation3 + $0x10] sm:$0xf] %v1685
      %1750 = vst [vmem:[#allocation3 + $0x34] sm:$0xf] %v1686
      %1751 = vst [vmem:[#allocation3 + $0x58] sm:$0xf] %v1687
      %1752 = vst [vmem:[#allocation3 + $0x7c] sm:$0xf] %v1688
      %1753 = vst [vmem:[#allocation3 + $0xa0] sm:$0xf] %v1689
      %1754 = vst [vmem:[#allocation3 + $0xc4] sm:$0xf] %v1690
      %1755 = vst [vmem:[#allocation3 + $0xe8] sm:$0xf] %v1691
      %1756 = vst [vmem:[#allocation3 + $0x10c] sm:$0xf] %v1692
      %1757 = vst [vmem:[#allocation3 + $0x130] sm:$0xf] %v1693
      %1758 = vst [vmem:[#allocation3 + $0x154] sm:$0xf] %v1694
      %1759 = vst [vmem:[#allocation3 + $0x178] sm:$0xf] %v1695
      %1760 = vst [vmem:[#allocation3 + $0x19c] sm:$0xf] %v1696
      %1761 = vst [vmem:[#allocation3 + $0x1c0] sm:$0xf] %v1697
      %1762 = vst [vmem:[#allocation3 + $0x1e4] sm:$0xf] %v1698
      %1763 = vst [vmem:[#allocation3 + $0x208] sm:$0xf] %v1699
      %1764 = vst [vmem:[#allocation3 + $0x22c] sm:$0xf] %v1700
      %1765 = vst [vmem:[#allocation3 + $0x250] sm:$0xf] %v1701
      %1766 = vst [vmem:[#allocation3 + $0x274] sm:$0xf] %v1702
      %1767 = vst [vmem:[#allocation3 + $0x298] sm:$0xf] %v1703
      %1768 = vst [vmem:[#allocation3 + $0x2bc] sm:$0xf] %v1704
      %1769 = vst [vmem:[#allocation3 + $0x2e0] sm:$0xf] %v1705
      %1770 = vst [vmem:[#allocation3 + $0x304] sm:$0xf] %v1706
      %1771 = vst [vmem:[#allocation3 + $0x328] sm:$0xf] %v1707
      %1772 = vst [vmem:[#allocation3 + $0x34c] sm:$0xf] %v1708
      %1773 = vst [vmem:[#allocation3 + $0x370] sm:$0xf] %v1709
      %1774 = vst [vmem:[#allocation3 + $0x394] sm:$0xf] %v1710
      %1775 = vst [vmem:[#allocation3 + $0x3b8] sm:$0xf] %v1711
      %1776 = vst [vmem:[#allocation3 + $0x3dc] sm:$0xf] %v1712
      %1777 = vst [vmem:[#allocation3 + $0x400] sm:$0xf] %v1713
      %1778 = vst [vmem:[#allocation3 + $0x424] sm:$0xf] %v1714
      %1779 = vst [vmem:[#allocation3 + $0x448] sm:$0xf] %v1715
      %1780 = vst [vmem:[#allocation3 + $0x46c] sm:$0xf] %v1716
      %v1781 = vld [vmem:[%s788 + $0x9] sm:$0xff]
      %v1782 = vld [vmem:[%s788 + $0x11] sm:$0xff]
      %v1783 = vld [vmem:[%s788 + $0x29] sm:$0xff]
      %v1784 = vld [vmem:[%s788 + $0x31] sm:$0xff]
      %v1785 = vld [vmem:[%s788 + $0x49] sm:$0xff]
      %v1786 = vld [vmem:[%s788 + $0x51] sm:$0xff]
      %v1787 = vld [vmem:[%s788 + $0x69] sm:$0xff]
      %v1788 = vld [vmem:[%s788 + $0x71] sm:$0xff]
      %v1789 = vld [vmem:[%s788 + $0x89] sm:$0xff]
      %v1790 = vld [vmem:[%s788 + $0x91] sm:$0xff]
      %v1791 = vld [vmem:[%s788 + $0xa9] sm:$0xff]
      %v1792 = vld [vmem:[%s788 + $0xb1] sm:$0xff]
      %v1793 = vld [vmem:[%s788 + $0xc9] sm:$0xff]
      %v1794 = vld [vmem:[%s788 + $0xd1] sm:$0xff]
      %v1795 = vld [vmem:[%s788 + $0xe9] sm:$0xff]
      %v1796 = vld [vmem:[%s788 + $0xf1] sm:$0xff]
      %v1797 = vld [vmem:[%s788 + $0x109] sm:$0xff]
      %v1798 = vld [vmem:[%s788 + $0x111] sm:$0xff]
      %v1799 = vld [vmem:[%s788 + $0x129] sm:$0xff]
      %v1800 = vld [vmem:[%s788 + $0x131] sm:$0xff]
      %v1801 = vld [vmem:[%s788 + $0x149] sm:$0xff]
      %v1802 = vld [vmem:[%s788 + $0x151] sm:$0xff]
      %v1803 = vld [vmem:[%s788 + $0x169] sm:$0xff]
      %v1804 = vld [vmem:[%s788 + $0x171] sm:$0xff]
      %v1805 = vld [vmem:[%s788 + $0x189] sm:$0xff]
      %v1806 = vld [vmem:[%s788 + $0x191] sm:$0xff]
      %v1807 = vld [vmem:[%s788 + $0x1a9] sm:$0xff]
      %v1808 = vld [vmem:[%s788 + $0x1b1] sm:$0xff]
      %v1809 = vld [vmem:[%s788 + $0x1c9] sm:$0xff]
      %v1810 = vld [vmem:[%s788 + $0x1d1] sm:$0xff]
      %v1811 = vld [vmem:[%s788 + $0x1e9] sm:$0xff]
      %v1812 = vld [vmem:[%s788 + $0x1f1] sm:$0xff]
      %v1813 = vpack.c.bf16 %v1782, %v1781
      %v1814 = vpack.c.bf16 %v1784, %v1783
      %v1815 = vpack.c.bf16 %v1786, %v1785
      %v1816 = vpack.c.bf16 %v1788, %v1787
      %v1817 = vpack.c.bf16 %v1790, %v1789
      %v1818 = vpack.c.bf16 %v1792, %v1791
      %v1819 = vpack.c.bf16 %v1794, %v1793
      %v1820 = vpack.c.bf16 %v1796, %v1795
      %v1821 = vpack.c.bf16 %v1798, %v1797
      %v1822 = vpack.c.bf16 %v1800, %v1799
      %v1823 = vpack.c.bf16 %v1802, %v1801
      %v1824 = vpack.c.bf16 %v1804, %v1803
      %v1825 = vpack.c.bf16 %v1806, %v1805
      %v1826 = vpack.c.bf16 %v1808, %v1807
      %v1827 = vpack.c.bf16 %v1810, %v1809
      %v1828 = vpack.c.bf16 %v1812, %v1811
      %v1845 = vunpack.c.l.b16 %v1813
      %v1846 = vunpack.c.h.b16 %v1813
      %v1847 = vunpack.c.l.b16 %v1814
      %v1848 = vunpack.c.h.b16 %v1814
      %v1849 = vunpack.c.l.b16 %v1815
      %v1850 = vunpack.c.h.b16 %v1815
      %v1851 = vunpack.c.l.b16 %v1816
      %v1852 = vunpack.c.h.b16 %v1816
      %v1853 = vunpack.c.l.b16 %v1817
      %v1854 = vunpack.c.h.b16 %v1817
      %v1855 = vunpack.c.l.b16 %v1818
      %v1856 = vunpack.c.h.b16 %v1818
      %v1857 = vunpack.c.l.b16 %v1819
      %v1858 = vunpack.c.h.b16 %v1819
      %v1859 = vunpack.c.l.b16 %v1820
      %v1860 = vunpack.c.h.b16 %v1820
      %v1861 = vunpack.c.l.b16 %v1821
      %v1862 = vunpack.c.h.b16 %v1821
      %v1863 = vunpack.c.l.b16 %v1822
      %v1864 = vunpack.c.h.b16 %v1822
      %v1865 = vunpack.c.l.b16 %v1823
      %v1866 = vunpack.c.h.b16 %v1823
      %v1867 = vunpack.c.l.b16 %v1824
      %v1868 = vunpack.c.h.b16 %v1824
      %v1869 = vunpack.c.l.b16 %v1825
      %v1870 = vunpack.c.h.b16 %v1825
      %v1871 = vunpack.c.l.b16 %v1826
      %v1872 = vunpack.c.h.b16 %v1826
      %v1873 = vunpack.c.l.b16 %v1827
      %v1874 = vunpack.c.h.b16 %v1827
      %v1875 = vunpack.c.l.b16 %v1828
      %v1876 = vunpack.c.h.b16 %v1828
      %v1877 = vpack.c.b16 %v1845, %v1845
      %v1878 = vpack.c.b16 %v1846, %v1846
      %v1879 = vpack.c.b16 %v1847, %v1847
      %v1880 = vpack.c.b16 %v1848, %v1848
      %v1881 = vpack.c.b16 %v1849, %v1849
      %v1882 = vpack.c.b16 %v1850, %v1850
      %v1883 = vpack.c.b16 %v1851, %v1851
      %v1884 = vpack.c.b16 %v1852, %v1852
      %v1885 = vpack.c.b16 %v1853, %v1853
      %v1886 = vpack.c.b16 %v1854, %v1854
      %v1887 = vpack.c.b16 %v1855, %v1855
      %v1888 = vpack.c.b16 %v1856, %v1856
      %v1889 = vpack.c.b16 %v1857, %v1857
      %v1890 = vpack.c.b16 %v1858, %v1858
      %v1891 = vpack.c.b16 %v1859, %v1859
      %v1892 = vpack.c.b16 %v1860, %v1860
      %v1893 = vpack.c.b16 %v1861, %v1861
      %v1894 = vpack.c.b16 %v1862, %v1862
      %v1895 = vpack.c.b16 %v1863, %v1863
      %v1896 = vpack.c.b16 %v1864, %v1864
      %v1897 = vpack.c.b16 %v1865, %v1865
      %v1898 = vpack.c.b16 %v1866, %v1866
      %v1899 = vpack.c.b16 %v1867, %v1867
      %v1900 = vpack.c.b16 %v1868, %v1868
      %v1901 = vpack.c.b16 %v1869, %v1869
      %v1902 = vpack.c.b16 %v1870, %v1870
      %v1903 = vpack.c.b16 %v1871, %v1871
      %v1904 = vpack.c.b16 %v1872, %v1872
      %v1905 = vpack.c.b16 %v1873, %v1873
      %v1906 = vpack.c.b16 %v1874, %v1874
      %v1907 = vpack.c.b16 %v1875, %v1875
      %v1908 = vpack.c.b16 %v1876, %v1876
      %1941 = vst [vmem:[#allocation3 + $0x14] sm:$0xf] %v1877
      %1942 = vst [vmem:[#allocation3 + $0x38] sm:$0xf] %v1878
      %1943 = vst [vmem:[#allocation3 + $0x5c] sm:$0xf] %v1879
      %1944 = vst [vmem:[#allocation3 + $0x80] sm:$0xf] %v1880
      %1945 = vst [vmem:[#allocation3 + $0xa4] sm:$0xf] %v1881
      %1946 = vst [vmem:[#allocation3 + $0xc8] sm:$0xf] %v1882
      %1947 = vst [vmem:[#allocation3 + $0xec] sm:$0xf] %v1883
      %1948 = vst [vmem:[#allocation3 + $0x110] sm:$0xf] %v1884
      %1949 = vst [vmem:[#allocation3 + $0x134] sm:$0xf] %v1885
      %1950 = vst [vmem:[#allocation3 + $0x158] sm:$0xf] %v1886
      %1951 = vst [vmem:[#allocation3 + $0x17c] sm:$0xf] %v1887
      %1952 = vst [vmem:[#allocation3 + $0x1a0] sm:$0xf] %v1888
      %1953 = vst [vmem:[#allocation3 + $0x1c4] sm:$0xf] %v1889
      %1954 = vst [vmem:[#allocation3 + $0x1e8] sm:$0xf] %v1890
      %1955 = vst [vmem:[#allocation3 + $0x20c] sm:$0xf] %v1891
      %1956 = vst [vmem:[#allocation3 + $0x230] sm:$0xf] %v1892
      %1957 = vst [vmem:[#allocation3 + $0x254] sm:$0xf] %v1893
      %1958 = vst [vmem:[#allocation3 + $0x278] sm:$0xf] %v1894
      %1959 = vst [vmem:[#allocation3 + $0x29c] sm:$0xf] %v1895
      %1960 = vst [vmem:[#allocation3 + $0x2c0] sm:$0xf] %v1896
      %1961 = vst [vmem:[#allocation3 + $0x2e4] sm:$0xf] %v1897
      %1962 = vst [vmem:[#allocation3 + $0x308] sm:$0xf] %v1898
      %1963 = vst [vmem:[#allocation3 + $0x32c] sm:$0xf] %v1899
      %1964 = vst [vmem:[#allocation3 + $0x350] sm:$0xf] %v1900
      %1965 = vst [vmem:[#allocation3 + $0x374] sm:$0xf] %v1901
      %1966 = vst [vmem:[#allocation3 + $0x398] sm:$0xf] %v1902
      %1967 = vst [vmem:[#allocation3 + $0x3bc] sm:$0xf] %v1903
      %1968 = vst [vmem:[#allocation3 + $0x3e0] sm:$0xf] %v1904
      %1969 = vst [vmem:[#allocation3 + $0x404] sm:$0xf] %v1905
      %1970 = vst [vmem:[#allocation3 + $0x428] sm:$0xf] %v1906
      %1971 = vst [vmem:[#allocation3 + $0x44c] sm:$0xf] %v1907
      %1972 = vst [vmem:[#allocation3 + $0x470] sm:$0xf] %v1908
      %s1973 = scalar_lea.vmem [#allocation2], 64
      %v1974 = vld [vmem:[%s1973 + $0x7] sm:$0xff]
      %v1975 = vld [vmem:[%s1973 + $0xf] sm:$0xff]
      %v1976 = vld [vmem:[%s1973 + $0x27] sm:$0xff]
      %v1977 = vld [vmem:[%s1973 + $0x2f] sm:$0xff]
      %v1978 = vld [vmem:[%s1973 + $0x47] sm:$0xff]
      %v1979 = vld [vmem:[%s1973 + $0x4f] sm:$0xff]
      %v1980 = vld [vmem:[%s1973 + $0x67] sm:$0xff]
      %v1981 = vld [vmem:[%s1973 + $0x6f] sm:$0xff]
      %v1982 = vld [vmem:[%s1973 + $0x87] sm:$0xff]
      %v1983 = vld [vmem:[%s1973 + $0x8f] sm:$0xff]
      %v1984 = vld [vmem:[%s1973 + $0xa7] sm:$0xff]
      %v1985 = vld [vmem:[%s1973 + $0xaf] sm:$0xff]
      %v1986 = vld [vmem:[%s1973 + $0xc7] sm:$0xff]
      %v1987 = vld [vmem:[%s1973 + $0xcf] sm:$0xff]
      %v1988 = vld [vmem:[%s1973 + $0xe7] sm:$0xff]
      %v1989 = vld [vmem:[%s1973 + $0xef] sm:$0xff]
      %v1990 = vld [vmem:[%s1973 + $0x107] sm:$0xff]
      %v1991 = vld [vmem:[%s1973 + $0x10f] sm:$0xff]
      %v1992 = vld [vmem:[%s1973 + $0x127] sm:$0xff]
      %v1993 = vld [vmem:[%s1973 + $0x12f] sm:$0xff]
      %v1994 = vld [vmem:[%s1973 + $0x147] sm:$0xff]
      %v1995 = vld [vmem:[%s1973 + $0x14f] sm:$0xff]
      %v1996 = vld [vmem:[%s1973 + $0x167] sm:$0xff]
      %v1997 = vld [vmem:[%s1973 + $0x16f] sm:$0xff]
      %v1998 = vld [vmem:[%s1973 + $0x187] sm:$0xff]
      %v1999 = vld [vmem:[%s1973 + $0x18f] sm:$0xff]
      %v2000 = vld [vmem:[%s1973 + $0x1a7] sm:$0xff]
      %v2001 = vld [vmem:[%s1973 + $0x1af] sm:$0xff]
      %v2002 = vld [vmem:[%s1973 + $0x1c7] sm:$0xff]
      %v2003 = vld [vmem:[%s1973 + $0x1cf] sm:$0xff]
      %v2004 = vld [vmem:[%s1973 + $0x1e7] sm:$0xff]
      %v2005 = vld [vmem:[%s1973 + $0x1ef] sm:$0xff]
      %v2006 = vpack.c.bf16 %v1975, %v1974
      %v2007 = vpack.c.bf16 %v1977, %v1976
      %v2008 = vpack.c.bf16 %v1979, %v1978
      %v2009 = vpack.c.bf16 %v1981, %v1980
      %v2010 = vpack.c.bf16 %v1983, %v1982
      %v2011 = vpack.c.bf16 %v1985, %v1984
      %v2012 = vpack.c.bf16 %v1987, %v1986
      %v2013 = vpack.c.bf16 %v1989, %v1988
      %v2014 = vpack.c.bf16 %v1991, %v1990
      %v2015 = vpack.c.bf16 %v1993, %v1992
      %v2016 = vpack.c.bf16 %v1995, %v1994
      %v2017 = vpack.c.bf16 %v1997, %v1996
      %v2018 = vpack.c.bf16 %v1999, %v1998
      %v2019 = vpack.c.bf16 %v2001, %v2000
      %v2020 = vpack.c.bf16 %v2003, %v2002
      %v2021 = vpack.c.bf16 %v2005, %v2004
      %v2038 = vunpack.c.l.b16 %v2006
      %v2039 = vunpack.c.h.b16 %v2006
      %v2040 = vunpack.c.l.b16 %v2007
      %v2041 = vunpack.c.h.b16 %v2007
      %v2042 = vunpack.c.l.b16 %v2008
      %v2043 = vunpack.c.h.b16 %v2008
      %v2044 = vunpack.c.l.b16 %v2009
      %v2045 = vunpack.c.h.b16 %v2009
      %v2046 = vunpack.c.l.b16 %v2010
      %v2047 = vunpack.c.h.b16 %v2010
      %v2048 = vunpack.c.l.b16 %v2011
      %v2049 = vunpack.c.h.b16 %v2011
      %v2050 = vunpack.c.l.b16 %v2012
      %v2051 = vunpack.c.h.b16 %v2012
      %v2052 = vunpack.c.l.b16 %v2013
      %v2053 = vunpack.c.h.b16 %v2013
      %v2054 = vunpack.c.l.b16 %v2014
      %v2055 = vunpack.c.h.b16 %v2014
      %v2056 = vunpack.c.l.b16 %v2015
      %v2057 = vunpack.c.h.b16 %v2015
      %v2058 = vunpack.c.l.b16 %v2016
      %v2059 = vunpack.c.h.b16 %v2016
      %v2060 = vunpack.c.l.b16 %v2017
      %v2061 = vunpack.c.h.b16 %v2017
      %v2062 = vunpack.c.l.b16 %v2018
      %v2063 = vunpack.c.h.b16 %v2018
      %v2064 = vunpack.c.l.b16 %v2019
      %v2065 = vunpack.c.h.b16 %v2019
      %v2066 = vunpack.c.l.b16 %v2020
      %v2067 = vunpack.c.h.b16 %v2020
      %v2068 = vunpack.c.l.b16 %v2021
      %v2069 = vunpack.c.h.b16 %v2021
      %v2070 = vpack.c.b16 %v2038, %v2038
      %v2071 = vpack.c.b16 %v2039, %v2039
      %v2072 = vpack.c.b16 %v2040, %v2040
      %v2073 = vpack.c.b16 %v2041, %v2041
      %v2074 = vpack.c.b16 %v2042, %v2042
      %v2075 = vpack.c.b16 %v2043, %v2043
      %v2076 = vpack.c.b16 %v2044, %v2044
      %v2077 = vpack.c.b16 %v2045, %v2045
      %v2078 = vpack.c.b16 %v2046, %v2046
      %v2079 = vpack.c.b16 %v2047, %v2047
      %v2080 = vpack.c.b16 %v2048, %v2048
      %v2081 = vpack.c.b16 %v2049, %v2049
      %v2082 = vpack.c.b16 %v2050, %v2050
      %v2083 = vpack.c.b16 %v2051, %v2051
      %v2084 = vpack.c.b16 %v2052, %v2052
      %v2085 = vpack.c.b16 %v2053, %v2053
      %v2086 = vpack.c.b16 %v2054, %v2054
      %v2087 = vpack.c.b16 %v2055, %v2055
      %v2088 = vpack.c.b16 %v2056, %v2056
      %v2089 = vpack.c.b16 %v2057, %v2057
      %v2090 = vpack.c.b16 %v2058, %v2058
      %v2091 = vpack.c.b16 %v2059, %v2059
      %v2092 = vpack.c.b16 %v2060, %v2060
      %v2093 = vpack.c.b16 %v2061, %v2061
      %v2094 = vpack.c.b16 %v2062, %v2062
      %v2095 = vpack.c.b16 %v2063, %v2063
      %v2096 = vpack.c.b16 %v2064, %v2064
      %v2097 = vpack.c.b16 %v2065, %v2065
      %v2098 = vpack.c.b16 %v2066, %v2066
      %v2099 = vpack.c.b16 %v2067, %v2067
      %v2100 = vpack.c.b16 %v2068, %v2068
      %v2101 = vpack.c.b16 %v2069, %v2069
      %2134 = vst [vmem:[#allocation3 + $0x18] sm:$0xf] %v2070
      %2135 = vst [vmem:[#allocation3 + $0x3c] sm:$0xf] %v2071
      %2136 = vst [vmem:[#allocation3 + $0x60] sm:$0xf] %v2072
      %2137 = vst [vmem:[#allocation3 + $0x84] sm:$0xf] %v2073
      %2138 = vst [vmem:[#allocation3 + $0xa8] sm:$0xf] %v2074
      %2139 = vst [vmem:[#allocation3 + $0xcc] sm:$0xf] %v2075
      %2140 = vst [vmem:[#allocation3 + $0xf0] sm:$0xf] %v2076
      %2141 = vst [vmem:[#allocation3 + $0x114] sm:$0xf] %v2077
      %2142 = vst [vmem:[#allocation3 + $0x138] sm:$0xf] %v2078
      %2143 = vst [vmem:[#allocation3 + $0x15c] sm:$0xf] %v2079
      %2144 = vst [vmem:[#allocation3 + $0x180] sm:$0xf] %v2080
      %2145 = vst [vmem:[#allocation3 + $0x1a4] sm:$0xf] %v2081
      %2146 = vst [vmem:[#allocation3 + $0x1c8] sm:$0xf] %v2082
      %2147 = vst [vmem:[#allocation3 + $0x1ec] sm:$0xf] %v2083
      %2148 = vst [vmem:[#allocation3 + $0x210] sm:$0xf] %v2084
      %2149 = vst [vmem:[#allocation3 + $0x234] sm:$0xf] %v2085
      %2150 = vst [vmem:[#allocation3 + $0x258] sm:$0xf] %v2086
      %2151 = vst [vmem:[#allocation3 + $0x27c] sm:$0xf] %v2087
      %2152 = vst [vmem:[#allocation3 + $0x2a0] sm:$0xf] %v2088
      %2153 = vst [vmem:[#allocation3 + $0x2c4] sm:$0xf] %v2089
      %2154 = vst [vmem:[#allocation3 + $0x2e8] sm:$0xf] %v2090
      %2155 = vst [vmem:[#allocation3 + $0x30c] sm:$0xf] %v2091
      %2156 = vst [vmem:[#allocation3 + $0x330] sm:$0xf] %v2092
      %2157 = vst [vmem:[#allocation3 + $0x354] sm:$0xf] %v2093
      %2158 = vst [vmem:[#allocation3 + $0x378] sm:$0xf] %v2094
      %2159 = vst [vmem:[#allocation3 + $0x39c] sm:$0xf] %v2095
      %2160 = vst [vmem:[#allocation3 + $0x3c0] sm:$0xf] %v2096
      %2161 = vst [vmem:[#allocation3 + $0x3e4] sm:$0xf] %v2097
      %2162 = vst [vmem:[#allocation3 + $0x408] sm:$0xf] %v2098
      %2163 = vst [vmem:[#allocation3 + $0x42c] sm:$0xf] %v2099
      %2164 = vst [vmem:[#allocation3 + $0x450] sm:$0xf] %v2100
      %2165 = vst [vmem:[#allocation3 + $0x474] sm:$0xf] %v2101
      %v2166 = vld [vmem:[%s1973 + $0x8] sm:$0xff]
      %v2167 = vld [vmem:[%s1973 + $0x10] sm:$0xff]
      %v2168 = vld [vmem:[%s1973 + $0x28] sm:$0xff]
      %v2169 = vld [vmem:[%s1973 + $0x30] sm:$0xff]
      %v2170 = vld [vmem:[%s1973 + $0x48] sm:$0xff]
      %v2171 = vld [vmem:[%s1973 + $0x50] sm:$0xff]
      %v2172 = vld [vmem:[%s1973 + $0x68] sm:$0xff]
      %v2173 = vld [vmem:[%s1973 + $0x70] sm:$0xff]
      %v2174 = vld [vmem:[%s1973 + $0x88] sm:$0xff]
      %v2175 = vld [vmem:[%s1973 + $0x90] sm:$0xff]
      %v2176 = vld [vmem:[%s1973 + $0xa8] sm:$0xff]
      %v2177 = vld [vmem:[%s1973 + $0xb0] sm:$0xff]
      %v2178 = vld [vmem:[%s1973 + $0xc8] sm:$0xff]
      %v2179 = vld [vmem:[%s1973 + $0xd0] sm:$0xff]
      %v2180 = vld [vmem:[%s1973 + $0xe8] sm:$0xff]
      %v2181 = vld [vmem:[%s1973 + $0xf0] sm:$0xff]
      %v2182 = vld [vmem:[%s1973 + $0x108] sm:$0xff]
      %v2183 = vld [vmem:[%s1973 + $0x110] sm:$0xff]
      %v2184 = vld [vmem:[%s1973 + $0x128] sm:$0xff]
      %v2185 = vld [vmem:[%s1973 + $0x130] sm:$0xff]
      %v2186 = vld [vmem:[%s1973 + $0x148] sm:$0xff]
      %v2187 = vld [vmem:[%s1973 + $0x150] sm:$0xff]
      %v2188 = vld [vmem:[%s1973 + $0x168] sm:$0xff]
      %v2189 = vld [vmem:[%s1973 + $0x170] sm:$0xff]
      %v2190 = vld [vmem:[%s1973 + $0x188] sm:$0xff]
      %v2191 = vld [vmem:[%s1973 + $0x190] sm:$0xff]
      %v2192 = vld [vmem:[%s1973 + $0x1a8] sm:$0xff]
      %v2193 = vld [vmem:[%s1973 + $0x1b0] sm:$0xff]
      %v2194 = vld [vmem:[%s1973 + $0x1c8] sm:$0xff]
      %v2195 = vld [vmem:[%s1973 + $0x1d0] sm:$0xff]
      %v2196 = vld [vmem:[%s1973 + $0x1e8] sm:$0xff]
      %v2197 = vld [vmem:[%s1973 + $0x1f0] sm:$0xff]
      %v2198 = vpack.c.bf16 %v2167, %v2166
      %v2199 = vpack.c.bf16 %v2169, %v2168
      %v2200 = vpack.c.bf16 %v2171, %v2170
      %v2201 = vpack.c.bf16 %v2173, %v2172
      %v2202 = vpack.c.bf16 %v2175, %v2174
      %v2203 = vpack.c.bf16 %v2177, %v2176
      %v2204 = vpack.c.bf16 %v2179, %v2178
      %v2205 = vpack.c.bf16 %v2181, %v2180
      %v2206 = vpack.c.bf16 %v2183, %v2182
      %v2207 = vpack.c.bf16 %v2185, %v2184
      %v2208 = vpack.c.bf16 %v2187, %v2186
      %v2209 = vpack.c.bf16 %v2189, %v2188
      %v2210 = vpack.c.bf16 %v2191, %v2190
      %v2211 = vpack.c.bf16 %v2193, %v2192
      %v2212 = vpack.c.bf16 %v2195, %v2194
      %v2213 = vpack.c.bf16 %v2197, %v2196
      %v2230 = vunpack.c.l.b16 %v2198
      %v2231 = vunpack.c.h.b16 %v2198
      %v2232 = vunpack.c.l.b16 %v2199
      %v2233 = vunpack.c.h.b16 %v2199
      %v2234 = vunpack.c.l.b16 %v2200
      %v2235 = vunpack.c.h.b16 %v2200
      %v2236 = vunpack.c.l.b16 %v2201
      %v2237 = vunpack.c.h.b16 %v2201
      %v2238 = vunpack.c.l.b16 %v2202
      %v2239 = vunpack.c.h.b16 %v2202
      %v2240 = vunpack.c.l.b16 %v2203
      %v2241 = vunpack.c.h.b16 %v2203
      %v2242 = vunpack.c.l.b16 %v2204
      %v2243 = vunpack.c.h.b16 %v2204
      %v2244 = vunpack.c.l.b16 %v2205
      %v2245 = vunpack.c.h.b16 %v2205
      %v2246 = vunpack.c.l.b16 %v2206
      %v2247 = vunpack.c.h.b16 %v2206
      %v2248 = vunpack.c.l.b16 %v2207
      %v2249 = vunpack.c.h.b16 %v2207
      %v2250 = vunpack.c.l.b16 %v2208
      %v2251 = vunpack.c.h.b16 %v2208
      %v2252 = vunpack.c.l.b16 %v2209
      %v2253 = vunpack.c.h.b16 %v2209
      %v2254 = vunpack.c.l.b16 %v2210
      %v2255 = vunpack.c.h.b16 %v2210
      %v2256 = vunpack.c.l.b16 %v2211
      %v2257 = vunpack.c.h.b16 %v2211
      %v2258 = vunpack.c.l.b16 %v2212
      %v2259 = vunpack.c.h.b16 %v2212
      %v2260 = vunpack.c.l.b16 %v2213
      %v2261 = vunpack.c.h.b16 %v2213
      %v2262 = vpack.c.b16 %v2230, %v2230
      %v2263 = vpack.c.b16 %v2231, %v2231
      %v2264 = vpack.c.b16 %v2232, %v2232
      %v2265 = vpack.c.b16 %v2233, %v2233
      %v2266 = vpack.c.b16 %v2234, %v2234
      %v2267 = vpack.c.b16 %v2235, %v2235
      %v2268 = vpack.c.b16 %v2236, %v2236
      %v2269 = vpack.c.b16 %v2237, %v2237
      %v2270 = vpack.c.b16 %v2238, %v2238
      %v2271 = vpack.c.b16 %v2239, %v2239
      %v2272 = vpack.c.b16 %v2240, %v2240
      %v2273 = vpack.c.b16 %v2241, %v2241
      %v2274 = vpack.c.b16 %v2242, %v2242
      %v2275 = vpack.c.b16 %v2243, %v2243
      %v2276 = vpack.c.b16 %v2244, %v2244
      %v2277 = vpack.c.b16 %v2245, %v2245
      %v2278 = vpack.c.b16 %v2246, %v2246
      %v2279 = vpack.c.b16 %v2247, %v2247
      %v2280 = vpack.c.b16 %v2248, %v2248
      %v2281 = vpack.c.b16 %v2249, %v2249
      %v2282 = vpack.c.b16 %v2250, %v2250
      %v2283 = vpack.c.b16 %v2251, %v2251
      %v2284 = vpack.c.b16 %v2252, %v2252
      %v2285 = vpack.c.b16 %v2253, %v2253
      %v2286 = vpack.c.b16 %v2254, %v2254
      %v2287 = vpack.c.b16 %v2255, %v2255
      %v2288 = vpack.c.b16 %v2256, %v2256
      %v2289 = vpack.c.b16 %v2257, %v2257
      %v2290 = vpack.c.b16 %v2258, %v2258
      %v2291 = vpack.c.b16 %v2259, %v2259
      %v2292 = vpack.c.b16 %v2260, %v2260
      %v2293 = vpack.c.b16 %v2261, %v2261
      %2326 = vst [vmem:[#allocation3 + $0x1c] sm:$0xf] %v2262
      %2327 = vst [vmem:[#allocation3 + $0x40] sm:$0xf] %v2263
      %2328 = vst [vmem:[#allocation3 + $0x64] sm:$0xf] %v2264
      %2329 = vst [vmem:[#allocation3 + $0x88] sm:$0xf] %v2265
      %2330 = vst [vmem:[#allocation3 + $0xac] sm:$0xf] %v2266
      %2331 = vst [vmem:[#allocation3 + $0xd0] sm:$0xf] %v2267
      %2332 = vst [vmem:[#allocation3 + $0xf4] sm:$0xf] %v2268
      %2333 = vst [vmem:[#allocation3 + $0x118] sm:$0xf] %v2269
      %2334 = vst [vmem:[#allocation3 + $0x13c] sm:$0xf] %v2270
      %2335 = vst [vmem:[#allocation3 + $0x160] sm:$0xf] %v2271
      %2336 = vst [vmem:[#allocation3 + $0x184] sm:$0xf] %v2272
      %2337 = vst [vmem:[#allocation3 + $0x1a8] sm:$0xf] %v2273
      %2338 = vst [vmem:[#allocation3 + $0x1cc] sm:$0xf] %v2274
      %2339 = vst [vmem:[#allocation3 + $0x1f0] sm:$0xf] %v2275
      %2340 = vst [vmem:[#allocation3 + $0x214] sm:$0xf] %v2276
      %2341 = vst [vmem:[#allocation3 + $0x238] sm:$0xf] %v2277
      %2342 = vst [vmem:[#allocation3 + $0x25c] sm:$0xf] %v2278
      %2343 = vst [vmem:[#allocation3 + $0x280] sm:$0xf] %v2279
      %2344 = vst [vmem:[#allocation3 + $0x2a4] sm:$0xf] %v2280
      %2345 = vst [vmem:[#allocation3 + $0x2c8] sm:$0xf] %v2281
      %2346 = vst [vmem:[#allocation3 + $0x2ec] sm:$0xf] %v2282
      %2347 = vst [vmem:[#allocation3 + $0x310] sm:$0xf] %v2283
      %2348 = vst [vmem:[#allocation3 + $0x334] sm:$0xf] %v2284
      %2349 = vst [vmem:[#allocation3 + $0x358] sm:$0xf] %v2285
      %2350 = vst [vmem:[#allocation3 + $0x37c] sm:$0xf] %v2286
      %2351 = vst [vmem:[#allocation3 + $0x3a0] sm:$0xf] %v2287
      %2352 = vst [vmem:[#allocation3 + $0x3c4] sm:$0xf] %v2288
      %2353 = vst [vmem:[#allocation3 + $0x3e8] sm:$0xf] %v2289
      %2354 = vst [vmem:[#allocation3 + $0x40c] sm:$0xf] %v2290
      %2355 = vst [vmem:[#allocation3 + $0x430] sm:$0xf] %v2291
      %2356 = vst [vmem:[#allocation3 + $0x454] sm:$0xf] %v2292
      %2357 = vst [vmem:[#allocation3 + $0x478] sm:$0xf] %v2293
      %v2358 = vld [vmem:[%s1973 + $0x9] sm:$0xff]
      %v2359 = vld [vmem:[%s1973 + $0x11] sm:$0xff]
      %v2360 = vld [vmem:[%s1973 + $0x29] sm:$0xff]
      %v2361 = vld [vmem:[%s1973 + $0x31] sm:$0xff]
      %v2362 = vld [vmem:[%s1973 + $0x49] sm:$0xff]
      %v2363 = vld [vmem:[%s1973 + $0x51] sm:$0xff]
      %v2364 = vld [vmem:[%s1973 + $0x69] sm:$0xff]
      %v2365 = vld [vmem:[%s1973 + $0x71] sm:$0xff]
      %v2366 = vld [vmem:[%s1973 + $0x89] sm:$0xff]
      %v2367 = vld [vmem:[%s1973 + $0x91] sm:$0xff]
      %v2368 = vld [vmem:[%s1973 + $0xa9] sm:$0xff]
      %v2369 = vld [vmem:[%s1973 + $0xb1] sm:$0xff]
      %v2370 = vld [vmem:[%s1973 + $0xc9] sm:$0xff]
      %v2371 = vld [vmem:[%s1973 + $0xd1] sm:$0xff]
      %v2372 = vld [vmem:[%s1973 + $0xe9] sm:$0xff]
      %v2373 = vld [vmem:[%s1973 + $0xf1] sm:$0xff]
      %v2374 = vld [vmem:[%s1973 + $0x109] sm:$0xff]
      %v2375 = vld [vmem:[%s1973 + $0x111] sm:$0xff]
      %v2376 = vld [vmem:[%s1973 + $0x129] sm:$0xff]
      %v2377 = vld [vmem:[%s1973 + $0x131] sm:$0xff]
      %v2378 = vld [vmem:[%s1973 + $0x149] sm:$0xff]
      %v2379 = vld [vmem:[%s1973 + $0x151] sm:$0xff]
      %v2380 = vld [vmem:[%s1973 + $0x169] sm:$0xff]
      %v2381 = vld [vmem:[%s1973 + $0x171] sm:$0xff]
      %v2382 = vld [vmem:[%s1973 + $0x189] sm:$0xff]
      %v2383 = vld [vmem:[%s1973 + $0x191] sm:$0xff]
      %v2384 = vld [vmem:[%s1973 + $0x1a9] sm:$0xff]
      %v2385 = vld [vmem:[%s1973 + $0x1b1] sm:$0xff]
      %v2386 = vld [vmem:[%s1973 + $0x1c9] sm:$0xff]
      %v2387 = vld [vmem:[%s1973 + $0x1d1] sm:$0xff]
      %v2388 = vld [vmem:[%s1973 + $0x1e9] sm:$0xff]
      %v2389 = vld [vmem:[%s1973 + $0x1f1] sm:$0xff]
      %v2390 = vpack.c.bf16 %v2359, %v2358
      %v2391 = vpack.c.bf16 %v2361, %v2360
      %v2392 = vpack.c.bf16 %v2363, %v2362
      %v2393 = vpack.c.bf16 %v2365, %v2364
      %v2394 = vpack.c.bf16 %v2367, %v2366
      %v2395 = vpack.c.bf16 %v2369, %v2368
      %v2396 = vpack.c.bf16 %v2371, %v2370
      %v2397 = vpack.c.bf16 %v2373, %v2372
      %v2398 = vpack.c.bf16 %v2375, %v2374
      %v2399 = vpack.c.bf16 %v2377, %v2376
      %v2400 = vpack.c.bf16 %v2379, %v2378
      %v2401 = vpack.c.bf16 %v2381, %v2380
      %v2402 = vpack.c.bf16 %v2383, %v2382
      %v2403 = vpack.c.bf16 %v2385, %v2384
      %v2404 = vpack.c.bf16 %v2387, %v2386
      %v2405 = vpack.c.bf16 %v2389, %v2388
      %v2422 = vunpack.c.l.b16 %v2390
      %v2423 = vunpack.c.h.b16 %v2390
      %v2424 = vunpack.c.l.b16 %v2391
      %v2425 = vunpack.c.h.b16 %v2391
      %v2426 = vunpack.c.l.b16 %v2392
      %v2427 = vunpack.c.h.b16 %v2392
      %v2428 = vunpack.c.l.b16 %v2393
      %v2429 = vunpack.c.h.b16 %v2393
      %v2430 = vunpack.c.l.b16 %v2394
      %v2431 = vunpack.c.h.b16 %v2394
      %v2432 = vunpack.c.l.b16 %v2395
      %v2433 = vunpack.c.h.b16 %v2395
      %v2434 = vunpack.c.l.b16 %v2396
      %v2435 = vunpack.c.h.b16 %v2396
      %v2436 = vunpack.c.l.b16 %v2397
      %v2437 = vunpack.c.h.b16 %v2397
      %v2438 = vunpack.c.l.b16 %v2398
      %v2439 = vunpack.c.h.b16 %v2398
      %v2440 = vunpack.c.l.b16 %v2399
      %v2441 = vunpack.c.h.b16 %v2399
      %v2442 = vunpack.c.l.b16 %v2400
      %v2443 = vunpack.c.h.b16 %v2400
      %v2444 = vunpack.c.l.b16 %v2401
      %v2445 = vunpack.c.h.b16 %v2401
      %v2446 = vunpack.c.l.b16 %v2402
      %v2447 = vunpack.c.h.b16 %v2402
      %v2448 = vunpack.c.l.b16 %v2403
      %v2449 = vunpack.c.h.b16 %v2403
      %v2450 = vunpack.c.l.b16 %v2404
      %v2451 = vunpack.c.h.b16 %v2404
      %v2452 = vunpack.c.l.b16 %v2405
      %v2453 = vunpack.c.h.b16 %v2405
      %v2454 = vpack.c.b16 %v2422, %v2422
      %v2455 = vpack.c.b16 %v2423, %v2423
      %v2456 = vpack.c.b16 %v2424, %v2424
      %v2457 = vpack.c.b16 %v2425, %v2425
      %v2458 = vpack.c.b16 %v2426, %v2426
      %v2459 = vpack.c.b16 %v2427, %v2427
      %v2460 = vpack.c.b16 %v2428, %v2428
      %v2461 = vpack.c.b16 %v2429, %v2429
      %v2462 = vpack.c.b16 %v2430, %v2430
      %v2463 = vpack.c.b16 %v2431, %v2431
      %v2464 = vpack.c.b16 %v2432, %v2432
      %v2465 = vpack.c.b16 %v2433, %v2433
      %v2466 = vpack.c.b16 %v2434, %v2434
      %v2467 = vpack.c.b16 %v2435, %v2435
      %v2468 = vpack.c.b16 %v2436, %v2436
      %v2469 = vpack.c.b16 %v2437, %v2437
      %v2470 = vpack.c.b16 %v2438, %v2438
      %v2471 = vpack.c.b16 %v2439, %v2439
      %v2472 = vpack.c.b16 %v2440, %v2440
      %v2473 = vpack.c.b16 %v2441, %v2441
      %v2474 = vpack.c.b16 %v2442, %v2442
      %v2475 = vpack.c.b16 %v2443, %v2443
      %v2476 = vpack.c.b16 %v2444, %v2444
      %v2477 = vpack.c.b16 %v2445, %v2445
      %v2478 = vpack.c.b16 %v2446, %v2446
      %v2479 = vpack.c.b16 %v2447, %v2447
      %v2480 = vpack.c.b16 %v2448, %v2448
      %v2481 = vpack.c.b16 %v2449, %v2449
      %v2482 = vpack.c.b16 %v2450, %v2450
      %v2483 = vpack.c.b16 %v2451, %v2451
      %v2484 = vpack.c.b16 %v2452, %v2452
      %v2485 = vpack.c.b16 %v2453, %v2453
      %2518 = vst [vmem:[#allocation3 + $0x20] sm:$0xf] %v2454
      %2519 = vst [vmem:[#allocation3 + $0x44] sm:$0xf] %v2455
      %2520 = vst [vmem:[#allocation3 + $0x68] sm:$0xf] %v2456
      %2521 = vst [vmem:[#allocation3 + $0x8c] sm:$0xf] %v2457
      %2522 = vst [vmem:[#allocation3 + $0xb0] sm:$0xf] %v2458
      %2523 = vst [vmem:[#allocation3 + $0xd4] sm:$0xf] %v2459
      %2524 = vst [vmem:[#allocation3 + $0xf8] sm:$0xf] %v2460
      %2525 = vst [vmem:[#allocation3 + $0x11c] sm:$0xf] %v2461
      %2526 = vst [vmem:[#allocation3 + $0x140] sm:$0xf] %v2462
      %2527 = vst [vmem:[#allocation3 + $0x164] sm:$0xf] %v2463
      %2528 = vst [vmem:[#allocation3 + $0x188] sm:$0xf] %v2464
      %2529 = vst [vmem:[#allocation3 + $0x1ac] sm:$0xf] %v2465
      %2530 = vst [vmem:[#allocation3 + $0x1d0] sm:$0xf] %v2466
      %2531 = vst [vmem:[#allocation3 + $0x1f4] sm:$0xf] %v2467
      %2532 = vst [vmem:[#allocation3 + $0x218] sm:$0xf] %v2468
      %2533 = vst [vmem:[#allocation3 + $0x23c] sm:$0xf] %v2469
      %2534 = vst [vmem:[#allocation3 + $0x260] sm:$0xf] %v2470
      %2535 = vst [vmem:[#allocation3 + $0x284] sm:$0xf] %v2471
      %2536 = vst [vmem:[#allocation3 + $0x2a8] sm:$0xf] %v2472
      %2537 = vst [vmem:[#allocation3 + $0x2cc] sm:$0xf] %v2473
      %2538 = vst [vmem:[#allocation3 + $0x2f0] sm:$0xf] %v2474
      %2539 = vst [vmem:[#allocation3 + $0x314] sm:$0xf] %v2475
      %2540 = vst [vmem:[#allocation3 + $0x338] sm:$0xf] %v2476
      %2541 = vst [vmem:[#allocation3 + $0x35c] sm:$0xf] %v2477
      %2542 = vst [vmem:[#allocation3 + $0x380] sm:$0xf] %v2478
      %2543 = vst [vmem:[#allocation3 + $0x3a4] sm:$0xf] %v2479
      %2544 = vst [vmem:[#allocation3 + $0x3c8] sm:$0xf] %v2480
      %2545 = vst [vmem:[#allocation3 + $0x3ec] sm:$0xf] %v2481
      %2546 = vst [vmem:[#allocation3 + $0x410] sm:$0xf] %v2482
      %2547 = vst [vmem:[#allocation3 + $0x434] sm:$0xf] %v2483
      %2548 = vst [vmem:[#allocation3 + $0x458] sm:$0xf] %v2484
      %2549 = vst [vmem:[#allocation3 + $0x47c] sm:$0xf] %v2485
      %v2550 = vld [vmem:[#allocation3] sm:$0xff]
      %v2551 = vld [vmem:[#allocation3 + $0x8] sm:$0xff]
      %v2552 = vld [vmem:[#allocation3 + $0x10] sm:$0xff]
      %v2553 = vld [vmem:[#allocation3 + $0x18] sm:$0xff]
      %v2554 = vld [vmem:[#allocation3 + $0x20] sm:$0xf]
      %v2555 = vld [vmem:[#allocation3 + $0x24] sm:$0xff]
      %v2556 = vld [vmem:[#allocation3 + $0x2c] sm:$0xff]
      %v2557 = vld [vmem:[#allocation3 + $0x34] sm:$0xff]
      %v2558 = vld [vmem:[#allocation3 + $0x3c] sm:$0xff]
      %v2559 = vld [vmem:[#allocation3 + $0x44] sm:$0xf]
      %v2560 = vld [vmem:[#allocation3 + $0x48] sm:$0xff]
      %v2561 = vld [vmem:[#allocation3 + $0x50] sm:$0xff]
      %v2562 = vld [vmem:[#allocation3 + $0x58] sm:$0xff]
      %v2563 = vld [vmem:[#allocation3 + $0x60] sm:$0xff]
      %v2564 = vld [vmem:[#allocation3 + $0x68] sm:$0xf]
      %v2565 = vld [vmem:[#allocation3 + $0x6c] sm:$0xff]
      %v2566 = vld [vmem:[#allocation3 + $0x74] sm:$0xff]
      %v2567 = vld [vmem:[#allocation3 + $0x7c] sm:$0xff]
      %v2568 = vld [vmem:[#allocation3 + $0x84] sm:$0xff]
      %v2569 = vld [vmem:[#allocation3 + $0x8c] sm:$0xf]
      %v2570 = vld [vmem:[#allocation3 + $0x90] sm:$0xff]
      %v2571 = vld [vmem:[#allocation3 + $0x98] sm:$0xff]
      %v2572 = vld [vmem:[#allocation3 + $0xa0] sm:$0xff]
      %v2573 = vld [vmem:[#allocation3 + $0xa8] sm:$0xff]
      %v2574 = vld [vmem:[#allocation3 + $0xb0] sm:$0xf]
      %v2575 = vld [vmem:[#allocation3 + $0xb4] sm:$0xff]
      %v2576 = vld [vmem:[#allocation3 + $0xbc] sm:$0xff]
      %v2577 = vld [vmem:[#allocation3 + $0xc4] sm:$0xff]
      %v2578 = vld [vmem:[#allocation3 + $0xcc] sm:$0xff]
      %v2579 = vld [vmem:[#allocation3 + $0xd4] sm:$0xf]
      %v2580 = vld [vmem:[#allocation3 + $0xd8] sm:$0xff]
      %v2581 = vld [vmem:[#allocation3 + $0xe0] sm:$0xff]
      %v2582 = vld [vmem:[#allocation3 + $0xe8] sm:$0xff]
      %v2583 = vld [vmem:[#allocation3 + $0xf0] sm:$0xff]
      %v2584 = vld [vmem:[#allocation3 + $0xf8] sm:$0xf]
      %v2585 = vld [vmem:[#allocation3 + $0xfc] sm:$0xff]
      %v2586 = vld [vmem:[#allocation3 + $0x104] sm:$0xff]
      %v2587 = vld [vmem:[#allocation3 + $0x10c] sm:$0xff]
      %v2588 = vld [vmem:[#allocation3 + $0x114] sm:$0xff]
      %v2589 = vld [vmem:[#allocation3 + $0x11c] sm:$0xf]
      %v2590 = vld [vmem:[#allocation3 + $0x120] sm:$0xff]
      %v2591 = vld [vmem:[#allocation3 + $0x128] sm:$0xff]
      %v2592 = vld [vmem:[#allocation3 + $0x130] sm:$0xff]
      %v2593 = vld [vmem:[#allocation3 + $0x138] sm:$0xff]
      %v2594 = vld [vmem:[#allocation3 + $0x140] sm:$0xf]
      %v2595 = vld [vmem:[#allocation3 + $0x144] sm:$0xff]
      %v2596 = vld [vmem:[#allocation3 + $0x14c] sm:$0xff]
      %v2597 = vld [vmem:[#allocation3 + $0x154] sm:$0xff]
      %v2598 = vld [vmem:[#allocation3 + $0x15c] sm:$0xff]
      %v2599 = vld [vmem:[#allocation3 + $0x164] sm:$0xf]
      %v2600 = vld [vmem:[#allocation3 + $0x168] sm:$0xff]
      %v2601 = vld [vmem:[#allocation3 + $0x170] sm:$0xff]
      %v2602 = vld [vmem:[#allocation3 + $0x178] sm:$0xff]
      %v2603 = vld [vmem:[#allocation3 + $0x180] sm:$0xff]
      %v2604 = vld [vmem:[#allocation3 + $0x188] sm:$0xf]
      %v2605 = vld [vmem:[#allocation3 + $0x18c] sm:$0xff]
      %v2606 = vld [vmem:[#allocation3 + $0x194] sm:$0xff]
      %v2607 = vld [vmem:[#allocation3 + $0x19c] sm:$0xff]
      %v2608 = vld [vmem:[#allocation3 + $0x1a4] sm:$0xff]
      %v2609 = vld [vmem:[#allocation3 + $0x1ac] sm:$0xf]
      %v2610 = vld [vmem:[#allocation3 + $0x1b0] sm:$0xff]
      %v2611 = vld [vmem:[#allocation3 + $0x1b8] sm:$0xff]
      %v2612 = vld [vmem:[#allocation3 + $0x1c0] sm:$0xff]
      %v2613 = vld [vmem:[#allocation3 + $0x1c8] sm:$0xff]
      %v2614 = vld [vmem:[#allocation3 + $0x1d0] sm:$0xf]
      %v2615 = vld [vmem:[#allocation3 + $0x1d4] sm:$0xff]
      %v2616 = vld [vmem:[#allocation3 + $0x1dc] sm:$0xff]
      %v2617 = vld [vmem:[#allocation3 + $0x1e4] sm:$0xff]
      %v2618 = vld [vmem:[#allocation3 + $0x1ec] sm:$0xff]
      %v2619 = vld [vmem:[#allocation3 + $0x1f4] sm:$0xf]
      %v2620 = vld [vmem:[#allocation3 + $0x1f8] sm:$0xff]
      %v2621 = vld [vmem:[#allocation3 + $0x200] sm:$0xff]
      %v2622 = vld [vmem:[#allocation3 + $0x208] sm:$0xff]
      %v2623 = vld [vmem:[#allocation3 + $0x210] sm:$0xff]
      %v2624 = vld [vmem:[#allocation3 + $0x218] sm:$0xf]
      %v2625 = vld [vmem:[#allocation3 + $0x21c] sm:$0xff]
      %v2626 = vld [vmem:[#allocation3 + $0x224] sm:$0xff]
      %v2627 = vld [vmem:[#allocation3 + $0x22c] sm:$0xff]
      %v2628 = vld [vmem:[#allocation3 + $0x234] sm:$0xff]
      %v2629 = vld [vmem:[#allocation3 + $0x23c] sm:$0xf]
      %v2630 = vld [vmem:[#allocation3 + $0x240] sm:$0xff]
      %v2631 = vld [vmem:[#allocation3 + $0x248] sm:$0xff]
      %v2632 = vld [vmem:[#allocation3 + $0x250] sm:$0xff]
      %v2633 = vld [vmem:[#allocation3 + $0x258] sm:$0xff]
      %v2634 = vld [vmem:[#allocation3 + $0x260] sm:$0xf]
      %v2635 = vld [vmem:[#allocation3 + $0x264] sm:$0xff]
      %v2636 = vld [vmem:[#allocation3 + $0x26c] sm:$0xff]
      %v2637 = vld [vmem:[#allocation3 + $0x274] sm:$0xff]
      %v2638 = vld [vmem:[#allocation3 + $0x27c] sm:$0xff]
      %v2639 = vld [vmem:[#allocation3 + $0x284] sm:$0xf]
      %v2640 = vld [vmem:[#allocation3 + $0x288] sm:$0xff]
      %v2641 = vld [vmem:[#allocation3 + $0x290] sm:$0xff]
      %v2642 = vld [vmem:[#allocation3 + $0x298] sm:$0xff]
      %v2643 = vld [vmem:[#allocation3 + $0x2a0] sm:$0xff]
      %v2644 = vld [vmem:[#allocation3 + $0x2a8] sm:$0xf]
      %v2645 = vld [vmem:[#allocation3 + $0x2ac] sm:$0xff]
      %v2646 = vld [vmem:[#allocation3 + $0x2b4] sm:$0xff]
      %v2647 = vld [vmem:[#allocation3 + $0x2bc] sm:$0xff]
      %v2648 = vld [vmem:[#allocation3 + $0x2c4] sm:$0xff]
      %v2649 = vld [vmem:[#allocation3 + $0x2cc] sm:$0xf]
      %v2650 = vld [vmem:[#allocation3 + $0x2d0] sm:$0xff]
      %v2651 = vld [vmem:[#allocation3 + $0x2d8] sm:$0xff]
      %v2652 = vld [vmem:[#allocation3 + $0x2e0] sm:$0xff]
      %v2653 = vld [vmem:[#allocation3 + $0x2e8] sm:$0xff]
      %v2654 = vld [vmem:[#allocation3 + $0x2f0] sm:$0xf]
      %v2655 = vld [vmem:[#allocation3 + $0x2f4] sm:$0xff]
      %v2656 = vld [vmem:[#allocation3 + $0x2fc] sm:$0xff]
      %v2657 = vld [vmem:[#allocation3 + $0x304] sm:$0xff]
      %v2658 = vld [vmem:[#allocation3 + $0x30c] sm:$0xff]
      %v2659 = vld [vmem:[#allocation3 + $0x314] sm:$0xf]
      %v2660 = vld [vmem:[#allocation3 + $0x318] sm:$0xff]
      %v2661 = vld [vmem:[#allocation3 + $0x320] sm:$0xff]
      %v2662 = vld [vmem:[#allocation3 + $0x328] sm:$0xff]
      %v2663 = vld [vmem:[#allocation3 + $0x330] sm:$0xff]
      %v2664 = vld [vmem:[#allocation3 + $0x338] sm:$0xf]
      %v2665 = vld [vmem:[#allocation3 + $0x33c] sm:$0xff]
      %v2666 = vld [vmem:[#allocation3 + $0x344] sm:$0xff]
      %v2667 = vld [vmem:[#allocation3 + $0x34c] sm:$0xff]
      %v2668 = vld [vmem:[#allocation3 + $0x354] sm:$0xff]
      %v2669 = vld [vmem:[#allocation3 + $0x35c] sm:$0xf]
      %v2670 = vld [vmem:[#allocation3 + $0x360] sm:$0xff]
      %v2671 = vld [vmem:[#allocation3 + $0x368] sm:$0xff]
      %v2672 = vld [vmem:[#allocation3 + $0x370] sm:$0xff]
      %v2673 = vld [vmem:[#allocation3 + $0x378] sm:$0xff]
      %v2674 = vld [vmem:[#allocation3 + $0x380] sm:$0xf]
      %v2675 = vld [vmem:[#allocation3 + $0x384] sm:$0xff]
      %v2676 = vld [vmem:[#allocation3 + $0x38c] sm:$0xff]
      %v2677 = vld [vmem:[#allocation3 + $0x394] sm:$0xff]
      %v2678 = vld [vmem:[#allocation3 + $0x39c] sm:$0xff]
      %v2679 = vld [vmem:[#allocation3 + $0x3a4] sm:$0xf]
      %v2680 = vld [vmem:[#allocation3 + $0x3a8] sm:$0xff]
      %v2681 = vld [vmem:[#allocation3 + $0x3b0] sm:$0xff]
      %v2682 = vld [vmem:[#allocation3 + $0x3b8] sm:$0xff]
      %v2683 = vld [vmem:[#allocation3 + $0x3c0] sm:$0xff]
      %v2684 = vld [vmem:[#allocation3 + $0x3c8] sm:$0xf]
      %v2685 = vld [vmem:[#allocation3 + $0x3cc] sm:$0xff]
      %v2686 = vld [vmem:[#allocation3 + $0x3d4] sm:$0xff]
      %v2687 = vld [vmem:[#allocation3 + $0x3dc] sm:$0xff]
      %v2688 = vld [vmem:[#allocation3 + $0x3e4] sm:$0xff]
      %v2689 = vld [vmem:[#allocation3 + $0x3ec] sm:$0xf]
      %v2690 = vld [vmem:[#allocation3 + $0x3f0] sm:$0xff]
      %v2691 = vld [vmem:[#allocation3 + $0x3f8] sm:$0xff]
      %v2692 = vld [vmem:[#allocation3 + $0x400] sm:$0xff]
      %v2693 = vld [vmem:[#allocation3 + $0x408] sm:$0xff]
      %v2694 = vld [vmem:[#allocation3 + $0x410] sm:$0xf]
      %v2695 = vld [vmem:[#allocation3 + $0x414] sm:$0xff]
      %v2696 = vld [vmem:[#allocation3 + $0x41c] sm:$0xff]
      %v2697 = vld [vmem:[#allocation3 + $0x424] sm:$0xff]
      %v2698 = vld [vmem:[#allocation3 + $0x42c] sm:$0xff]
      %v2699 = vld [vmem:[#allocation3 + $0x434] sm:$0xf]
      %v2700 = vld [vmem:[#allocation3 + $0x438] sm:$0xff]
      %v2701 = vld [vmem:[#allocation3 + $0x440] sm:$0xff]
      %v2702 = vld [vmem:[#allocation3 + $0x448] sm:$0xff]
      %v2703 = vld [vmem:[#allocation3 + $0x450] sm:$0xff]
      %v2704 = vld [vmem:[#allocation3 + $0x458] sm:$0xf]
      %v2705 = vld [vmem:[#allocation3 + $0x45c] sm:$0xff]
      %v2706 = vld [vmem:[#allocation3 + $0x464] sm:$0xff]
      %v2707 = vld [vmem:[#allocation3 + $0x46c] sm:$0xff]
      %v2708 = vld [vmem:[#allocation3 + $0x474] sm:$0xff]
      %v2709 = vld [vmem:[#allocation3 + $0x47c] sm:$0xf]
      %v2710 = vld [vmem:[%s4] sm:$0xf]
      %v2711 = vld [vmem:[%s4 + $0x4] sm:$0xf]
      %v2712 = vld [vmem:[%s4 + $0x8] sm:$0xf]
      %v2713 = vld [vmem:[%s4 + $0xc] sm:$0xf]
      %v2714 = vld [vmem:[%s4 + $0x10] sm:$0xf]
      %v2715 = vld [vmem:[%s4 + $0x14] sm:$0xf]
      %v2716 = vld [vmem:[%s4 + $0x18] sm:$0xf]
      %v2717 = vld [vmem:[%s4 + $0x1c] sm:$0xf]
      %v2718 = vld [vmem:[%s4 + $0x20] sm:$0xf]
      %v2719 = vld [vmem:[%s4 + $0x24] sm:$0xf]
      %v2720 = vld [vmem:[%s4 + $0x28] sm:$0xf]
      %v2721 = vld [vmem:[%s4 + $0x2c] sm:$0xf]
      %v2722 = vld [vmem:[%s4 + $0x30] sm:$0xf]
      %v2723 = vld [vmem:[%s4 + $0x34] sm:$0xf]
      %v2724 = vld [vmem:[%s4 + $0x38] sm:$0xf]
      %v2725 = vld [vmem:[%s4 + $0x3c] sm:$0xf]
      %v2726 = vld [vmem:[%s4 + $0x40] sm:$0xf]
      %v2727 = vld [vmem:[%s4 + $0x44] sm:$0xf]
      %v2728 = vld [vmem:[%s4 + $0x48] sm:$0xf]
      %v2729 = vld [vmem:[%s4 + $0x4c] sm:$0xf]
      %v2730 = vld [vmem:[%s4 + $0x50] sm:$0xf]
      %v2731 = vld [vmem:[%s4 + $0x54] sm:$0xf]
      %v2732 = vld [vmem:[%s4 + $0x58] sm:$0xf]
      %v2733 = vld [vmem:[%s4 + $0x5c] sm:$0xf]
      %v2734 = vld [vmem:[%s4 + $0x60] sm:$0xf]
      %v2735 = vld [vmem:[%s4 + $0x64] sm:$0xf]
      %v2736 = vld [vmem:[%s4 + $0x68] sm:$0xf]
      %v2737 = vld [vmem:[%s4 + $0x6c] sm:$0xf]
      %v2738 = vld [vmem:[%s4 + $0x70] sm:$0xf]
      %v2739 = vld [vmem:[%s4 + $0x74] sm:$0xf]
      %v2740 = vld [vmem:[%s4 + $0x78] sm:$0xf]
      %v2741 = vld [vmem:[%s4 + $0x7c] sm:$0xf]
      %v2742 = vld [vmem:[%s4 + $0x80] sm:$0xf]
      %v2743 = vld [vmem:[%s4 + $0x84] sm:$0xf]
      %v2744 = vld [vmem:[%s4 + $0x88] sm:$0xf]
      %v2745 = vld [vmem:[%s4 + $0x8c] sm:$0xf]
      %v2746 = vld [vmem:[%s4 + $0x90] sm:$0xf]
      %v2747 = vld [vmem:[%s4 + $0x94] sm:$0xf]
      %v2748 = vld [vmem:[%s4 + $0x98] sm:$0xf]
      %v2749 = vld [vmem:[%s4 + $0x9c] sm:$0xf]
      %v2750 = vld [vmem:[%s4 + $0xa0] sm:$0xf]
      %v2751 = vld [vmem:[%s4 + $0xa4] sm:$0xf]
      %v2752 = vld [vmem:[%s4 + $0xa8] sm:$0xf]
      %v2753 = vld [vmem:[%s4 + $0xac] sm:$0xf]
      %v2754 = vld [vmem:[%s4 + $0xb0] sm:$0xf]
      %v2755 = vld [vmem:[%s4 + $0xb4] sm:$0xf]
      %v2756 = vld [vmem:[%s4 + $0xb8] sm:$0xf]
      %v2757 = vld [vmem:[%s4 + $0xbc] sm:$0xf]
      %v2758 = vld [vmem:[%s4 + $0xc0] sm:$0xf]
      %v2759 = vld [vmem:[%s4 + $0xc4] sm:$0xf]
      %v2760 = vld [vmem:[%s4 + $0xc8] sm:$0xf]
      %v2761 = vld [vmem:[%s4 + $0xcc] sm:$0xf]
      %v2762 = vld [vmem:[%s4 + $0xd0] sm:$0xf]
      %v2763 = vld [vmem:[%s4 + $0xd4] sm:$0xf]
      %v2764 = vld [vmem:[%s4 + $0xd8] sm:$0xf]
      %v2765 = vld [vmem:[%s4 + $0xdc] sm:$0xf]
      %v2766 = vld [vmem:[%s4 + $0xe0] sm:$0xf]
      %v2767 = vld [vmem:[%s4 + $0xe4] sm:$0xf]
      %v2768 = vld [vmem:[%s4 + $0xe8] sm:$0xf]
      %v2769 = vld [vmem:[%s4 + $0xec] sm:$0xf]
      %v2770 = vld [vmem:[%s4 + $0xf0] sm:$0xf]
      %v2771 = vld [vmem:[%s4 + $0xf4] sm:$0xf]
      %v2772 = vld [vmem:[%s4 + $0xf8] sm:$0xf]
      %v2773 = vld [vmem:[%s4 + $0xfc] sm:$0xf]
      %v2774 = vld [vmem:[%s4 + $0x100] sm:$0xf]
      %v2775 = vld [vmem:[%s4 + $0x104] sm:$0xf]
      %v2776 = vld [vmem:[%s4 + $0x108] sm:$0xf]
      %v2777 = vld [vmem:[%s4 + $0x10c] sm:$0xf]
      %v2778 = vld [vmem:[%s4 + $0x110] sm:$0xf]
      %v2779 = vld [vmem:[%s4 + $0x114] sm:$0xf]
      %v2780 = vld [vmem:[%s4 + $0x118] sm:$0xf]
      %v2781 = vld [vmem:[%s4 + $0x11c] sm:$0xf]
      %v2782 = vld [vmem:[%s4 + $0x120] sm:$0xf]
      %v2783 = vld [vmem:[%s4 + $0x124] sm:$0xf]
      %v2784 = vld [vmem:[%s4 + $0x128] sm:$0xf]
      %v2785 = vld [vmem:[%s4 + $0x12c] sm:$0xf]
      %v2786 = vld [vmem:[%s4 + $0x130] sm:$0xf]
      %v2787 = vld [vmem:[%s4 + $0x134] sm:$0xf]
      %v2788 = vld [vmem:[%s4 + $0x138] sm:$0xf]
      %v2789 = vld [vmem:[%s4 + $0x13c] sm:$0xf]
      %v2790 = vld [vmem:[%s4 + $0x140] sm:$0xf]
      %v2791 = vld [vmem:[%s4 + $0x144] sm:$0xf]
      %v2792 = vld [vmem:[%s4 + $0x148] sm:$0xf]
      %v2793 = vld [vmem:[%s4 + $0x14c] sm:$0xf]
      %v2794 = vld [vmem:[%s4 + $0x150] sm:$0xf]
      %v2795 = vld [vmem:[%s4 + $0x154] sm:$0xf]
      %v2796 = vld [vmem:[%s4 + $0x158] sm:$0xf]
      %v2797 = vld [vmem:[%s4 + $0x15c] sm:$0xf]
      %v2798 = vld [vmem:[%s4 + $0x160] sm:$0xf]
      %v2799 = vld [vmem:[%s4 + $0x164] sm:$0xf]
      %v2800 = vld [vmem:[%s4 + $0x168] sm:$0xf]
      %v2801 = vld [vmem:[%s4 + $0x16c] sm:$0xf]
      %v2802 = vld [vmem:[%s4 + $0x170] sm:$0xf]
      %v2803 = vld [vmem:[%s4 + $0x174] sm:$0xf]
      %v2804 = vld [vmem:[%s4 + $0x178] sm:$0xf]
      %v2805 = vld [vmem:[%s4 + $0x17c] sm:$0xf]
      %v2806 = vld [vmem:[%s4 + $0x180] sm:$0xf]
      %v2807 = vld [vmem:[%s4 + $0x184] sm:$0xf]
      %v2808 = vld [vmem:[%s4 + $0x188] sm:$0xf]
      %v2809 = vld [vmem:[%s4 + $0x18c] sm:$0xf]
      %v2810 = vld [vmem:[%s4 + $0x190] sm:$0xf]
      %v2811 = vld [vmem:[%s4 + $0x194] sm:$0xf]
      %v2812 = vld [vmem:[%s4 + $0x198] sm:$0xf]
      %v2813 = vld [vmem:[%s4 + $0x19c] sm:$0xf]
      %v2814 = vld [vmem:[%s4 + $0x1a0] sm:$0xf]
      %v2815 = vld [vmem:[%s4 + $0x1a4] sm:$0xf]
      %v2816 = vld [vmem:[%s4 + $0x1a8] sm:$0xf]
      %v2817 = vld [vmem:[%s4 + $0x1ac] sm:$0xf]
      %v2818 = vld [vmem:[%s4 + $0x1b0] sm:$0xf]
      %v2819 = vld [vmem:[%s4 + $0x1b4] sm:$0xf]
      %v2820 = vld [vmem:[%s4 + $0x1b8] sm:$0xf]
      %v2821 = vld [vmem:[%s4 + $0x1bc] sm:$0xf]
      %v2822 = vld [vmem:[%s4 + $0x1c0] sm:$0xf]
      %v2823 = vld [vmem:[%s4 + $0x1c4] sm:$0xf]
      %v2824 = vld [vmem:[%s4 + $0x1c8] sm:$0xf]
      %v2825 = vld [vmem:[%s4 + $0x1cc] sm:$0xf]
      %v2826 = vld [vmem:[%s4 + $0x1d0] sm:$0xf]
      %v2827 = vld [vmem:[%s4 + $0x1d4] sm:$0xf]
      %v2828 = vld [vmem:[%s4 + $0x1d8] sm:$0xf]
      %v2829 = vld [vmem:[%s4 + $0x1dc] sm:$0xf]
      %v2830 = vld [vmem:[%s4 + $0x1e0] sm:$0xf]
      %v2831 = vld [vmem:[%s4 + $0x1e4] sm:$0xf]
      %v2832 = vld [vmem:[%s4 + $0x1e8] sm:$0xf]
      %v2833 = vld [vmem:[%s4 + $0x1ec] sm:$0xf]
      %v2834 = vld [vmem:[%s4 + $0x1f0] sm:$0xf]
      %v2835 = vld [vmem:[%s4 + $0x1f4] sm:$0xf]
      %v2836 = vld [vmem:[%s4 + $0x1f8] sm:$0xf]
      %v2837 = vld [vmem:[%s4 + $0x1fc] sm:$0xf]
      %v2838 = vld [vmem:[%s4 + $0x200] sm:$0xf]
      %v2839 = vld [vmem:[%s4 + $0x204] sm:$0xf]
      %v2840 = vld [vmem:[%s4 + $0x208] sm:$0xf]
      %v2841 = vld [vmem:[%s4 + $0x20c] sm:$0xf]
      %v2842 = vld [vmem:[%s4 + $0x210] sm:$0xf]
      %v2843 = vld [vmem:[%s4 + $0x214] sm:$0xf]
      %v2844 = vld [vmem:[%s4 + $0x218] sm:$0xf]
      %v2845 = vld [vmem:[%s4 + $0x21c] sm:$0xf]
      %v2846 = vld [vmem:[%s4 + $0x220] sm:$0xf]
      %v2847 = vld [vmem:[%s4 + $0x224] sm:$0xf]
      %v2848 = vld [vmem:[%s4 + $0x228] sm:$0xf]
      %v2849 = vld [vmem:[%s4 + $0x22c] sm:$0xf]
      %v2850 = vld [vmem:[%s4 + $0x230] sm:$0xf]
      %v2851 = vld [vmem:[%s4 + $0x234] sm:$0xf]
      %v2852 = vld [vmem:[%s4 + $0x238] sm:$0xf]
      %v2853 = vld [vmem:[%s4 + $0x23c] sm:$0xf]
      %v3014 = vunpack.c.l.b16 %v2550
      %v3015 = vunpack.c.h.b16 %v2550
      %v3016 = vunpack.c.l.b16 %v2551
      %v3017 = vunpack.c.h.b16 %v2551
      %v3018 = vunpack.c.l.b16 %v2552
      %v3019 = vunpack.c.h.b16 %v2552
      %v3020 = vunpack.c.l.b16 %v2553
      %v3021 = vunpack.c.h.b16 %v2553
      %v3022 = vunpack.c.l.b16 %v2554
      %v3023 = vunpack.c.l.b16 %v2555
      %v3024 = vunpack.c.h.b16 %v2555
      %v3025 = vunpack.c.l.b16 %v2556
      %v3026 = vunpack.c.h.b16 %v2556
      %v3027 = vunpack.c.l.b16 %v2557
      %v3028 = vunpack.c.h.b16 %v2557
      %v3029 = vunpack.c.l.b16 %v2558
      %v3030 = vunpack.c.h.b16 %v2558
      %v3031 = vunpack.c.l.b16 %v2559
      %v3032 = vunpack.c.l.b16 %v2560
      %v3033 = vunpack.c.h.b16 %v2560
      %v3034 = vunpack.c.l.b16 %v2561
      %v3035 = vunpack.c.h.b16 %v2561
      %v3036 = vunpack.c.l.b16 %v2562
      %v3037 = vunpack.c.h.b16 %v2562
      %v3038 = vunpack.c.l.b16 %v2563
      %v3039 = vunpack.c.h.b16 %v2563
      %v3040 = vunpack.c.l.b16 %v2564
      %v3041 = vunpack.c.l.b16 %v2565
      %v3042 = vunpack.c.h.b16 %v2565
      %v3043 = vunpack.c.l.b16 %v2566
      %v3044 = vunpack.c.h.b16 %v2566
      %v3045 = vunpack.c.l.b16 %v2567
      %v3046 = vunpack.c.h.b16 %v2567
      %v3047 = vunpack.c.l.b16 %v2568
      %v3048 = vunpack.c.h.b16 %v2568
      %v3049 = vunpack.c.l.b16 %v2569
      %v3050 = vunpack.c.l.b16 %v2570
      %v3051 = vunpack.c.h.b16 %v2570
      %v3052 = vunpack.c.l.b16 %v2571
      %v3053 = vunpack.c.h.b16 %v2571
      %v3054 = vunpack.c.l.b16 %v2572
      %v3055 = vunpack.c.h.b16 %v2572
      %v3056 = vunpack.c.l.b16 %v2573
      %v3057 = vunpack.c.h.b16 %v2573
      %v3058 = vunpack.c.l.b16 %v2574
      %v3059 = vunpack.c.l.b16 %v2575
      %v3060 = vunpack.c.h.b16 %v2575
      %v3061 = vunpack.c.l.b16 %v2576
      %v3062 = vunpack.c.h.b16 %v2576
      %v3063 = vunpack.c.l.b16 %v2577
      %v3064 = vunpack.c.h.b16 %v2577
      %v3065 = vunpack.c.l.b16 %v2578
      %v3066 = vunpack.c.h.b16 %v2578
      %v3067 = vunpack.c.l.b16 %v2579
      %v3068 = vunpack.c.l.b16 %v2580
      %v3069 = vunpack.c.h.b16 %v2580
      %v3070 = vunpack.c.l.b16 %v2581
      %v3071 = vunpack.c.h.b16 %v2581
      %v3072 = vunpack.c.l.b16 %v2582
      %v3073 = vunpack.c.h.b16 %v2582
      %v3074 = vunpack.c.l.b16 %v2583
      %v3075 = vunpack.c.h.b16 %v2583
      %v3076 = vunpack.c.l.b16 %v2584
      %v3077 = vunpack.c.l.b16 %v2585
      %v3078 = vunpack.c.h.b16 %v2585
      %v3079 = vunpack.c.l.b16 %v2586
      %v3080 = vunpack.c.h.b16 %v2586
      %v3081 = vunpack.c.l.b16 %v2587
      %v3082 = vunpack.c.h.b16 %v2587
      %v3083 = vunpack.c.l.b16 %v2588
      %v3084 = vunpack.c.h.b16 %v2588
      %v3085 = vunpack.c.l.b16 %v2589
      %v3086 = vunpack.c.l.b16 %v2590
      %v3087 = vunpack.c.h.b16 %v2590
      %v3088 = vunpack.c.l.b16 %v2591
      %v3089 = vunpack.c.h.b16 %v2591
      %v3090 = vunpack.c.l.b16 %v2592
      %v3091 = vunpack.c.h.b16 %v2592
      %v3092 = vunpack.c.l.b16 %v2593
      %v3093 = vunpack.c.h.b16 %v2593
      %v3094 = vunpack.c.l.b16 %v2594
      %v3095 = vunpack.c.l.b16 %v2595
      %v3096 = vunpack.c.h.b16 %v2595
      %v3097 = vunpack.c.l.b16 %v2596
      %v3098 = vunpack.c.h.b16 %v2596
      %v3099 = vunpack.c.l.b16 %v2597
      %v3100 = vunpack.c.h.b16 %v2597
      %v3101 = vunpack.c.l.b16 %v2598
      %v3102 = vunpack.c.h.b16 %v2598
      %v3103 = vunpack.c.l.b16 %v2599
      %v3104 = vunpack.c.l.b16 %v2600
      %v3105 = vunpack.c.h.b16 %v2600
      %v3106 = vunpack.c.l.b16 %v2601
      %v3107 = vunpack.c.h.b16 %v2601
      %v3108 = vunpack.c.l.b16 %v2602
      %v3109 = vunpack.c.h.b16 %v2602
      %v3110 = vunpack.c.l.b16 %v2603
      %v3111 = vunpack.c.h.b16 %v2603
      %v3112 = vunpack.c.l.b16 %v2604
      %v3113 = vunpack.c.l.b16 %v2605
      %v3114 = vunpack.c.h.b16 %v2605
      %v3115 = vunpack.c.l.b16 %v2606
      %v3116 = vunpack.c.h.b16 %v2606
      %v3117 = vunpack.c.l.b16 %v2607
      %v3118 = vunpack.c.h.b16 %v2607
      %v3119 = vunpack.c.l.b16 %v2608
      %v3120 = vunpack.c.h.b16 %v2608
      %v3121 = vunpack.c.l.b16 %v2609
      %v3122 = vunpack.c.l.b16 %v2610
      %v3123 = vunpack.c.h.b16 %v2610
      %v3124 = vunpack.c.l.b16 %v2611
      %v3125 = vunpack.c.h.b16 %v2611
      %v3126 = vunpack.c.l.b16 %v2612
      %v3127 = vunpack.c.h.b16 %v2612
      %v3128 = vunpack.c.l.b16 %v2613
      %v3129 = vunpack.c.h.b16 %v2613
      %v3130 = vunpack.c.l.b16 %v2614
      %v3131 = vunpack.c.l.b16 %v2615
      %v3132 = vunpack.c.h.b16 %v2615
      %v3133 = vunpack.c.l.b16 %v2616
      %v3134 = vunpack.c.h.b16 %v2616
      %v3135 = vunpack.c.l.b16 %v2617
      %v3136 = vunpack.c.h.b16 %v2617
      %v3137 = vunpack.c.l.b16 %v2618
      %v3138 = vunpack.c.h.b16 %v2618
      %v3139 = vunpack.c.l.b16 %v2619
      %v3140 = vunpack.c.l.b16 %v2620
      %v3141 = vunpack.c.h.b16 %v2620
      %v3142 = vunpack.c.l.b16 %v2621
      %v3143 = vunpack.c.h.b16 %v2621
      %v3144 = vunpack.c.l.b16 %v2622
      %v3145 = vunpack.c.h.b16 %v2622
      %v3146 = vunpack.c.l.b16 %v2623
      %v3147 = vunpack.c.h.b16 %v2623
      %v3148 = vunpack.c.l.b16 %v2624
      %v3149 = vunpack.c.l.b16 %v2625
      %v3150 = vunpack.c.h.b16 %v2625
      %v3151 = vunpack.c.l.b16 %v2626
      %v3152 = vunpack.c.h.b16 %v2626
      %v3153 = vunpack.c.l.b16 %v2627
      %v3154 = vunpack.c.h.b16 %v2627
      %v3155 = vunpack.c.l.b16 %v2628
      %v3156 = vunpack.c.h.b16 %v2628
      %v3157 = vunpack.c.l.b16 %v2629
      %v3158 = vunpack.c.l.b16 %v2630
      %v3159 = vunpack.c.h.b16 %v2630
      %v3160 = vunpack.c.l.b16 %v2631
      %v3161 = vunpack.c.h.b16 %v2631
      %v3162 = vunpack.c.l.b16 %v2632
      %v3163 = vunpack.c.h.b16 %v2632
      %v3164 = vunpack.c.l.b16 %v2633
      %v3165 = vunpack.c.h.b16 %v2633
      %v3166 = vunpack.c.l.b16 %v2634
      %v3167 = vunpack.c.l.b16 %v2635
      %v3168 = vunpack.c.h.b16 %v2635
      %v3169 = vunpack.c.l.b16 %v2636
      %v3170 = vunpack.c.h.b16 %v2636
      %v3171 = vunpack.c.l.b16 %v2637
      %v3172 = vunpack.c.h.b16 %v2637
      %v3173 = vunpack.c.l.b16 %v2638
      %v3174 = vunpack.c.h.b16 %v2638
      %v3175 = vunpack.c.l.b16 %v2639
      %v3176 = vunpack.c.l.b16 %v2640
      %v3177 = vunpack.c.h.b16 %v2640
      %v3178 = vunpack.c.l.b16 %v2641
      %v3179 = vunpack.c.h.b16 %v2641
      %v3180 = vunpack.c.l.b16 %v2642
      %v3181 = vunpack.c.h.b16 %v2642
      %v3182 = vunpack.c.l.b16 %v2643
      %v3183 = vunpack.c.h.b16 %v2643
      %v3184 = vunpack.c.l.b16 %v2644
      %v3185 = vunpack.c.l.b16 %v2645
      %v3186 = vunpack.c.h.b16 %v2645
      %v3187 = vunpack.c.l.b16 %v2646
      %v3188 = vunpack.c.h.b16 %v2646
      %v3189 = vunpack.c.l.b16 %v2647
      %v3190 = vunpack.c.h.b16 %v2647
      %v3191 = vunpack.c.l.b16 %v2648
      %v3192 = vunpack.c.h.b16 %v2648
      %v3193 = vunpack.c.l.b16 %v2649
      %v3194 = vunpack.c.l.b16 %v2650
      %v3195 = vunpack.c.h.b16 %v2650
      %v3196 = vunpack.c.l.b16 %v2651
      %v3197 = vunpack.c.h.b16 %v2651
      %v3198 = vunpack.c.l.b16 %v2652
      %v3199 = vunpack.c.h.b16 %v2652
      %v3200 = vunpack.c.l.b16 %v2653
      %v3201 = vunpack.c.h.b16 %v2653
      %v3202 = vunpack.c.l.b16 %v2654
      %v3203 = vunpack.c.l.b16 %v2655
      %v3204 = vunpack.c.h.b16 %v2655
      %v3205 = vunpack.c.l.b16 %v2656
      %v3206 = vunpack.c.h.b16 %v2656
      %v3207 = vunpack.c.l.b16 %v2657
      %v3208 = vunpack.c.h.b16 %v2657
      %v3209 = vunpack.c.l.b16 %v2658
      %v3210 = vunpack.c.h.b16 %v2658
      %v3211 = vunpack.c.l.b16 %v2659
      %v3212 = vunpack.c.l.b16 %v2660
      %v3213 = vunpack.c.h.b16 %v2660
      %v3214 = vunpack.c.l.b16 %v2661
      %v3215 = vunpack.c.h.b16 %v2661
      %v3216 = vunpack.c.l.b16 %v2662
      %v3217 = vunpack.c.h.b16 %v2662
      %v3218 = vunpack.c.l.b16 %v2663
      %v3219 = vunpack.c.h.b16 %v2663
      %v3220 = vunpack.c.l.b16 %v2664
      %v3221 = vunpack.c.l.b16 %v2665
      %v3222 = vunpack.c.h.b16 %v2665
      %v3223 = vunpack.c.l.b16 %v2666
      %v3224 = vunpack.c.h.b16 %v2666
      %v3225 = vunpack.c.l.b16 %v2667
      %v3226 = vunpack.c.h.b16 %v2667
      %v3227 = vunpack.c.l.b16 %v2668
      %v3228 = vunpack.c.h.b16 %v2668
      %v3229 = vunpack.c.l.b16 %v2669
      %v3230 = vunpack.c.l.b16 %v2670
      %v3231 = vunpack.c.h.b16 %v2670
      %v3232 = vunpack.c.l.b16 %v2671
      %v3233 = vunpack.c.h.b16 %v2671
      %v3234 = vunpack.c.l.b16 %v2672
      %v3235 = vunpack.c.h.b16 %v2672
      %v3236 = vunpack.c.l.b16 %v2673
      %v3237 = vunpack.c.h.b16 %v2673
      %v3238 = vunpack.c.l.b16 %v2674
      %v3239 = vunpack.c.l.b16 %v2675
      %v3240 = vunpack.c.h.b16 %v2675
      %v3241 = vunpack.c.l.b16 %v2676
      %v3242 = vunpack.c.h.b16 %v2676
      %v3243 = vunpack.c.l.b16 %v2677
      %v3244 = vunpack.c.h.b16 %v2677
      %v3245 = vunpack.c.l.b16 %v2678
      %v3246 = vunpack.c.h.b16 %v2678
      %v3247 = vunpack.c.l.b16 %v2679
      %v3248 = vunpack.c.l.b16 %v2680
      %v3249 = vunpack.c.h.b16 %v2680
      %v3250 = vunpack.c.l.b16 %v2681
      %v3251 = vunpack.c.h.b16 %v2681
      %v3252 = vunpack.c.l.b16 %v2682
      %v3253 = vunpack.c.h.b16 %v2682
      %v3254 = vunpack.c.l.b16 %v2683
      %v3255 = vunpack.c.h.b16 %v2683
      %v3256 = vunpack.c.l.b16 %v2684
      %v3257 = vunpack.c.l.b16 %v2685
      %v3258 = vunpack.c.h.b16 %v2685
      %v3259 = vunpack.c.l.b16 %v2686
      %v3260 = vunpack.c.h.b16 %v2686
      %v3261 = vunpack.c.l.b16 %v2687
      %v3262 = vunpack.c.h.b16 %v2687
      %v3263 = vunpack.c.l.b16 %v2688
      %v3264 = vunpack.c.h.b16 %v2688
      %v3265 = vunpack.c.l.b16 %v2689
      %v3266 = vunpack.c.l.b16 %v2690
      %v3267 = vunpack.c.h.b16 %v2690
      %v3268 = vunpack.c.l.b16 %v2691
      %v3269 = vunpack.c.h.b16 %v2691
      %v3270 = vunpack.c.l.b16 %v2692
      %v3271 = vunpack.c.h.b16 %v2692
      %v3272 = vunpack.c.l.b16 %v2693
      %v3273 = vunpack.c.h.b16 %v2693
      %v3274 = vunpack.c.l.b16 %v2694
      %v3275 = vunpack.c.l.b16 %v2695
      %v3276 = vunpack.c.h.b16 %v2695
      %v3277 = vunpack.c.l.b16 %v2696
      %v3278 = vunpack.c.h.b16 %v2696
      %v3279 = vunpack.c.l.b16 %v2697
      %v3280 = vunpack.c.h.b16 %v2697
      %v3281 = vunpack.c.l.b16 %v2698
      %v3282 = vunpack.c.h.b16 %v2698
      %v3283 = vunpack.c.l.b16 %v2699
      %v3284 = vunpack.c.l.b16 %v2700
      %v3285 = vunpack.c.h.b16 %v2700
      %v3286 = vunpack.c.l.b16 %v2701
      %v3287 = vunpack.c.h.b16 %v2701
      %v3288 = vunpack.c.l.b16 %v2702
      %v3289 = vunpack.c.h.b16 %v2702
      %v3290 = vunpack.c.l.b16 %v2703
      %v3291 = vunpack.c.h.b16 %v2703
      %v3292 = vunpack.c.l.b16 %v2704
      %v3293 = vunpack.c.l.b16 %v2705
      %v3294 = vunpack.c.h.b16 %v2705
      %v3295 = vunpack.c.l.b16 %v2706
      %v3296 = vunpack.c.h.b16 %v2706
      %v3297 = vunpack.c.l.b16 %v2707
      %v3298 = vunpack.c.h.b16 %v2707
      %v3299 = vunpack.c.l.b16 %v2708
      %v3300 = vunpack.c.h.b16 %v2708
      %v3301 = vunpack.c.l.b16 %v2709
      %v3302 = vpack.c.b16 %v3023, %v3014
      %v3303 = vpack.c.b16 %v3024, %v3015
      %v3304 = vpack.c.b16 %v3025, %v3016
      %v3305 = vpack.c.b16 %v3026, %v3017
      %v3306 = vpack.c.b16 %v3027, %v3018
      %v3307 = vpack.c.b16 %v3028, %v3019
      %v3308 = vpack.c.b16 %v3029, %v3020
      %v3309 = vpack.c.b16 %v3030, %v3021
      %v3310 = vpack.c.b16 %v3031, %v3022
      %v3311 = vpack.c.b16 %v3041, %v3032
      %v3312 = vpack.c.b16 %v3042, %v3033
      %v3313 = vpack.c.b16 %v3043, %v3034
      %v3314 = vpack.c.b16 %v3044, %v3035
      %v3315 = vpack.c.b16 %v3045, %v3036
      %v3316 = vpack.c.b16 %v3046, %v3037
      %v3317 = vpack.c.b16 %v3047, %v3038
      %v3318 = vpack.c.b16 %v3048, %v3039
      %v3319 = vpack.c.b16 %v3049, %v3040
      %v3320 = vpack.c.b16 %v3059, %v3050
      %v3321 = vpack.c.b16 %v3060, %v3051
      %v3322 = vpack.c.b16 %v3061, %v3052
      %v3323 = vpack.c.b16 %v3062, %v3053
      %v3324 = vpack.c.b16 %v3063, %v3054
      %v3325 = vpack.c.b16 %v3064, %v3055
      %v3326 = vpack.c.b16 %v3065, %v3056
      %v3327 = vpack.c.b16 %v3066, %v3057
      %v3328 = vpack.c.b16 %v3067, %v3058
      %v3329 = vpack.c.b16 %v3077, %v3068
      %v3330 = vpack.c.b16 %v3078, %v3069
      %v3331 = vpack.c.b16 %v3079, %v3070
      %v3332 = vpack.c.b16 %v3080, %v3071
      %v3333 = vpack.c.b16 %v3081, %v3072
      %v3334 = vpack.c.b16 %v3082, %v3073
      %v3335 = vpack.c.b16 %v3083, %v3074
      %v3336 = vpack.c.b16 %v3084, %v3075
      %v3337 = vpack.c.b16 %v3085, %v3076
      %v3338 = vpack.c.b16 %v3095, %v3086
      %v3339 = vpack.c.b16 %v3096, %v3087
      %v3340 = vpack.c.b16 %v3097, %v3088
      %v3341 = vpack.c.b16 %v3098, %v3089
      %v3342 = vpack.c.b16 %v3099, %v3090
      %v3343 = vpack.c.b16 %v3100, %v3091
      %v3344 = vpack.c.b16 %v3101, %v3092
      %v3345 = vpack.c.b16 %v3102, %v3093
      %v3346 = vpack.c.b16 %v3103, %v3094
      %v3347 = vpack.c.b16 %v3113, %v3104
      %v3348 = vpack.c.b16 %v3114, %v3105
      %v3349 = vpack.c.b16 %v3115, %v3106
      %v3350 = vpack.c.b16 %v3116, %v3107
      %v3351 = vpack.c.b16 %v3117, %v3108
      %v3352 = vpack.c.b16 %v3118, %v3109
      %v3353 = vpack.c.b16 %v3119, %v3110
      %v3354 = vpack.c.b16 %v3120, %v3111
      %v3355 = vpack.c.b16 %v3121, %v3112
      %v3356 = vpack.c.b16 %v3131, %v3122
      %v3357 = vpack.c.b16 %v3132, %v3123
      %v3358 = vpack.c.b16 %v3133, %v3124
      %v3359 = vpack.c.b16 %v3134, %v3125
      %v3360 = vpack.c.b16 %v3135, %v3126
      %v3361 = vpack.c.b16 %v3136, %v3127
      %v3362 = vpack.c.b16 %v3137, %v3128
      %v3363 = vpack.c.b16 %v3138, %v3129
      %v3364 = vpack.c.b16 %v3139, %v3130
      %v3365 = vpack.c.b16 %v3149, %v3140
      %v3366 = vpack.c.b16 %v3150, %v3141
      %v3367 = vpack.c.b16 %v3151, %v3142
      %v3368 = vpack.c.b16 %v3152, %v3143
      %v3369 = vpack.c.b16 %v3153, %v3144
      %v3370 = vpack.c.b16 %v3154, %v3145
      %v3371 = vpack.c.b16 %v3155, %v3146
      %v3372 = vpack.c.b16 %v3156, %v3147
      %v3373 = vpack.c.b16 %v3157, %v3148
      %v3374 = vpack.c.b16 %v3167, %v3158
      %v3375 = vpack.c.b16 %v3168, %v3159
      %v3376 = vpack.c.b16 %v3169, %v3160
      %v3377 = vpack.c.b16 %v3170, %v3161
      %v3378 = vpack.c.b16 %v3171, %v3162
      %v3379 = vpack.c.b16 %v3172, %v3163
      %v3380 = vpack.c.b16 %v3173, %v3164
      %v3381 = vpack.c.b16 %v3174, %v3165
      %v3382 = vpack.c.b16 %v3175, %v3166
      %v3383 = vpack.c.b16 %v3185, %v3176
      %v3384 = vpack.c.b16 %v3186, %v3177
      %v3385 = vpack.c.b16 %v3187, %v3178
      %v3386 = vpack.c.b16 %v3188, %v3179
      %v3387 = vpack.c.b16 %v3189, %v3180
      %v3388 = vpack.c.b16 %v3190, %v3181
      %v3389 = vpack.c.b16 %v3191, %v3182
      %v3390 = vpack.c.b16 %v3192, %v3183
      %v3391 = vpack.c.b16 %v3193, %v3184
      %v3392 = vpack.c.b16 %v3203, %v3194
      %v3393 = vpack.c.b16 %v3204, %v3195
      %v3394 = vpack.c.b16 %v3205, %v3196
      %v3395 = vpack.c.b16 %v3206, %v3197
      %v3396 = vpack.c.b16 %v3207, %v3198
      %v3397 = vpack.c.b16 %v3208, %v3199
      %v3398 = vpack.c.b16 %v3209, %v3200
      %v3399 = vpack.c.b16 %v3210, %v3201
      %v3400 = vpack.c.b16 %v3211, %v3202
      %v3401 = vpack.c.b16 %v3221, %v3212
      %v3402 = vpack.c.b16 %v3222, %v3213
      %v3403 = vpack.c.b16 %v3223, %v3214
      %v3404 = vpack.c.b16 %v3224, %v3215
      %v3405 = vpack.c.b16 %v3225, %v3216
      %v3406 = vpack.c.b16 %v3226, %v3217
      %v3407 = vpack.c.b16 %v3227, %v3218
      %v3408 = vpack.c.b16 %v3228, %v3219
      %v3409 = vpack.c.b16 %v3229, %v3220
      %v3410 = vpack.c.b16 %v3239, %v3230
      %v3411 = vpack.c.b16 %v3240, %v3231
      %v3412 = vpack.c.b16 %v3241, %v3232
      %v3413 = vpack.c.b16 %v3242, %v3233
      %v3414 = vpack.c.b16 %v3243, %v3234
      %v3415 = vpack.c.b16 %v3244, %v3235
      %v3416 = vpack.c.b16 %v3245, %v3236
      %v3417 = vpack.c.b16 %v3246, %v3237
      %v3418 = vpack.c.b16 %v3247, %v3238
      %v3419 = vpack.c.b16 %v3257, %v3248
      %v3420 = vpack.c.b16 %v3258, %v3249
      %v3421 = vpack.c.b16 %v3259, %v3250
      %v3422 = vpack.c.b16 %v3260, %v3251
      %v3423 = vpack.c.b16 %v3261, %v3252
      %v3424 = vpack.c.b16 %v3262, %v3253
      %v3425 = vpack.c.b16 %v3263, %v3254
      %v3426 = vpack.c.b16 %v3264, %v3255
      %v3427 = vpack.c.b16 %v3265, %v3256
      %v3428 = vpack.c.b16 %v3275, %v3266
      %v3429 = vpack.c.b16 %v3276, %v3267
      %v3430 = vpack.c.b16 %v3277, %v3268
      %v3431 = vpack.c.b16 %v3278, %v3269
      %v3432 = vpack.c.b16 %v3279, %v3270
      %v3433 = vpack.c.b16 %v3280, %v3271
      %v3434 = vpack.c.b16 %v3281, %v3272
      %v3435 = vpack.c.b16 %v3282, %v3273
      %v3436 = vpack.c.b16 %v3283, %v3274
      %v3437 = vpack.c.b16 %v3293, %v3284
      %v3438 = vpack.c.b16 %v3294, %v3285
      %v3439 = vpack.c.b16 %v3295, %v3286
      %v3440 = vpack.c.b16 %v3296, %v3287
      %v3441 = vpack.c.b16 %v3297, %v3288
      %v3442 = vpack.c.b16 %v3298, %v3289
      %v3443 = vpack.c.b16 %v3299, %v3290
      %v3444 = vpack.c.b16 %v3300, %v3291
      %v3445 = vpack.c.b16 %v3301, %v3292
      %v3734 = vunpack.c.l.b16 %v2710
      %v3735 = vunpack.c.l.b16 %v2711
      %v3736 = vunpack.c.l.b16 %v2712
      %v3737 = vunpack.c.l.b16 %v2713
      %v3738 = vunpack.c.l.b16 %v2714
      %v3739 = vunpack.c.l.b16 %v2715
      %v3740 = vunpack.c.l.b16 %v2716
      %v3741 = vunpack.c.l.b16 %v2717
      %v3742 = vunpack.c.l.b16 %v2718
      %v3743 = vunpack.c.l.b16 %v2719
      %v3744 = vunpack.c.l.b16 %v2720
      %v3745 = vunpack.c.l.b16 %v2721
      %v3746 = vunpack.c.l.b16 %v2722
      %v3747 = vunpack.c.l.b16 %v2723
      %v3748 = vunpack.c.l.b16 %v2724
      %v3749 = vunpack.c.l.b16 %v2725
      %v3750 = vunpack.c.l.b16 %v2726
      %v3751 = vunpack.c.l.b16 %v2727
      %v3752 = vunpack.c.l.b16 %v2728
      %v3753 = vunpack.c.l.b16 %v2729
      %v3754 = vunpack.c.l.b16 %v2730
      %v3755 = vunpack.c.l.b16 %v2731
      %v3756 = vunpack.c.l.b16 %v2732
      %v3757 = vunpack.c.l.b16 %v2733
      %v3758 = vunpack.c.l.b16 %v2734
      %v3759 = vunpack.c.l.b16 %v2735
      %v3760 = vunpack.c.l.b16 %v2736
      %v3761 = vunpack.c.l.b16 %v2737
      %v3762 = vunpack.c.l.b16 %v2738
      %v3763 = vunpack.c.l.b16 %v2739
      %v3764 = vunpack.c.l.b16 %v2740
      %v3765 = vunpack.c.l.b16 %v2741
      %v3766 = vunpack.c.l.b16 %v2742
      %v3767 = vunpack.c.l.b16 %v2743
      %v3768 = vunpack.c.l.b16 %v2744
      %v3769 = vunpack.c.l.b16 %v2745
      %v3770 = vunpack.c.l.b16 %v2746
      %v3771 = vunpack.c.l.b16 %v2747
      %v3772 = vunpack.c.l.b16 %v2748
      %v3773 = vunpack.c.l.b16 %v2749
      %v3774 = vunpack.c.l.b16 %v2750
      %v3775 = vunpack.c.l.b16 %v2751
      %v3776 = vunpack.c.l.b16 %v2752
      %v3777 = vunpack.c.l.b16 %v2753
      %v3778 = vunpack.c.l.b16 %v2754
      %v3779 = vunpack.c.l.b16 %v2755
      %v3780 = vunpack.c.l.b16 %v2756
      %v3781 = vunpack.c.l.b16 %v2757
      %v3782 = vunpack.c.l.b16 %v2758
      %v3783 = vunpack.c.l.b16 %v2759
      %v3784 = vunpack.c.l.b16 %v2760
      %v3785 = vunpack.c.l.b16 %v2761
      %v3786 = vunpack.c.l.b16 %v2762
      %v3787 = vunpack.c.l.b16 %v2763
      %v3788 = vunpack.c.l.b16 %v2764
      %v3789 = vunpack.c.l.b16 %v2765
      %v3790 = vunpack.c.l.b16 %v2766
      %v3791 = vunpack.c.l.b16 %v2767
      %v3792 = vunpack.c.l.b16 %v2768
      %v3793 = vunpack.c.l.b16 %v2769
      %v3794 = vunpack.c.l.b16 %v2770
      %v3795 = vunpack.c.l.b16 %v2771
      %v3796 = vunpack.c.l.b16 %v2772
      %v3797 = vunpack.c.l.b16 %v2773
      %v3798 = vunpack.c.l.b16 %v2774
      %v3799 = vunpack.c.l.b16 %v2775
      %v3800 = vunpack.c.l.b16 %v2776
      %v3801 = vunpack.c.l.b16 %v2777
      %v3802 = vunpack.c.l.b16 %v2778
      %v3803 = vunpack.c.l.b16 %v2779
      %v3804 = vunpack.c.l.b16 %v2780
      %v3805 = vunpack.c.l.b16 %v2781
      %v3806 = vunpack.c.l.b16 %v2782
      %v3807 = vunpack.c.l.b16 %v2783
      %v3808 = vunpack.c.l.b16 %v2784
      %v3809 = vunpack.c.l.b16 %v2785
      %v3810 = vunpack.c.l.b16 %v2786
      %v3811 = vunpack.c.l.b16 %v2787
      %v3812 = vunpack.c.l.b16 %v2788
      %v3813 = vunpack.c.l.b16 %v2789
      %v3814 = vunpack.c.l.b16 %v2790
      %v3815 = vunpack.c.l.b16 %v2791
      %v3816 = vunpack.c.l.b16 %v2792
      %v3817 = vunpack.c.l.b16 %v2793
      %v3818 = vunpack.c.l.b16 %v2794
      %v3819 = vunpack.c.l.b16 %v2795
      %v3820 = vunpack.c.l.b16 %v2796
      %v3821 = vunpack.c.l.b16 %v2797
      %v3822 = vunpack.c.l.b16 %v2798
      %v3823 = vunpack.c.l.b16 %v2799
      %v3824 = vunpack.c.l.b16 %v2800
      %v3825 = vunpack.c.l.b16 %v2801
      %v3826 = vunpack.c.l.b16 %v2802
      %v3827 = vunpack.c.l.b16 %v2803
      %v3828 = vunpack.c.l.b16 %v2804
      %v3829 = vunpack.c.l.b16 %v2805
      %v3830 = vunpack.c.l.b16 %v2806
      %v3831 = vunpack.c.l.b16 %v2807
      %v3832 = vunpack.c.l.b16 %v2808
      %v3833 = vunpack.c.l.b16 %v2809
      %v3834 = vunpack.c.l.b16 %v2810
      %v3835 = vunpack.c.l.b16 %v2811
      %v3836 = vunpack.c.l.b16 %v2812
      %v3837 = vunpack.c.l.b16 %v2813
      %v3838 = vunpack.c.l.b16 %v2814
      %v3839 = vunpack.c.l.b16 %v2815
      %v3840 = vunpack.c.l.b16 %v2816
      %v3841 = vunpack.c.l.b16 %v2817
      %v3842 = vunpack.c.l.b16 %v2818
      %v3843 = vunpack.c.l.b16 %v2819
      %v3844 = vunpack.c.l.b16 %v2820
      %v3845 = vunpack.c.l.b16 %v2821
      %v3846 = vunpack.c.l.b16 %v2822
      %v3847 = vunpack.c.l.b16 %v2823
      %v3848 = vunpack.c.l.b16 %v2824
      %v3849 = vunpack.c.l.b16 %v2825
      %v3850 = vunpack.c.l.b16 %v2826
      %v3851 = vunpack.c.l.b16 %v2827
      %v3852 = vunpack.c.l.b16 %v2828
      %v3853 = vunpack.c.l.b16 %v2829
      %v3854 = vunpack.c.l.b16 %v2830
      %v3855 = vunpack.c.l.b16 %v2831
      %v3856 = vunpack.c.l.b16 %v2832
      %v3857 = vunpack.c.l.b16 %v2833
      %v3858 = vunpack.c.l.b16 %v2834
      %v3859 = vunpack.c.l.b16 %v2835
      %v3860 = vunpack.c.l.b16 %v2836
      %v3861 = vunpack.c.l.b16 %v2837
      %v3862 = vunpack.c.l.b16 %v2838
      %v3863 = vunpack.c.l.b16 %v2839
      %v3864 = vunpack.c.l.b16 %v2840
      %v3865 = vunpack.c.l.b16 %v2841
      %v3866 = vunpack.c.l.b16 %v2842
      %v3867 = vunpack.c.l.b16 %v2843
      %v3868 = vunpack.c.l.b16 %v2844
      %v3869 = vunpack.c.l.b16 %v2845
      %v3870 = vunpack.c.l.b16 %v2846
      %v3871 = vunpack.c.l.b16 %v2847
      %v3872 = vunpack.c.l.b16 %v2848
      %v3873 = vunpack.c.l.b16 %v2849
      %v3874 = vunpack.c.l.b16 %v2850
      %v3875 = vunpack.c.l.b16 %v2851
      %v3876 = vunpack.c.l.b16 %v2852
      %v3877 = vunpack.c.l.b16 %v2853
      %v3878 = vpack.c.b16 %v3735, %v3734
      %v3879 = vpack.c.b16 %v3737, %v3736
      %v3880 = vpack.c.b16 %v3739, %v3738
      %v3881 = vpack.c.b16 %v3741, %v3740
      %v3882 = vpack.c.b16 %v3743, %v3742
      %v3883 = vpack.c.b16 %v3745, %v3744
      %v3884 = vpack.c.b16 %v3747, %v3746
      %v3885 = vpack.c.b16 %v3749, %v3748
      %v3886 = vpack.c.b16 %v3751, %v3750
      %v3887 = vpack.c.b16 %v3753, %v3752
      %v3888 = vpack.c.b16 %v3755, %v3754
      %v3889 = vpack.c.b16 %v3757, %v3756
      %v3890 = vpack.c.b16 %v3759, %v3758
      %v3891 = vpack.c.b16 %v3761, %v3760
      %v3892 = vpack.c.b16 %v3763, %v3762
      %v3893 = vpack.c.b16 %v3765, %v3764
      %v3894 = vpack.c.b16 %v3767, %v3766
      %v3895 = vpack.c.b16 %v3769, %v3768
      %v3896 = vpack.c.b16 %v3771, %v3770
      %v3897 = vpack.c.b16 %v3773, %v3772
      %v3898 = vpack.c.b16 %v3775, %v3774
      %v3899 = vpack.c.b16 %v3777, %v3776
      %v3900 = vpack.c.b16 %v3779, %v3778
      %v3901 = vpack.c.b16 %v3781, %v3780
      %v3902 = vpack.c.b16 %v3783, %v3782
      %v3903 = vpack.c.b16 %v3785, %v3784
      %v3904 = vpack.c.b16 %v3787, %v3786
      %v3905 = vpack.c.b16 %v3789, %v3788
      %v3906 = vpack.c.b16 %v3791, %v3790
      %v3907 = vpack.c.b16 %v3793, %v3792
      %v3908 = vpack.c.b16 %v3795, %v3794
      %v3909 = vpack.c.b16 %v3797, %v3796
      %v3910 = vpack.c.b16 %v3799, %v3798
      %v3911 = vpack.c.b16 %v3801, %v3800
      %v3912 = vpack.c.b16 %v3803, %v3802
      %v3913 = vpack.c.b16 %v3805, %v3804
      %v3914 = vpack.c.b16 %v3807, %v3806
      %v3915 = vpack.c.b16 %v3809, %v3808
      %v3916 = vpack.c.b16 %v3811, %v3810
      %v3917 = vpack.c.b16 %v3813, %v3812
      %v3918 = vpack.c.b16 %v3815, %v3814
      %v3919 = vpack.c.b16 %v3817, %v3816
      %v3920 = vpack.c.b16 %v3819, %v3818
      %v3921 = vpack.c.b16 %v3821, %v3820
      %v3922 = vpack.c.b16 %v3823, %v3822
      %v3923 = vpack.c.b16 %v3825, %v3824
      %v3924 = vpack.c.b16 %v3827, %v3826
      %v3925 = vpack.c.b16 %v3829, %v3828
      %v3926 = vpack.c.b16 %v3831, %v3830
      %v3927 = vpack.c.b16 %v3833, %v3832
      %v3928 = vpack.c.b16 %v3835, %v3834
      %v3929 = vpack.c.b16 %v3837, %v3836
      %v3930 = vpack.c.b16 %v3839, %v3838
      %v3931 = vpack.c.b16 %v3841, %v3840
      %v3932 = vpack.c.b16 %v3843, %v3842
      %v3933 = vpack.c.b16 %v3845, %v3844
      %v3934 = vpack.c.b16 %v3847, %v3846
      %v3935 = vpack.c.b16 %v3849, %v3848
      %v3936 = vpack.c.b16 %v3851, %v3850
      %v3937 = vpack.c.b16 %v3853, %v3852
      %v3938 = vpack.c.b16 %v3855, %v3854
      %v3939 = vpack.c.b16 %v3857, %v3856
      %v3940 = vpack.c.b16 %v3859, %v3858
      %v3941 = vpack.c.b16 %v3861, %v3860
      %v3942 = vpack.c.b16 %v3863, %v3862
      %v3943 = vpack.c.b16 %v3865, %v3864
      %v3944 = vpack.c.b16 %v3867, %v3866
      %v3945 = vpack.c.b16 %v3869, %v3868
      %v3946 = vpack.c.b16 %v3871, %v3870
      %v3947 = vpack.c.b16 %v3873, %v3872
      %v3948 = vpack.c.b16 %v3875, %v3874
      %v3949 = vpack.c.b16 %v3877, %v3876
      %4022 = vmatprep.subr.bf16.mxu0 0
      %4023 = vmatpush1.bf16.msra.mxu0 %v3885
      %4024 = vmatprep.subr.bf16.mxu0 0
      %4025 = vmatpush1.bf16.msra.mxu0 %v3884
      %4026 = vmatprep.subr.bf16.mxu0 0
      %4027 = vmatpush1.bf16.msra.mxu0 %v3883
      %4028 = vmatprep.subr.bf16.mxu0 0
      %4029 = vmatpush1.bf16.msra.mxu0 %v3882
      %4030 = vmatprep.subr.bf16.mxu0 0
      %4031 = vmatpush1.bf16.msra.mxu0 %v3881
      %4032 = vmatprep.subr.bf16.mxu0 0
      %4033 = vmatpush1.bf16.msra.mxu0 %v3880
      %4034 = vmatprep.subr.bf16.mxu0 0
      %4035 = vmatpush1.bf16.msra.mxu0 %v3879
      %4036 = vmatprep.subr.bf16.mxu0 0
      %4037 = vmatpush1.bf16.msra.mxu0 %v3878
      %4038 = vmatprep.subr.bf16.mxu0 0
      %4039 = vmatpush2.bf16.msra.mxu0 %v3893
      %4040 = vmatprep.subr.bf16.mxu0 0
      %4041 = vmatpush2.bf16.msra.mxu0 %v3892
      %4042 = vmatprep.subr.bf16.mxu0 0
      %4043 = vmatpush2.bf16.msra.mxu0 %v3891
      %4044 = vmatprep.subr.bf16.mxu0 0
      %4045 = vmatpush2.bf16.msra.mxu0 %v3890
      %4046 = vmatprep.subr.bf16.mxu0 0
      %4047 = vmatpush2.bf16.msra.mxu0 %v3889
      %4048 = vmatprep.subr.bf16.mxu0 0
      %4049 = vmatpush2.bf16.msra.mxu0 %v3888
      %4050 = vmatprep.subr.bf16.mxu0 0
      %4051 = vmatpush2.bf16.msra.mxu0 %v3887
      %4052 = vmatprep.subr.bf16.mxu0 0
      %4053 = vmatpush2.bf16.msra.mxu0 %v3886
      %4054 = vmatprep.mubr.bf16.mxu0 %v3303
      %4055 = vmatmul.mubr.bf16.gmra.mxu0 %v3302
      %v4056 = vpop.f32.mrf.mxu0
      %v4057 = vadd.f32 0.0, %v4056
      %v4058 = vpop.f32.mrf.mxu0
      %v4059 = vpop.f32.mrf.mxu0
      %v4060 = vadd.f32 0.0, %v4059
      %v4061 = vpop.f32.mrf.mxu0
      %4062 = vmatprep.mubr.bf16.mxu0 %v3312
      %4063 = vmatmul.mubr.bf16.gmra.mxu0 %v3311
      %v4064 = vpop.f32.mrf.mxu0
      %v4065 = vadd.f32 0.0, %v4064
      %v4066 = vpop.f32.mrf.mxu0
      %v4067 = vpop.f32.mrf.mxu0
      %v4068 = vadd.f32 0.0, %v4067
      %v4069 = vpop.f32.mrf.mxu0
      %4070 = vmatprep.mubr.bf16.mxu0 %v3321
      %4071 = vmatmul.mubr.bf16.gmra.mxu0 %v3320
      %v4072 = vpop.f32.mrf.mxu0
      %v4073 = vadd.f32 0.0, %v4072
      %v4074 = vpop.f32.mrf.mxu0
      %v4075 = vpop.f32.mrf.mxu0
      %v4076 = vadd.f32 0.0, %v4075
      %v4077 = vpop.f32.mrf.mxu0
      %4078 = vmatprep.mubr.bf16.mxu0 %v3330
      %4079 = vmatmul.mubr.bf16.gmra.mxu0 %v3329
      %v4080 = vpop.f32.mrf.mxu0
      %v4081 = vadd.f32 0.0, %v4080
      %v4082 = vpop.f32.mrf.mxu0
      %v4083 = vpop.f32.mrf.mxu0
      %v4084 = vadd.f32 0.0, %v4083
      %v4085 = vpop.f32.mrf.mxu0
      %4086 = vmatprep.mubr.bf16.mxu0 %v3339
      %4087 = vmatmul.mubr.bf16.gmra.mxu0 %v3338
      %v4088 = vpop.f32.mrf.mxu0
      %v4089 = vadd.f32 0.0, %v4088
      %v4090 = vpop.f32.mrf.mxu0
      %v4091 = vpop.f32.mrf.mxu0
      %v4092 = vadd.f32 0.0, %v4091
      %v4093 = vpop.f32.mrf.mxu0
      %4094 = vmatprep.mubr.bf16.mxu0 %v3348
      %4095 = vmatmul.mubr.bf16.gmra.mxu0 %v3347
      %v4096 = vpop.f32.mrf.mxu0
      %v4097 = vadd.f32 0.0, %v4096
      %v4098 = vpop.f32.mrf.mxu0
      %v4099 = vpop.f32.mrf.mxu0
      %v4100 = vadd.f32 0.0, %v4099
      %v4101 = vpop.f32.mrf.mxu0
      %4102 = vmatprep.mubr.bf16.mxu0 %v3357
      %4103 = vmatmul.mubr.bf16.gmra.mxu0 %v3356
      %v4104 = vpop.f32.mrf.mxu0
      %v4105 = vadd.f32 0.0, %v4104
      %v4106 = vpop.f32.mrf.mxu0
      %v4107 = vpop.f32.mrf.mxu0
      %v4108 = vadd.f32 0.0, %v4107
      %v4109 = vpop.f32.mrf.mxu0
      %4110 = vmatprep.mubr.bf16.mxu0 %v3366
      %4111 = vmatmul.mubr.bf16.gmra.mxu0 %v3365
      %v4112 = vpop.f32.mrf.mxu0
      %v4113 = vadd.f32 0.0, %v4112
      %v4114 = vpop.f32.mrf.mxu0
      %v4115 = vpop.f32.mrf.mxu0
      %v4116 = vadd.f32 0.0, %v4115
      %v4117 = vpop.f32.mrf.mxu0
      %4118 = vmatprep.mubr.bf16.mxu0 %v3375
      %4119 = vmatmul.mubr.bf16.gmra.mxu0 %v3374
      %v4120 = vpop.f32.mrf.mxu0
      %v4121 = vadd.f32 0.0, %v4120
      %v4122 = vpop.f32.mrf.mxu0
      %v4123 = vpop.f32.mrf.mxu0
      %v4124 = vadd.f32 0.0, %v4123
      %v4125 = vpop.f32.mrf.mxu0
      %4126 = vmatprep.mubr.bf16.mxu0 %v3384
      %4127 = vmatmul.mubr.bf16.gmra.mxu0 %v3383
      %v4128 = vpop.f32.mrf.mxu0
      %v4129 = vadd.f32 0.0, %v4128
      %v4130 = vpop.f32.mrf.mxu0
      %v4131 = vpop.f32.mrf.mxu0
      %v4132 = vadd.f32 0.0, %v4131
      %v4133 = vpop.f32.mrf.mxu0
      %4134 = vmatprep.mubr.bf16.mxu0 %v3393
      %4135 = vmatmul.mubr.bf16.gmra.mxu0 %v3392
      %v4136 = vpop.f32.mrf.mxu0
      %v4137 = vadd.f32 0.0, %v4136
      %v4138 = vpop.f32.mrf.mxu0
      %v4139 = vpop.f32.mrf.mxu0
      %v4140 = vadd.f32 0.0, %v4139
      %v4141 = vpop.f32.mrf.mxu0
      %4142 = vmatprep.mubr.bf16.mxu0 %v3402
      %4143 = vmatmul.mubr.bf16.gmra.mxu0 %v3401
      %v4144 = vpop.f32.mrf.mxu0
      %v4145 = vadd.f32 0.0, %v4144
      %v4146 = vpop.f32.mrf.mxu0
      %v4147 = vpop.f32.mrf.mxu0
      %v4148 = vadd.f32 0.0, %v4147
      %v4149 = vpop.f32.mrf.mxu0
      %4150 = vmatprep.mubr.bf16.mxu0 %v3411
      %4151 = vmatmul.mubr.bf16.gmra.mxu0 %v3410
      %v4152 = vpop.f32.mrf.mxu0
      %v4153 = vadd.f32 0.0, %v4152
      %v4154 = vpop.f32.mrf.mxu0
      %v4155 = vpop.f32.mrf.mxu0
      %v4156 = vadd.f32 0.0, %v4155
      %v4157 = vpop.f32.mrf.mxu0
      %4158 = vmatprep.mubr.bf16.mxu0 %v3420
      %4159 = vmatmul.mubr.bf16.gmra.mxu0 %v3419
      %v4160 = vpop.f32.mrf.mxu0
      %v4161 = vadd.f32 0.0, %v4160
      %v4162 = vpop.f32.mrf.mxu0
      %v4163 = vpop.f32.mrf.mxu0
      %v4164 = vadd.f32 0.0, %v4163
      %v4165 = vpop.f32.mrf.mxu0
      %4166 = vmatprep.mubr.bf16.mxu0 %v3429
      %4167 = vmatmul.mubr.bf16.gmra.mxu0 %v3428
      %v4168 = vpop.f32.mrf.mxu0
      %v4169 = vadd.f32 0.0, %v4168
      %v4170 = vpop.f32.mrf.mxu0
      %v4171 = vpop.f32.mrf.mxu0
      %v4172 = vadd.f32 0.0, %v4171
      %v4173 = vpop.f32.mrf.mxu0
      %4174 = vmatprep.mubr.bf16.mxu0 %v3438
      %4175 = vmatmul.mubr.bf16.gmra.mxu0 %v3437
      %v4176 = vpop.f32.mrf.mxu0
      %v4177 = vadd.f32 0.0, %v4176
      %v4178 = vpop.f32.mrf.mxu0
      %v4179 = vpop.f32.mrf.mxu0
      %v4180 = vadd.f32 0.0, %v4179
      %v4181 = vpop.f32.mrf.mxu0
      %4182 = vdwg.mxu0
      %4183 = vmatprep.subr.bf16.mxu0 0
      %4184 = vmatpush1.bf16.msra.mxu0 %v3901
      %4185 = vmatprep.subr.bf16.mxu0 0
      %4186 = vmatpush1.bf16.msra.mxu0 %v3900
      %4187 = vmatprep.subr.bf16.mxu0 0
      %4188 = vmatpush1.bf16.msra.mxu0 %v3899
      %4189 = vmatprep.subr.bf16.mxu0 0
      %4190 = vmatpush1.bf16.msra.mxu0 %v3898
      %4191 = vmatprep.subr.bf16.mxu0 0
      %4192 = vmatpush1.bf16.msra.mxu0 %v3897
      %4193 = vmatprep.subr.bf16.mxu0 0
      %4194 = vmatpush1.bf16.msra.mxu0 %v3896
      %4195 = vmatprep.subr.bf16.mxu0 0
      %4196 = vmatpush1.bf16.msra.mxu0 %v3895
      %4197 = vmatprep.subr.bf16.mxu0 0
      %4198 = vmatpush1.bf16.msra.mxu0 %v3894
      %4199 = vmatprep.subr.bf16.mxu0 0
      %4200 = vmatpush2.bf16.msra.mxu0 %v3909
      %4201 = vmatprep.subr.bf16.mxu0 0
      %4202 = vmatpush2.bf16.msra.mxu0 %v3908
      %4203 = vmatprep.subr.bf16.mxu0 0
      %4204 = vmatpush2.bf16.msra.mxu0 %v3907
      %4205 = vmatprep.subr.bf16.mxu0 0
      %4206 = vmatpush2.bf16.msra.mxu0 %v3906
      %4207 = vmatprep.subr.bf16.mxu0 0
      %4208 = vmatpush2.bf16.msra.mxu0 %v3905
      %4209 = vmatprep.subr.bf16.mxu0 0
      %4210 = vmatpush2.bf16.msra.mxu0 %v3904
      %4211 = vmatprep.subr.bf16.mxu0 0
      %4212 = vmatpush2.bf16.msra.mxu0 %v3903
      %4213 = vmatprep.subr.bf16.mxu0 0
      %4214 = vmatpush2.bf16.msra.mxu0 %v3902
      %4215 = vmatprep.mubr.bf16.mxu0 %v3305
      %4216 = vmatmul.mubr.bf16.gmra.mxu0 %v3304
      %v4217 = vpop.f32.mrf.mxu0
      %v4218 = vadd.f32 %v4057, %v4217
      %v4219 = vpop.f32.mrf.mxu0
      %v4220 = vpop.f32.mrf.mxu0
      %v4221 = vadd.f32 %v4060, %v4220
      %v4222 = vpop.f32.mrf.mxu0
      %4223 = vmatprep.mubr.bf16.mxu0 %v3314
      %4224 = vmatmul.mubr.bf16.gmra.mxu0 %v3313
      %v4225 = vpop.f32.mrf.mxu0
      %v4226 = vadd.f32 %v4065, %v4225
      %v4227 = vpop.f32.mrf.mxu0
      %v4228 = vpop.f32.mrf.mxu0
      %v4229 = vadd.f32 %v4068, %v4228
      %v4230 = vpop.f32.mrf.mxu0
      %4231 = vmatprep.mubr.bf16.mxu0 %v3323
      %4232 = vmatmul.mubr.bf16.gmra.mxu0 %v3322
      %v4233 = vpop.f32.mrf.mxu0
      %v4234 = vadd.f32 %v4073, %v4233
      %v4235 = vpop.f32.mrf.mxu0
      %v4236 = vpop.f32.mrf.mxu0
      %v4237 = vadd.f32 %v4076, %v4236
      %v4238 = vpop.f32.mrf.mxu0
      %4239 = vmatprep.mubr.bf16.mxu0 %v3332
      %4240 = vmatmul.mubr.bf16.gmra.mxu0 %v3331
      %v4241 = vpop.f32.mrf.mxu0
      %v4242 = vadd.f32 %v4081, %v4241
      %v4243 = vpop.f32.mrf.mxu0
      %v4244 = vpop.f32.mrf.mxu0
      %v4245 = vadd.f32 %v4084, %v4244
      %v4246 = vpop.f32.mrf.mxu0
      %4247 = vmatprep.mubr.bf16.mxu0 %v3341
      %4248 = vmatmul.mubr.bf16.gmra.mxu0 %v3340
      %v4249 = vpop.f32.mrf.mxu0
      %v4250 = vadd.f32 %v4089, %v4249
      %v4251 = vpop.f32.mrf.mxu0
      %v4252 = vpop.f32.mrf.mxu0
      %v4253 = vadd.f32 %v4092, %v4252
      %v4254 = vpop.f32.mrf.mxu0
      %4255 = vmatprep.mubr.bf16.mxu0 %v3350
      %4256 = vmatmul.mubr.bf16.gmra.mxu0 %v3349
      %v4257 = vpop.f32.mrf.mxu0
      %v4258 = vadd.f32 %v4097, %v4257
      %v4259 = vpop.f32.mrf.mxu0
      %v4260 = vpop.f32.mrf.mxu0
      %v4261 = vadd.f32 %v4100, %v4260
      %v4262 = vpop.f32.mrf.mxu0
      %4263 = vmatprep.mubr.bf16.mxu0 %v3359
      %4264 = vmatmul.mubr.bf16.gmra.mxu0 %v3358
      %v4265 = vpop.f32.mrf.mxu0
      %v4266 = vadd.f32 %v4105, %v4265
      %v4267 = vpop.f32.mrf.mxu0
      %v4268 = vpop.f32.mrf.mxu0
      %v4269 = vadd.f32 %v4108, %v4268
      %v4270 = vpop.f32.mrf.mxu0
      %4271 = vmatprep.mubr.bf16.mxu0 %v3368
      %4272 = vmatmul.mubr.bf16.gmra.mxu0 %v3367
      %v4273 = vpop.f32.mrf.mxu0
      %v4274 = vadd.f32 %v4113, %v4273
      %v4275 = vpop.f32.mrf.mxu0
      %v4276 = vpop.f32.mrf.mxu0
      %v4277 = vadd.f32 %v4116, %v4276
      %v4278 = vpop.f32.mrf.mxu0
      %4279 = vmatprep.mubr.bf16.mxu0 %v3377
      %4280 = vmatmul.mubr.bf16.gmra.mxu0 %v3376
      %v4281 = vpop.f32.mrf.mxu0
      %v4282 = vadd.f32 %v4121, %v4281
      %v4283 = vpop.f32.mrf.mxu0
      %v4284 = vpop.f32.mrf.mxu0
      %v4285 = vadd.f32 %v4124, %v4284
      %v4286 = vpop.f32.mrf.mxu0
      %4287 = vmatprep.mubr.bf16.mxu0 %v3386
      %4288 = vmatmul.mubr.bf16.gmra.mxu0 %v3385
      %v4289 = vpop.f32.mrf.mxu0
      %v4290 = vadd.f32 %v4129, %v4289
      %v4291 = vpop.f32.mrf.mxu0
      %v4292 = vpop.f32.mrf.mxu0
      %v4293 = vadd.f32 %v4132, %v4292
      %v4294 = vpop.f32.mrf.mxu0
      %4295 = vmatprep.mubr.bf16.mxu0 %v3395
      %4296 = vmatmul.mubr.bf16.gmra.mxu0 %v3394
      %v4297 = vpop.f32.mrf.mxu0
      %v4298 = vadd.f32 %v4137, %v4297
      %v4299 = vpop.f32.mrf.mxu0
      %v4300 = vpop.f32.mrf.mxu0
      %v4301 = vadd.f32 %v4140, %v4300
      %v4302 = vpop.f32.mrf.mxu0
      %4303 = vmatprep.mubr.bf16.mxu0 %v3404
      %4304 = vmatmul.mubr.bf16.gmra.mxu0 %v3403
      %v4305 = vpop.f32.mrf.mxu0
      %v4306 = vadd.f32 %v4145, %v4305
      %v4307 = vpop.f32.mrf.mxu0
      %v4308 = vpop.f32.mrf.mxu0
      %v4309 = vadd.f32 %v4148, %v4308
      %v4310 = vpop.f32.mrf.mxu0
      %4311 = vmatprep.mubr.bf16.mxu0 %v3413
      %4312 = vmatmul.mubr.bf16.gmra.mxu0 %v3412
      %v4313 = vpop.f32.mrf.mxu0
      %v4314 = vadd.f32 %v4153, %v4313
      %v4315 = vpop.f32.mrf.mxu0
      %v4316 = vpop.f32.mrf.mxu0
      %v4317 = vadd.f32 %v4156, %v4316
      %v4318 = vpop.f32.mrf.mxu0
      %4319 = vmatprep.mubr.bf16.mxu0 %v3422
      %4320 = vmatmul.mubr.bf16.gmra.mxu0 %v3421
      %v4321 = vpop.f32.mrf.mxu0
      %v4322 = vadd.f32 %v4161, %v4321
      %v4323 = vpop.f32.mrf.mxu0
      %v4324 = vpop.f32.mrf.mxu0
      %v4325 = vadd.f32 %v4164, %v4324
      %v4326 = vpop.f32.mrf.mxu0
      %4327 = vmatprep.mubr.bf16.mxu0 %v3431
      %4328 = vmatmul.mubr.bf16.gmra.mxu0 %v3430
      %v4329 = vpop.f32.mrf.mxu0
      %v4330 = vadd.f32 %v4169, %v4329
      %v4331 = vpop.f32.mrf.mxu0
      %v4332 = vpop.f32.mrf.mxu0
      %v4333 = vadd.f32 %v4172, %v4332
      %v4334 = vpop.f32.mrf.mxu0
      %4335 = vmatprep.mubr.bf16.mxu0 %v3440
      %4336 = vmatmul.mubr.bf16.gmra.mxu0 %v3439
      %v4337 = vpop.f32.mrf.mxu0
      %v4338 = vadd.f32 %v4177, %v4337
      %v4339 = vpop.f32.mrf.mxu0
      %v4340 = vpop.f32.mrf.mxu0
      %v4341 = vadd.f32 %v4180, %v4340
      %v4342 = vpop.f32.mrf.mxu0
      %4343 = vdwg.mxu0
      %4344 = vmatprep.subr.bf16.mxu0 0
      %4345 = vmatpush1.bf16.msra.mxu0 %v3917
      %4346 = vmatprep.subr.bf16.mxu0 0
      %4347 = vmatpush1.bf16.msra.mxu0 %v3916
      %4348 = vmatprep.subr.bf16.mxu0 0
      %4349 = vmatpush1.bf16.msra.mxu0 %v3915
      %4350 = vmatprep.subr.bf16.mxu0 0
      %4351 = vmatpush1.bf16.msra.mxu0 %v3914
      %4352 = vmatprep.subr.bf16.mxu0 0
      %4353 = vmatpush1.bf16.msra.mxu0 %v3913
      %4354 = vmatprep.subr.bf16.mxu0 0
      %4355 = vmatpush1.bf16.msra.mxu0 %v3912
      %4356 = vmatprep.subr.bf16.mxu0 0
      %4357 = vmatpush1.bf16.msra.mxu0 %v3911
      %4358 = vmatprep.subr.bf16.mxu0 0
      %4359 = vmatpush1.bf16.msra.mxu0 %v3910
      %4360 = vmatprep.subr.bf16.mxu0 0
      %4361 = vmatpush2.bf16.msra.mxu0 %v3925
      %4362 = vmatprep.subr.bf16.mxu0 0
      %4363 = vmatpush2.bf16.msra.mxu0 %v3924
      %4364 = vmatprep.subr.bf16.mxu0 0
      %4365 = vmatpush2.bf16.msra.mxu0 %v3923
      %4366 = vmatprep.subr.bf16.mxu0 0
      %4367 = vmatpush2.bf16.msra.mxu0 %v3922
      %4368 = vmatprep.subr.bf16.mxu0 0
      %4369 = vmatpush2.bf16.msra.mxu0 %v3921
      %4370 = vmatprep.subr.bf16.mxu0 0
      %4371 = vmatpush2.bf16.msra.mxu0 %v3920
      %4372 = vmatprep.subr.bf16.mxu0 0
      %4373 = vmatpush2.bf16.msra.mxu0 %v3919
      %4374 = vmatprep.subr.bf16.mxu0 0
      %4375 = vmatpush2.bf16.msra.mxu0 %v3918
      %4376 = vmatprep.mubr.bf16.mxu0 %v3307
      %4377 = vmatmul.mubr.bf16.gmra.mxu0 %v3306
      %v4378 = vpop.f32.mrf.mxu0
      %v4379 = vadd.f32 %v4218, %v4378
      %v4380 = vpop.f32.mrf.mxu0
      %v4381 = vpop.f32.mrf.mxu0
      %v4382 = vadd.f32 %v4221, %v4381
      %v4383 = vpop.f32.mrf.mxu0
      %4384 = vmatprep.mubr.bf16.mxu0 %v3316
      %4385 = vmatmul.mubr.bf16.gmra.mxu0 %v3315
      %v4386 = vpop.f32.mrf.mxu0
      %v4387 = vadd.f32 %v4226, %v4386
      %v4388 = vpop.f32.mrf.mxu0
      %v4389 = vpop.f32.mrf.mxu0
      %v4390 = vadd.f32 %v4229, %v4389
      %v4391 = vpop.f32.mrf.mxu0
      %4392 = vmatprep.mubr.bf16.mxu0 %v3325
      %4393 = vmatmul.mubr.bf16.gmra.mxu0 %v3324
      %v4394 = vpop.f32.mrf.mxu0
      %v4395 = vadd.f32 %v4234, %v4394
      %v4396 = vpop.f32.mrf.mxu0
      %v4397 = vpop.f32.mrf.mxu0
      %v4398 = vadd.f32 %v4237, %v4397
      %v4399 = vpop.f32.mrf.mxu0
      %4400 = vmatprep.mubr.bf16.mxu0 %v3334
      %4401 = vmatmul.mubr.bf16.gmra.mxu0 %v3333
      %v4402 = vpop.f32.mrf.mxu0
      %v4403 = vadd.f32 %v4242, %v4402
      %v4404 = vpop.f32.mrf.mxu0
      %v4405 = vpop.f32.mrf.mxu0
      %v4406 = vadd.f32 %v4245, %v4405
      %v4407 = vpop.f32.mrf.mxu0
      %4408 = vmatprep.mubr.bf16.mxu0 %v3343
      %4409 = vmatmul.mubr.bf16.gmra.mxu0 %v3342
      %v4410 = vpop.f32.mrf.mxu0
      %v4411 = vadd.f32 %v4250, %v4410
      %v4412 = vpop.f32.mrf.mxu0
      %v4413 = vpop.f32.mrf.mxu0
      %v4414 = vadd.f32 %v4253, %v4413
      %v4415 = vpop.f32.mrf.mxu0
      %4416 = vmatprep.mubr.bf16.mxu0 %v3352
      %4417 = vmatmul.mubr.bf16.gmra.mxu0 %v3351
      %v4418 = vpop.f32.mrf.mxu0
      %v4419 = vadd.f32 %v4258, %v4418
      %v4420 = vpop.f32.mrf.mxu0
      %v4421 = vpop.f32.mrf.mxu0
      %v4422 = vadd.f32 %v4261, %v4421
      %v4423 = vpop.f32.mrf.mxu0
      %4424 = vmatprep.mubr.bf16.mxu0 %v3361
      %4425 = vmatmul.mubr.bf16.gmra.mxu0 %v3360
      %v4426 = vpop.f32.mrf.mxu0
      %v4427 = vadd.f32 %v4266, %v4426
      %v4428 = vpop.f32.mrf.mxu0
      %v4429 = vpop.f32.mrf.mxu0
      %v4430 = vadd.f32 %v4269, %v4429
      %v4431 = vpop.f32.mrf.mxu0
      %4432 = vmatprep.mubr.bf16.mxu0 %v3370
      %4433 = vmatmul.mubr.bf16.gmra.mxu0 %v3369
      %v4434 = vpop.f32.mrf.mxu0
      %v4435 = vadd.f32 %v4274, %v4434
      %v4436 = vpop.f32.mrf.mxu0
      %v4437 = vpop.f32.mrf.mxu0
      %v4438 = vadd.f32 %v4277, %v4437
      %v4439 = vpop.f32.mrf.mxu0
      %4440 = vmatprep.mubr.bf16.mxu0 %v3379
      %4441 = vmatmul.mubr.bf16.gmra.mxu0 %v3378
      %v4442 = vpop.f32.mrf.mxu0
      %v4443 = vadd.f32 %v4282, %v4442
      %v4444 = vpop.f32.mrf.mxu0
      %v4445 = vpop.f32.mrf.mxu0
      %v4446 = vadd.f32 %v4285, %v4445
      %v4447 = vpop.f32.mrf.mxu0
      %4448 = vmatprep.mubr.bf16.mxu0 %v3388
      %4449 = vmatmul.mubr.bf16.gmra.mxu0 %v3387
      %v4450 = vpop.f32.mrf.mxu0
      %v4451 = vadd.f32 %v4290, %v4450
      %v4452 = vpop.f32.mrf.mxu0
      %v4453 = vpop.f32.mrf.mxu0
      %v4454 = vadd.f32 %v4293, %v4453
      %v4455 = vpop.f32.mrf.mxu0
      %4456 = vmatprep.mubr.bf16.mxu0 %v3397
      %4457 = vmatmul.mubr.bf16.gmra.mxu0 %v3396
      %v4458 = vpop.f32.mrf.mxu0
      %v4459 = vadd.f32 %v4298, %v4458
      %v4460 = vpop.f32.mrf.mxu0
      %v4461 = vpop.f32.mrf.mxu0
      %v4462 = vadd.f32 %v4301, %v4461
      %v4463 = vpop.f32.mrf.mxu0
      %4464 = vmatprep.mubr.bf16.mxu0 %v3406
      %4465 = vmatmul.mubr.bf16.gmra.mxu0 %v3405
      %v4466 = vpop.f32.mrf.mxu0
      %v4467 = vadd.f32 %v4306, %v4466
      %v4468 = vpop.f32.mrf.mxu0
      %v4469 = vpop.f32.mrf.mxu0
      %v4470 = vadd.f32 %v4309, %v4469
      %v4471 = vpop.f32.mrf.mxu0
      %4472 = vmatprep.mubr.bf16.mxu0 %v3415
      %4473 = vmatmul.mubr.bf16.gmra.mxu0 %v3414
      %v4474 = vpop.f32.mrf.mxu0
      %v4475 = vadd.f32 %v4314, %v4474
      %v4476 = vpop.f32.mrf.mxu0
      %v4477 = vpop.f32.mrf.mxu0
      %v4478 = vadd.f32 %v4317, %v4477
      %v4479 = vpop.f32.mrf.mxu0
      %4480 = vmatprep.mubr.bf16.mxu0 %v3424
      %4481 = vmatmul.mubr.bf16.gmra.mxu0 %v3423
      %v4482 = vpop.f32.mrf.mxu0
      %v4483 = vadd.f32 %v4322, %v4482
      %v4484 = vpop.f32.mrf.mxu0
      %v4485 = vpop.f32.mrf.mxu0
      %v4486 = vadd.f32 %v4325, %v4485
      %v4487 = vpop.f32.mrf.mxu0
      %4488 = vmatprep.mubr.bf16.mxu0 %v3433
      %4489 = vmatmul.mubr.bf16.gmra.mxu0 %v3432
      %v4490 = vpop.f32.mrf.mxu0
      %v4491 = vadd.f32 %v4330, %v4490
      %v4492 = vpop.f32.mrf.mxu0
      %v4493 = vpop.f32.mrf.mxu0
      %v4494 = vadd.f32 %v4333, %v4493
      %v4495 = vpop.f32.mrf.mxu0
      %4496 = vmatprep.mubr.bf16.mxu0 %v3442
      %4497 = vmatmul.mubr.bf16.gmra.mxu0 %v3441
      %v4498 = vpop.f32.mrf.mxu0
      %v4499 = vadd.f32 %v4338, %v4498
      %v4500 = vpop.f32.mrf.mxu0
      %v4501 = vpop.f32.mrf.mxu0
      %v4502 = vadd.f32 %v4341, %v4501
      %v4503 = vpop.f32.mrf.mxu0
      %4504 = vdwg.mxu0
      %4505 = vmatprep.subr.bf16.mxu0 0
      %4506 = vmatpush1.bf16.msra.mxu0 %v3933
      %4507 = vmatprep.subr.bf16.mxu0 0
      %4508 = vmatpush1.bf16.msra.mxu0 %v3932
      %4509 = vmatprep.subr.bf16.mxu0 0
      %4510 = vmatpush1.bf16.msra.mxu0 %v3931
      %4511 = vmatprep.subr.bf16.mxu0 0
      %4512 = vmatpush1.bf16.msra.mxu0 %v3930
      %4513 = vmatprep.subr.bf16.mxu0 0
      %4514 = vmatpush1.bf16.msra.mxu0 %v3929
      %4515 = vmatprep.subr.bf16.mxu0 0
      %4516 = vmatpush1.bf16.msra.mxu0 %v3928
      %4517 = vmatprep.subr.bf16.mxu0 0
      %4518 = vmatpush1.bf16.msra.mxu0 %v3927
      %4519 = vmatprep.subr.bf16.mxu0 0
      %4520 = vmatpush1.bf16.msra.mxu0 %v3926
      %4521 = vmatprep.subr.bf16.mxu0 0
      %4522 = vmatpush2.bf16.msra.mxu0 %v3941
      %4523 = vmatprep.subr.bf16.mxu0 0
      %4524 = vmatpush2.bf16.msra.mxu0 %v3940
      %4525 = vmatprep.subr.bf16.mxu0 0
      %4526 = vmatpush2.bf16.msra.mxu0 %v3939
      %4527 = vmatprep.subr.bf16.mxu0 0
      %4528 = vmatpush2.bf16.msra.mxu0 %v3938
      %4529 = vmatprep.subr.bf16.mxu0 0
      %4530 = vmatpush2.bf16.msra.mxu0 %v3937
      %4531 = vmatprep.subr.bf16.mxu0 0
      %4532 = vmatpush2.bf16.msra.mxu0 %v3936
      %4533 = vmatprep.subr.bf16.mxu0 0
      %4534 = vmatpush2.bf16.msra.mxu0 %v3935
      %4535 = vmatprep.subr.bf16.mxu0 0
      %4536 = vmatpush2.bf16.msra.mxu0 %v3934
      %4537 = vmatprep.mubr.bf16.mxu0 %v3309
      %4538 = vmatmul.mubr.bf16.gmra.mxu0 %v3308
      %v4539 = vpop.f32.mrf.mxu0
      %v4540 = vadd.f32 %v4379, %v4539
      %v4541 = vpop.f32.mrf.mxu0
      %v4542 = vpop.f32.mrf.mxu0
      %v4543 = vadd.f32 %v4382, %v4542
      %v4544 = vpop.f32.mrf.mxu0
      %4545 = vmatprep.mubr.bf16.mxu0 %v3318
      %4546 = vmatmul.mubr.bf16.gmra.mxu0 %v3317
      %v4547 = vpop.f32.mrf.mxu0
      %v4548 = vadd.f32 %v4387, %v4547
      %v4549 = vpop.f32.mrf.mxu0
      %v4550 = vpop.f32.mrf.mxu0
      %v4551 = vadd.f32 %v4390, %v4550
      %v4552 = vpop.f32.mrf.mxu0
      %4553 = vmatprep.mubr.bf16.mxu0 %v3327
      %4554 = vmatmul.mubr.bf16.gmra.mxu0 %v3326
      %v4555 = vpop.f32.mrf.mxu0
      %v4556 = vadd.f32 %v4395, %v4555
      %v4557 = vpop.f32.mrf.mxu0
      %v4558 = vpop.f32.mrf.mxu0
      %v4559 = vadd.f32 %v4398, %v4558
      %v4560 = vpop.f32.mrf.mxu0
      %4561 = vmatprep.mubr.bf16.mxu0 %v3336
      %4562 = vmatmul.mubr.bf16.gmra.mxu0 %v3335
      %v4563 = vpop.f32.mrf.mxu0
      %v4564 = vadd.f32 %v4403, %v4563
      %v4565 = vpop.f32.mrf.mxu0
      %v4566 = vpop.f32.mrf.mxu0
      %v4567 = vadd.f32 %v4406, %v4566
      %v4568 = vpop.f32.mrf.mxu0
      %4569 = vmatprep.mubr.bf16.mxu0 %v3345
      %4570 = vmatmul.mubr.bf16.gmra.mxu0 %v3344
      %v4571 = vpop.f32.mrf.mxu0
      %v4572 = vadd.f32 %v4411, %v4571
      %v4573 = vpop.f32.mrf.mxu0
      %v4574 = vpop.f32.mrf.mxu0
      %v4575 = vadd.f32 %v4414, %v4574
      %v4576 = vpop.f32.mrf.mxu0
      %4577 = vmatprep.mubr.bf16.mxu0 %v3354
      %4578 = vmatmul.mubr.bf16.gmra.mxu0 %v3353
      %v4579 = vpop.f32.mrf.mxu0
      %v4580 = vadd.f32 %v4419, %v4579
      %v4581 = vpop.f32.mrf.mxu0
      %v4582 = vpop.f32.mrf.mxu0
      %v4583 = vadd.f32 %v4422, %v4582
      %v4584 = vpop.f32.mrf.mxu0
      %4585 = vmatprep.mubr.bf16.mxu0 %v3363
      %4586 = vmatmul.mubr.bf16.gmra.mxu0 %v3362
      %v4587 = vpop.f32.mrf.mxu0
      %v4588 = vadd.f32 %v4427, %v4587
      %v4589 = vpop.f32.mrf.mxu0
      %v4590 = vpop.f32.mrf.mxu0
      %v4591 = vadd.f32 %v4430, %v4590
      %v4592 = vpop.f32.mrf.mxu0
      %4593 = vmatprep.mubr.bf16.mxu0 %v3372
      %4594 = vmatmul.mubr.bf16.gmra.mxu0 %v3371
      %v4595 = vpop.f32.mrf.mxu0
      %v4596 = vadd.f32 %v4435, %v4595
      %v4597 = vpop.f32.mrf.mxu0
      %v4598 = vpop.f32.mrf.mxu0
      %v4599 = vadd.f32 %v4438, %v4598
      %v4600 = vpop.f32.mrf.mxu0
      %4601 = vmatprep.mubr.bf16.mxu0 %v3381
      %4602 = vmatmul.mubr.bf16.gmra.mxu0 %v3380
      %v4603 = vpop.f32.mrf.mxu0
      %v4604 = vadd.f32 %v4443, %v4603
      %v4605 = vpop.f32.mrf.mxu0
      %v4606 = vpop.f32.mrf.mxu0
      %v4607 = vadd.f32 %v4446, %v4606
      %v4608 = vpop.f32.mrf.mxu0
      %4609 = vmatprep.mubr.bf16.mxu0 %v3390
      %4610 = vmatmul.mubr.bf16.gmra.mxu0 %v3389
      %v4611 = vpop.f32.mrf.mxu0
      %v4612 = vadd.f32 %v4451, %v4611
      %v4613 = vpop.f32.mrf.mxu0
      %v4614 = vpop.f32.mrf.mxu0
      %v4615 = vadd.f32 %v4454, %v4614
      %v4616 = vpop.f32.mrf.mxu0
      %4617 = vmatprep.mubr.bf16.mxu0 %v3399
      %4618 = vmatmul.mubr.bf16.gmra.mxu0 %v3398
      %v4619 = vpop.f32.mrf.mxu0
      %v4620 = vadd.f32 %v4459, %v4619
      %v4621 = vpop.f32.mrf.mxu0
      %v4622 = vpop.f32.mrf.mxu0
      %v4623 = vadd.f32 %v4462, %v4622
      %v4624 = vpop.f32.mrf.mxu0
      %4625 = vmatprep.mubr.bf16.mxu0 %v3408
      %4626 = vmatmul.mubr.bf16.gmra.mxu0 %v3407
      %v4627 = vpop.f32.mrf.mxu0
      %v4628 = vadd.f32 %v4467, %v4627
      %v4629 = vpop.f32.mrf.mxu0
      %v4630 = vpop.f32.mrf.mxu0
      %v4631 = vadd.f32 %v4470, %v4630
      %v4632 = vpop.f32.mrf.mxu0
      %4633 = vmatprep.mubr.bf16.mxu0 %v3417
      %4634 = vmatmul.mubr.bf16.gmra.mxu0 %v3416
      %v4635 = vpop.f32.mrf.mxu0
      %v4636 = vadd.f32 %v4475, %v4635
      %v4637 = vpop.f32.mrf.mxu0
      %v4638 = vpop.f32.mrf.mxu0
      %v4639 = vadd.f32 %v4478, %v4638
      %v4640 = vpop.f32.mrf.mxu0
      %4641 = vmatprep.mubr.bf16.mxu0 %v3426
      %4642 = vmatmul.mubr.bf16.gmra.mxu0 %v3425
      %v4643 = vpop.f32.mrf.mxu0
      %v4644 = vadd.f32 %v4483, %v4643
      %v4645 = vpop.f32.mrf.mxu0
      %v4646 = vpop.f32.mrf.mxu0
      %v4647 = vadd.f32 %v4486, %v4646
      %v4648 = vpop.f32.mrf.mxu0
      %4649 = vmatprep.mubr.bf16.mxu0 %v3435
      %4650 = vmatmul.mubr.bf16.gmra.mxu0 %v3434
      %v4651 = vpop.f32.mrf.mxu0
      %v4652 = vadd.f32 %v4491, %v4651
      %v4653 = vpop.f32.mrf.mxu0
      %v4654 = vpop.f32.mrf.mxu0
      %v4655 = vadd.f32 %v4494, %v4654
      %v4656 = vpop.f32.mrf.mxu0
      %4657 = vmatprep.mubr.bf16.mxu0 %v3444
      %4658 = vmatmul.mubr.bf16.gmra.mxu0 %v3443
      %v4659 = vpop.f32.mrf.mxu0
      %v4660 = vadd.f32 %v4499, %v4659
      %v4661 = vpop.f32.mrf.mxu0
      %v4662 = vpop.f32.mrf.mxu0
      %v4663 = vadd.f32 %v4502, %v4662
      %v4664 = vpop.f32.mrf.mxu0
      %4665 = vdwg.mxu0
      %4666 = vmatprep.subr.bf16.mxu0 0
      %4667 = vmatpush1.bf16.msra.mxu0 %v3949
      %4668 = vmatprep.subr.bf16.mxu0 0
      %4669 = vmatpush1.bf16.msra.mxu0 %v3948
      %4670 = vmatprep.subr.bf16.mxu0 0
      %4671 = vmatpush1.bf16.msra.mxu0 %v3947
      %4672 = vmatprep.subr.bf16.mxu0 0
      %4673 = vmatpush1.bf16.msra.mxu0 %v3946
      %4674 = vmatprep.subr.bf16.mxu0 0
      %4675 = vmatpush1.bf16.msra.mxu0 %v3945
      %4676 = vmatprep.subr.bf16.mxu0 0
      %4677 = vmatpush1.bf16.msra.mxu0 %v3944
      %4678 = vmatprep.subr.bf16.mxu0 0
      %4679 = vmatpush1.bf16.msra.mxu0 %v3943
      %4680 = vmatprep.subr.bf16.mxu0 0
      %4681 = vmatpush1.bf16.msra.mxu0 %v3942
      %4682 = vmatprep.subr.bf16.mxu0 0
      %4683 = vmatpush2.bf16.msra.mxu0 0
      %4684 = vmatprep.subr.bf16.mxu0 0
      %4685 = vmatpush2.bf16.msra.mxu0 0
      %4686 = vmatprep.subr.bf16.mxu0 0
      %4687 = vmatpush2.bf16.msra.mxu0 0
      %4688 = vmatprep.subr.bf16.mxu0 0
      %4689 = vmatpush2.bf16.msra.mxu0 0
      %4690 = vmatprep.subr.bf16.mxu0 0
      %4691 = vmatpush2.bf16.msra.mxu0 0
      %4692 = vmatprep.subr.bf16.mxu0 0
      %4693 = vmatpush2.bf16.msra.mxu0 0
      %4694 = vmatprep.subr.bf16.mxu0 0
      %4695 = vmatpush2.bf16.msra.mxu0 0
      %4696 = vmatprep.subr.bf16.mxu0 0
      %4697 = vmatpush2.bf16.msra.mxu0 0
      %4698 = vmatprep.mubr.bf16.mxu0 0
      %4699 = vmatmul.mubr.bf16.gmra.mxu0 %v3310
      %v4700 = vpop.f32.mrf.mxu0
      %v4701 = vadd.f32 %v4540, %v4700
      %v4702 = vpop.f32.mrf.mxu0
      %v4703 = vpop.f32.mrf.mxu0
      %v4704 = vadd.f32 %v4543, %v4703
      %v4705 = vpop.f32.mrf.mxu0
      %4706 = vmatprep.mubr.bf16.mxu0 0
      %4707 = vmatmul.mubr.bf16.gmra.mxu0 %v3319
      %v4708 = vpop.f32.mrf.mxu0
      %v4709 = vadd.f32 %v4548, %v4708
      %v4710 = vpop.f32.mrf.mxu0
      %v4711 = vpop.f32.mrf.mxu0
      %v4712 = vadd.f32 %v4551, %v4711
      %v4713 = vpop.f32.mrf.mxu0
      %4714 = vmatprep.mubr.bf16.mxu0 0
      %4715 = vmatmul.mubr.bf16.gmra.mxu0 %v3328
      %v4716 = vpop.f32.mrf.mxu0
      %v4717 = vadd.f32 %v4556, %v4716
      %v4718 = vpop.f32.mrf.mxu0
      %v4719 = vpop.f32.mrf.mxu0
      %v4720 = vadd.f32 %v4559, %v4719
      %v4721 = vpop.f32.mrf.mxu0
      %4722 = vmatprep.mubr.bf16.mxu0 0
      %4723 = vmatmul.mubr.bf16.gmra.mxu0 %v3337
      %v4724 = vpop.f32.mrf.mxu0
      %v4725 = vadd.f32 %v4564, %v4724
      %v4726 = vpop.f32.mrf.mxu0
      %v4727 = vpop.f32.mrf.mxu0
      %v4728 = vadd.f32 %v4567, %v4727
      %v4729 = vpop.f32.mrf.mxu0
      %4730 = vmatprep.mubr.bf16.mxu0 0
      %4731 = vmatmul.mubr.bf16.gmra.mxu0 %v3346
      %v4732 = vpop.f32.mrf.mxu0
      %v4733 = vadd.f32 %v4572, %v4732
      %v4734 = vpop.f32.mrf.mxu0
      %v4735 = vpop.f32.mrf.mxu0
      %v4736 = vadd.f32 %v4575, %v4735
      %v4737 = vpop.f32.mrf.mxu0
      %4738 = vmatprep.mubr.bf16.mxu0 0
      %4739 = vmatmul.mubr.bf16.gmra.mxu0 %v3355
      %v4740 = vpop.f32.mrf.mxu0
      %v4741 = vadd.f32 %v4580, %v4740
      %v4742 = vpop.f32.mrf.mxu0
      %v4743 = vpop.f32.mrf.mxu0
      %v4744 = vadd.f32 %v4583, %v4743
      %v4745 = vpop.f32.mrf.mxu0
      %4746 = vmatprep.mubr.bf16.mxu0 0
      %4747 = vmatmul.mubr.bf16.gmra.mxu0 %v3364
      %v4748 = vpop.f32.mrf.mxu0
      %v4749 = vadd.f32 %v4588, %v4748
      %v4750 = vpop.f32.mrf.mxu0
      %v4751 = vpop.f32.mrf.mxu0
      %v4752 = vadd.f32 %v4591, %v4751
      %v4753 = vpop.f32.mrf.mxu0
      %4754 = vmatprep.mubr.bf16.mxu0 0
      %4755 = vmatmul.mubr.bf16.gmra.mxu0 %v3373
      %v4756 = vpop.f32.mrf.mxu0
      %v4757 = vadd.f32 %v4596, %v4756
      %v4758 = vpop.f32.mrf.mxu0
      %v4759 = vpop.f32.mrf.mxu0
      %v4760 = vadd.f32 %v4599, %v4759
      %v4761 = vpop.f32.mrf.mxu0
      %4762 = vmatprep.mubr.bf16.mxu0 0
      %4763 = vmatmul.mubr.bf16.gmra.mxu0 %v3382
      %v4764 = vpop.f32.mrf.mxu0
      %v4765 = vadd.f32 %v4604, %v4764
      %v4766 = vpop.f32.mrf.mxu0
      %v4767 = vpop.f32.mrf.mxu0
      %v4768 = vadd.f32 %v4607, %v4767
      %v4769 = vpop.f32.mrf.mxu0
      %4770 = vmatprep.mubr.bf16.mxu0 0
      %4771 = vmatmul.mubr.bf16.gmra.mxu0 %v3391
      %v4772 = vpop.f32.mrf.mxu0
      %v4773 = vadd.f32 %v4612, %v4772
      %v4774 = vpop.f32.mrf.mxu0
      %v4775 = vpop.f32.mrf.mxu0
      %v4776 = vadd.f32 %v4615, %v4775
      %v4777 = vpop.f32.mrf.mxu0
      %4778 = vmatprep.mubr.bf16.mxu0 0
      %4779 = vmatmul.mubr.bf16.gmra.mxu0 %v3400
      %v4780 = vpop.f32.mrf.mxu0
      %v4781 = vadd.f32 %v4620, %v4780
      %v4782 = vpop.f32.mrf.mxu0
      %v4783 = vpop.f32.mrf.mxu0
      %v4784 = vadd.f32 %v4623, %v4783
      %v4785 = vpop.f32.mrf.mxu0
      %4786 = vmatprep.mubr.bf16.mxu0 0
      %4787 = vmatmul.mubr.bf16.gmra.mxu0 %v3409
      %v4788 = vpop.f32.mrf.mxu0
      %v4789 = vadd.f32 %v4628, %v4788
      %v4790 = vpop.f32.mrf.mxu0
      %v4791 = vpop.f32.mrf.mxu0
      %v4792 = vadd.f32 %v4631, %v4791
      %v4793 = vpop.f32.mrf.mxu0
      %4794 = vmatprep.mubr.bf16.mxu0 0
      %4795 = vmatmul.mubr.bf16.gmra.mxu0 %v3418
      %v4796 = vpop.f32.mrf.mxu0
      %v4797 = vadd.f32 %v4636, %v4796
      %v4798 = vpop.f32.mrf.mxu0
      %v4799 = vpop.f32.mrf.mxu0
      %v4800 = vadd.f32 %v4639, %v4799
      %v4801 = vpop.f32.mrf.mxu0
      %4802 = vmatprep.mubr.bf16.mxu0 0
      %4803 = vmatmul.mubr.bf16.gmra.mxu0 %v3427
      %v4804 = vpop.f32.mrf.mxu0
      %v4805 = vadd.f32 %v4644, %v4804
      %v4806 = vpop.f32.mrf.mxu0
      %v4807 = vpop.f32.mrf.mxu0
      %v4808 = vadd.f32 %v4647, %v4807
      %v4809 = vpop.f32.mrf.mxu0
      %4810 = vmatprep.mubr.bf16.mxu0 0
      %4811 = vmatmul.mubr.bf16.gmra.mxu0 %v3436
      %v4812 = vpop.f32.mrf.mxu0
      %v4813 = vadd.f32 %v4652, %v4812
      %v4814 = vpop.f32.mrf.mxu0
      %v4815 = vpop.f32.mrf.mxu0
      %v4816 = vadd.f32 %v4655, %v4815
      %v4817 = vpop.f32.mrf.mxu0
      %4818 = vmatprep.mubr.bf16.mxu0 0
      %4819 = vmatmul.mubr.bf16.gmra.mxu0 %v3445
      %v4820 = vpop.f32.mrf.mxu0
      %v4821 = vadd.f32 %v4660, %v4820
      %v4822 = vpop.f32.mrf.mxu0
      %v4823 = vpop.f32.mrf.mxu0
      %v4824 = vadd.f32 %v4663, %v4823
      %v4825 = vpop.f32.mrf.mxu0
      %4826 = vdwg.mxu0
      %v4827 = vld [vmem:[%s5] sm:$0x1]
      %v4829 = vlaneseq
      %v4830 = vshrl.u32 %v4829, 7
      %v4831 = vsub.s32 0, %v4830
      %v4832 = vrot.slane %v4827, %v4831
      %v4834 = vmul.f32 %v4701, %v4832
      %v4835 = vmul.f32 %v4704, %v4832
      %v4836 = vmul.f32 %v4709, %v4832
      %v4837 = vmul.f32 %v4712, %v4832
      %v4838 = vmul.f32 %v4717, %v4832
      %v4839 = vmul.f32 %v4720, %v4832
      %v4840 = vmul.f32 %v4725, %v4832
      %v4841 = vmul.f32 %v4728, %v4832
      %v4842 = vmul.f32 %v4733, %v4832
      %v4843 = vmul.f32 %v4736, %v4832
      %v4844 = vmul.f32 %v4741, %v4832
      %v4845 = vmul.f32 %v4744, %v4832
      %v4846 = vmul.f32 %v4749, %v4832
      %v4847 = vmul.f32 %v4752, %v4832
      %v4848 = vmul.f32 %v4757, %v4832
      %v4849 = vmul.f32 %v4760, %v4832
      %v4850 = vmul.f32 %v4765, %v4832
      %v4851 = vmul.f32 %v4768, %v4832
      %v4852 = vmul.f32 %v4773, %v4832
      %v4853 = vmul.f32 %v4776, %v4832
      %v4854 = vmul.f32 %v4781, %v4832
      %v4855 = vmul.f32 %v4784, %v4832
      %v4856 = vmul.f32 %v4789, %v4832
      %v4857 = vmul.f32 %v4792, %v4832
      %v4858 = vmul.f32 %v4797, %v4832
      %v4859 = vmul.f32 %v4800, %v4832
      %v4860 = vmul.f32 %v4805, %v4832
      %v4861 = vmul.f32 %v4808, %v4832
      %v4862 = vmul.f32 %v4813, %v4832
      %v4863 = vmul.f32 %v4816, %v4832
      %v4864 = vmul.f32 %v4821, %v4832
      %v4865 = vmul.f32 %v4824, %v4832
      %v4866 = vld [vmem:[%s6] sm:$0x1]
      %v4868 = vlaneseq
      %v4869 = vshrl.u32 %v4868, 7
      %v4870 = vsub.s32 0, %v4869
      %v4871 = vrot.slane %v4866, %v4870
      %v4873 = vadd.f32 %v4834, %v4871
      %v4874 = vadd.f32 %v4835, %v4871
      %v4875 = vadd.f32 %v4836, %v4871
      %v4876 = vadd.f32 %v4837, %v4871
      %v4877 = vadd.f32 %v4838, %v4871
      %v4878 = vadd.f32 %v4839, %v4871
      %v4879 = vadd.f32 %v4840, %v4871
      %v4880 = vadd.f32 %v4841, %v4871
      %v4881 = vadd.f32 %v4842, %v4871
      %v4882 = vadd.f32 %v4843, %v4871
      %v4883 = vadd.f32 %v4844, %v4871
      %v4884 = vadd.f32 %v4845, %v4871
      %v4885 = vadd.f32 %v4846, %v4871
      %v4886 = vadd.f32 %v4847, %v4871
      %v4887 = vadd.f32 %v4848, %v4871
      %v4888 = vadd.f32 %v4849, %v4871
      %v4889 = vadd.f32 %v4850, %v4871
      %v4890 = vadd.f32 %v4851, %v4871
      %v4891 = vadd.f32 %v4852, %v4871
      %v4892 = vadd.f32 %v4853, %v4871
      %v4893 = vadd.f32 %v4854, %v4871
      %v4894 = vadd.f32 %v4855, %v4871
      %v4895 = vadd.f32 %v4856, %v4871
      %v4896 = vadd.f32 %v4857, %v4871
      %v4897 = vadd.f32 %v4858, %v4871
      %v4898 = vadd.f32 %v4859, %v4871
      %v4899 = vadd.f32 %v4860, %v4871
      %v4900 = vadd.f32 %v4861, %v4871
      %v4901 = vadd.f32 %v4862, %v4871
      %v4902 = vadd.f32 %v4863, %v4871
      %v4903 = vadd.f32 %v4864, %v4871
      %v4904 = vadd.f32 %v4865, %v4871
      %v4905 = vmax.f32 %v4873, 0.0
      %v4906 = vmax.f32 %v4874, 0.0
      %v4907 = vmax.f32 %v4875, 0.0
      %v4908 = vmax.f32 %v4876, 0.0
      %v4909 = vmax.f32 %v4877, 0.0
      %v4910 = vmax.f32 %v4878, 0.0
      %v4911 = vmax.f32 %v4879, 0.0
      %v4912 = vmax.f32 %v4880, 0.0
      %v4913 = vmax.f32 %v4881, 0.0
      %v4914 = vmax.f32 %v4882, 0.0
      %v4915 = vmax.f32 %v4883, 0.0
      %v4916 = vmax.f32 %v4884, 0.0
      %v4917 = vmax.f32 %v4885, 0.0
      %v4918 = vmax.f32 %v4886, 0.0
      %v4919 = vmax.f32 %v4887, 0.0
      %v4920 = vmax.f32 %v4888, 0.0
      %v4921 = vmax.f32 %v4889, 0.0
      %v4922 = vmax.f32 %v4890, 0.0
      %v4923 = vmax.f32 %v4891, 0.0
      %v4924 = vmax.f32 %v4892, 0.0
      %v4925 = vmax.f32 %v4893, 0.0
      %v4926 = vmax.f32 %v4894, 0.0
      %v4927 = vmax.f32 %v4895, 0.0
      %v4928 = vmax.f32 %v4896, 0.0
      %v4929 = vmax.f32 %v4897, 0.0
      %v4930 = vmax.f32 %v4898, 0.0
      %v4931 = vmax.f32 %v4899, 0.0
      %v4932 = vmax.f32 %v4900, 0.0
      %v4933 = vmax.f32 %v4901, 0.0
      %v4934 = vmax.f32 %v4902, 0.0
      %v4935 = vmax.f32 %v4903, 0.0
      %v4936 = vmax.f32 %v4904, 0.0
      %v4937 = vpack.c.bf16 %v4906, %v4905
      %v4938 = vpack.c.bf16 %v4908, %v4907
      %v4939 = vpack.c.bf16 %v4910, %v4909
      %v4940 = vpack.c.bf16 %v4912, %v4911
      %v4941 = vpack.c.bf16 %v4914, %v4913
      %v4942 = vpack.c.bf16 %v4916, %v4915
      %v4943 = vpack.c.bf16 %v4918, %v4917
      %v4944 = vpack.c.bf16 %v4920, %v4919
      %v4945 = vpack.c.bf16 %v4922, %v4921
      %v4946 = vpack.c.bf16 %v4924, %v4923
      %v4947 = vpack.c.bf16 %v4926, %v4925
      %v4948 = vpack.c.bf16 %v4928, %v4927
      %v4949 = vpack.c.bf16 %v4930, %v4929
      %v4950 = vpack.c.bf16 %v4932, %v4931
      %v4951 = vpack.c.bf16 %v4934, %v4933
      %v4952 = vpack.c.bf16 %v4936, %v4935
      %v4969 = vunpack.c.l.b16 %v4937
      %v4970 = vunpack.c.h.b16 %v4937
      %v4971 = vunpack.c.l.b16 %v4938
      %v4972 = vunpack.c.h.b16 %v4938
      %v4973 = vunpack.c.l.b16 %v4939
      %v4974 = vunpack.c.h.b16 %v4939
      %v4975 = vunpack.c.l.b16 %v4940
      %v4976 = vunpack.c.h.b16 %v4940
      %v4977 = vunpack.c.l.b16 %v4941
      %v4978 = vunpack.c.h.b16 %v4941
      %v4979 = vunpack.c.l.b16 %v4942
      %v4980 = vunpack.c.h.b16 %v4942
      %v4981 = vunpack.c.l.b16 %v4943
      %v4982 = vunpack.c.h.b16 %v4943
      %v4983 = vunpack.c.l.b16 %v4944
      %v4984 = vunpack.c.h.b16 %v4944
      %v4985 = vunpack.c.l.b16 %v4945
      %v4986 = vunpack.c.h.b16 %v4945
      %v4987 = vunpack.c.l.b16 %v4946
      %v4988 = vunpack.c.h.b16 %v4946
      %v4989 = vunpack.c.l.b16 %v4947
      %v4990 = vunpack.c.h.b16 %v4947
      %v4991 = vunpack.c.l.b16 %v4948
      %v4992 = vunpack.c.h.b16 %v4948
      %v4993 = vunpack.c.l.b16 %v4949
      %v4994 = vunpack.c.h.b16 %v4949
      %v4995 = vunpack.c.l.b16 %v4950
      %v4996 = vunpack.c.h.b16 %v4950
      %v4997 = vunpack.c.l.b16 %v4951
      %v4998 = vunpack.c.h.b16 %v4951
      %v4999 = vunpack.c.l.b16 %v4952
      %v5000 = vunpack.c.h.b16 %v4952
      %v5001 = vpack.c.b16 %v4969, %v4969
      %v5002 = vpack.c.b16 %v4970, %v4970
      %v5003 = vpack.c.b16 %v4971, %v4971
      %v5004 = vpack.c.b16 %v4972, %v4972
      %v5005 = vpack.c.b16 %v4973, %v4973
      %v5006 = vpack.c.b16 %v4974, %v4974
      %v5007 = vpack.c.b16 %v4975, %v4975
      %v5008 = vpack.c.b16 %v4976, %v4976
      %v5009 = vpack.c.b16 %v4977, %v4977
      %v5010 = vpack.c.b16 %v4978, %v4978
      %v5011 = vpack.c.b16 %v4979, %v4979
      %v5012 = vpack.c.b16 %v4980, %v4980
      %v5013 = vpack.c.b16 %v4981, %v4981
      %v5014 = vpack.c.b16 %v4982, %v4982
      %v5015 = vpack.c.b16 %v4983, %v4983
      %v5016 = vpack.c.b16 %v4984, %v4984
      %v5017 = vpack.c.b16 %v4985, %v4985
      %v5018 = vpack.c.b16 %v4986, %v4986
      %v5019 = vpack.c.b16 %v4987, %v4987
      %v5020 = vpack.c.b16 %v4988, %v4988
      %v5021 = vpack.c.b16 %v4989, %v4989
      %v5022 = vpack.c.b16 %v4990, %v4990
      %v5023 = vpack.c.b16 %v4991, %v4991
      %v5024 = vpack.c.b16 %v4992, %v4992
      %v5025 = vpack.c.b16 %v4993, %v4993
      %v5026 = vpack.c.b16 %v4994, %v4994
      %v5027 = vpack.c.b16 %v4995, %v4995
      %v5028 = vpack.c.b16 %v4996, %v4996
      %v5029 = vpack.c.b16 %v4997, %v4997
      %v5030 = vpack.c.b16 %v4998, %v4998
      %v5031 = vpack.c.b16 %v4999, %v4999
      %v5032 = vpack.c.b16 %v5000, %v5000
      %5065 = vst [vmem:[%s278] sm:$0xf] %v5001
      %5066 = vst [vmem:[%s278 + $0x4] sm:$0xf] %v5002
      %5067 = vst [vmem:[%s278 + $0x8] sm:$0xf] %v5003
      %5068 = vst [vmem:[%s278 + $0xc] sm:$0xf] %v5004
      %5069 = vst [vmem:[%s278 + $0x10] sm:$0xf] %v5005
      %5070 = vst [vmem:[%s278 + $0x14] sm:$0xf] %v5006
      %5071 = vst [vmem:[%s278 + $0x18] sm:$0xf] %v5007
      %5072 = vst [vmem:[%s278 + $0x1c] sm:$0xf] %v5008
      %5073 = vst [vmem:[%s278 + $0x20] sm:$0xf] %v5009
      %5074 = vst [vmem:[%s278 + $0x24] sm:$0xf] %v5010
      %5075 = vst [vmem:[%s278 + $0x28] sm:$0xf] %v5011
      %5076 = vst [vmem:[%s278 + $0x2c] sm:$0xf] %v5012
      %5077 = vst [vmem:[%s278 + $0x30] sm:$0xf] %v5013
      %5078 = vst [vmem:[%s278 + $0x34] sm:$0xf] %v5014
      %5079 = vst [vmem:[%s278 + $0x38] sm:$0xf] %v5015
      %5080 = vst [vmem:[%s278 + $0x3c] sm:$0xf] %v5016
      %5081 = vst [vmem:[%s278 + $0x40] sm:$0xf] %v5017
      %5082 = vst [vmem:[%s278 + $0x44] sm:$0xf] %v5018
      %5083 = vst [vmem:[%s278 + $0x48] sm:$0xf] %v5019
      %5084 = vst [vmem:[%s278 + $0x4c] sm:$0xf] %v5020
      %5085 = vst [vmem:[%s278 + $0x50] sm:$0xf] %v5021
      %5086 = vst [vmem:[%s278 + $0x54] sm:$0xf] %v5022
      %5087 = vst [vmem:[%s278 + $0x58] sm:$0xf] %v5023
      %5088 = vst [vmem:[%s278 + $0x5c] sm:$0xf] %v5024
      %5089 = vst [vmem:[%s278 + $0x60] sm:$0xf] %v5025
      %5090 = vst [vmem:[%s278 + $0x64] sm:$0xf] %v5026
      %5091 = vst [vmem:[%s278 + $0x68] sm:$0xf] %v5027
      %5092 = vst [vmem:[%s278 + $0x6c] sm:$0xf] %v5028
      %5093 = vst [vmem:[%s278 + $0x70] sm:$0xf] %v5029
      %5094 = vst [vmem:[%s278 + $0x74] sm:$0xf] %v5030
      %5095 = vst [vmem:[%s278 + $0x78] sm:$0xf] %v5031
      %5096 = vst [vmem:[%s278 + $0x7c] sm:$0xf] %v5032
      %p5097 = scmp.lt.s32.totalorder %s18, 1
      %s5098 = scalar_select %p5097, %s18, 1
      %s5099 = smul.addr %s5098, 32
      %s5100 = smul.addr %s5099, 4
      %s5101 = scalar_lea.vmem %s7, %s5100
      // Predicated region
      $region49: #{_lambda_.1} parent=47 // pred_check
        %p5102 = pneg %p188
      $region50: #{_lambda_.1} parent=47 // pred_check_branch
        %5104 = sbr.rel (%p5102) target = $region52
      $region51: #{_lambda_.1} parent=47 // pred_region
        _
      $region52: #{_lambda_.1} parent=47 // pred_fallthru
        _
    $region48: #{_lambda_.1} parent=5 // pred_fallthru
      _
    %p5105 = scmp.le.s32.totalorder 2, %s13
    // Predicated region
    $region53: #{_lambda_.1} parent=5 // pred_check
      %p5106 = pneg %p5105
    $region54: #{_lambda_.1} parent=5 // pred_check_branch
      %5108 = sbr.rel (%p5106) target = $region56
    $region55: #{_lambda_.1} parent=5 // pred_region
      %s5109 = ssub.s32 %s13, 2
      // Predicated region
      $region57: #{_lambda_.1} parent=55 // pred_check
        %p5110 = pneg %p194
      $region58: #{_lambda_.1} parent=55 // pred_check_branch
        %5112 = sbr.rel (%p5110) target = $region60
      $region59: #{_lambda_.1} parent=55 // pred_region
        %p5113 = scmp.lt.s32.totalorder %s19, 1
        %s5114 = scalar_select %p5113, %s19, 1
        %s5115 = smul.addr %s5114, 32
        %s5116 = smul.addr %s5115, 4
        %s5117 = scalar_lea.vmem %s7, %s5116
      $region60: #{_lambda_.1} parent=55 // pred_fallthru
        _
    $region56: #{_lambda_.1} parent=5 // pred_fallthru
      _
  $region6: #{_lambda_.1} parent=0 // loop_footer
    %s17 = sadd.s32 1, %s13
  $region7: #{_lambda_.1} parent=0 // loop_footer_branch
    %12 = sbr.rel target = $region3
  $region8: #{_lambda_.1} parent=0 // loop_exit
    _

</llo_original>
